<compile_context>
chip_gen: v6e
topology: v6e:2x2x1
jax: 0.10.0
libtpu: 0.0.40
codegen_flags: <defaults>
</compile_context>

<pallas_src>
import math

import jax
import jax.numpy as jnp
from jax import lax
from jax.experimental import pallas as pl
from jax.experimental.pallas import tpu as pltpu


LANE = 128      # channel (lane) padding target for conv inputs / outputs
GEO_PAD = 8     # geometry channels padded to a sublane-friendly multiple


def _round_up(v, m):
    return (v + m - 1) // m * m


def _choose_row_tile(Ho, Wo, requested):
    """Pick the row tile: smallest divisor of Ho with TRo*Wo >= 256, else whole image."""
    if requested is not None:
        return max(1, min(requested, Ho))
    for d in range(1, Ho + 1):
        if Ho % d == 0 and d * Wo >= 256:
            return d
    return Ho


def _space_to_depth(x, s):
    """(N, H*s, W*s, C) -> (N, H, W, s*s*C); identity for s == 1."""
    if s == 1:
        return x
    N, H, W, C = x.shape
    x = x.reshape(N, H // s, s, W // s, s, C)
    x = jnp.transpose(x, (0, 1, 3, 2, 4, 5))
    return x.reshape(N, H // s, W // s, s * s * C)


def _prep_input(x, c_pad, s, padding, Hq, Wq):
    """Spatially pad, channel pad and space-to-depth an NHWC input (-> bf16)."""
    N, H, W, C = x.shape
    pad_bottom = Hq * s - padding - H
    pad_right = Wq * s - padding - W
    assert pad_bottom >= 0 and pad_right >= 0
    x = jnp.pad(x, ((0, 0), (padding, pad_bottom), (padding, pad_right),
                    (0, c_pad - C)))
    return _space_to_depth(x.astype(jnp.bfloat16), s)


def _pack_weights(w_hwio, s, k_eff, cin_p, cout_p, scale=None):
    """(K,K,Cin,Cout) HWIO -> stacked bf16 matrix (k_eff*k_eff*s*s*cin_p, cout_p).

    The per-output-channel BatchNorm scale is folded into the weights here.
    """
    K, _, Cin, Cout = w_hwio.shape
    w = w_hwio.astype(jnp.float32)
    if scale is not None:
        w = w * scale.astype(jnp.float32)[None, None, None, :]
    wq = jnp.zeros((k_eff, k_eff, s, s, cin_p, cout_p), jnp.float32)
    for a in range(k_eff):
        for p in range(s):
            dy = a * s + p
            if dy >= K:
                continue
            for b in range(k_eff):
                for q in range(s):
                    dx = b * s + q
                    if dx >= K:
                        continue
                    wq = wq.at[a, b, p, q, :Cin, :Cout].set(w[dy, dx])
    return wq.reshape(k_eff * k_eff * s * s * cin_p, cout_p).astype(jnp.bfloat16)


def _pack_ds_weight(wd_hwio, s, padding, cin_p, cout_p, scale=None):
    """1x1 downsample weight (scale-folded) -> (s*s*cin_p, cout_p) center-phase matrix."""
    _, _, Cin, Cout = wd_hwio.shape
    w = wd_hwio.astype(jnp.float32)
    if scale is not None:
        w = w * scale.astype(jnp.float32)[None, None, None, :]
    p0 = padding % s
    wq = jnp.zeros((s, s, cin_p, cout_p), jnp.float32)
    wq = wq.at[p0, p0, :Cin, :Cout].set(w[0, 0])
    return wq.reshape(s * s * cin_p, cout_p).astype(jnp.bfloat16)


def _prep_residual(res, cout_p, Ho, Wo, Ho_pad):
    """Residual is carried in bf16 (upcast to f32 inside the kernel for the add)."""
    N, Hr, Wr, Cr = res.shape
    assert (Hr, Wr) == (Ho, Wo), (res.shape, Ho, Wo)
    return jnp.pad(res.astype(jnp.bfloat16),
                   ((0, 0), (0, Ho_pad - Ho), (0, 0), (0, cout_p - Cr)))


# -----------------------------------------------------------------------------
# Fused conv(KxK) + BN [+ residual] [+ ReLU] [+ geo-lane injection] [+ 1x1 downsample]
# Pallas kernel.  The wrapper has already folded any stride into the channel
# dimension (space-to-depth), so the kernel itself is always stride-1.
# -----------------------------------------------------------------------------
def _make_kernel(*, k_eff, tro, wo, cq, cout_p, geo_p,
                 has_inj, has_res, has_ds, ds_a, ds_b, apply_relu):
    def kernel(*refs):
        i = 0
        x_hbm = refs[i]; i += 1
        w_ref = refs[i]; i += 1
        b_ref = refs[i]; i += 1
        wd_ref = bd_ref = None
        if has_ds:
            wd_ref, bd_ref = refs[i], refs[i + 1]; i += 2
        inj_ref = injw_ref = None
        if has_inj:
            inj_ref, injw_ref = refs[i], refs[i + 1]; i += 2
        res_ref = None
        if has_res:
            res_ref = refs[i]; i += 1
        o_ref = refs[i]; i += 1
        id_ref = None
        if has_ds:
            id_ref = refs[i]; i += 1
        xbuf = refs[i]; i += 1
        sem = refs[i]; i += 1

        n = pl.program_id(0)
        r = pl.program_id(1)

        # Whole padded image for batch `n` becomes VMEM-resident once (r == 0);
        # every row tile then slices it from VMEM -> no per-tile halo DMA and no
        # duplicate halo HBM reads.
        @pl.when(r == 0)
        def _():
            cp = pltpu.make_async_copy(x_hbm.at[n], xbuf, sem.at[0])
            cp.start()
            cp.wait()
        # TODO(synk): double-buffer the image over the batch axis (prefetch n+1).

        row0 = pl.multiple_of(r * tro, tro)
        m = tro * wo

        # Per-tap accumulation straight from the VMEM ref (no im2col concat).
        acc = None
        xs_ds = None
        for a in range(k_eff):
            for b in range(k_eff):
                tap = a * k_eff + b
                xs = xbuf[pl.ds(row0 + a, tro), pl.ds(b, wo), :].reshape(m, cq)
                if has_ds and a == ds_a and b == ds_b:
                    xs_ds = xs
                part = jnp.dot(xs, w_ref[pl.ds(tap * cq, cq), :],
                               preferred_element_type=jnp.float32)
                acc = part if acc is None else acc + part

        y = acc + b_ref[...]                     # BN scale already folded into w
        if has_res:
            y = y + res_ref[...].reshape(m, cout_p).astype(jnp.float32)
        if apply_relu:
            y = jnp.maximum(y, 0.0)
        if has_inj:
            # Geometry channels are routed into the (exactly-zero) padded output
            # lanes with a tiny 0/1 placement matmul -> conv2 needs no separate
            # geo input or side matmul at all.
            inj = inj_ref[...].reshape(m, geo_p)
            y = y + jnp.dot(inj, injw_ref[...], preferred_element_type=jnp.float32)
        o_ref[...] = y.reshape(1, tro, wo, cout_p).astype(o_ref.dtype)

        if has_ds:   # fused 1x1 downsample conv + BN on the center-phase tap
            di = jnp.dot(xs_ds, wd_ref[...],
                         preferred_element_type=jnp.float32) + bd_ref[...]
            id_ref[...] = di.reshape(1, tro, wo, cout_p).astype(id_ref.dtype)

    return kernel


def conv_bn_block(x_nhwc, w_hwio, scale, bias, *, stride, padding, apply_relu,
                  inject=None, residual=None, downsample=None,
                  row_tile=None, out_dtype=jnp.bfloat16):
    """Fused conv+BN block.  x: (N,H,W,Cin); w: (K,K,Cin_w,Cout) HWIO.

    inject     : (N,Ho,Wo,Cg) tensor written verbatim into output lanes
                 [Cout : Cout+Cg] after the ReLU (fused torch.cat((g2, out), 1)).
    residual   : (N,Ho,Wo,*) tensor added (in f32) before the final ReLU.
    downsample : (wd_hwio, scale_d, bias_d) -> extra fused 1x1-conv identity output (bf16).
    Returns (N,Ho,Wo,Cout_p) [, identity] with Cout_p = Cout padded to 128 lanes.
    """
    N, H, W, Cin = x_nhwc.shape
    K = w_hwio.shape[0]
    Cout = w_hwio.shape[-1]
    s = stride

    Ho = (H + 2 * padding - K) // s + 1
    Wo = (W + 2 * padding - K) // s + 1
    k_eff = (K - 1) // s + 1                 # effective kernel after space-to-depth

    Cin_p = _round_up(max(Cin, w_hwio.shape[2]), LANE)
    Cout_p = _round_up(Cout, LANE)
    Cq = s * s * Cin_p

    TRo = _choose_row_tile(Ho, Wo, row_tile)
    Ho_pad = _round_up(Ho, TRo)
    n_rt = Ho_pad // TRo
    Hq = Ho_pad + k_eff - 1
    Wq = _round_up(Wo + k_eff - 1, 8)        # sublane-aligned image buffer width

    xq = _prep_input(x_nhwc, Cin_p, s, padding, Hq, Wq)
    w_stack = _pack_weights(w_hwio, s, k_eff, Cin_p, Cout_p, scale)
    bias2 = jnp.pad(bias.astype(jnp.float32), (0, Cout_p - Cout)).reshape(1, Cout_p)

    has_inj = inject is not None
    has_res = residual is not None
    has_ds = downsample is not None

    inputs = [xq, w_stack, bias2]
    in_specs = [pl.BlockSpec(memory_space=pl.ANY),
                pl.BlockSpec(w_stack.shape, lambda n, r: (0, 0)),
                pl.BlockSpec((1, Cout_p), lambda n, r: (0, 0))]

    ds_a = ds_b = 0
    wdq = None
    if has_ds:
        wd_hwio, sd, bd = downsample
        wdq = _pack_ds_weight(wd_hwio, s, padding, Cin_p, Cout_p, sd)
        bd2 = jnp.pad(bd.astype(jnp.float32), (0, Cout_p - Cout)).reshape(1, Cout_p)
        ds_a = ds_b = padding // s
        assert ds_a < k_eff and ds_b < k_eff
        inputs += [wdq, bd2]
        in_specs += [pl.BlockSpec(wdq.shape, lambda n, r: (0, 0)),
                     pl.BlockSpec((1, Cout_p), lambda n, r: (0, 0))]

    GEO_P = 0
    if has_inj:
        Ng, Hg, Wg, Cg = inject.shape
        assert (Ng, Hg, Wg) == (N, Ho, Wo), (inject.shape, (N, Ho, Wo))
        assert Cout + Cg <= Cout_p
        GEO_P = _round_up(Cg, GEO_PAD)
        injq = jnp.pad(inject.astype(jnp.bfloat16),
                       ((0, 0), (0, Ho_pad - Ho), (0, 0), (0, GEO_P - Cg)))
        injw = jnp.zeros((GEO_P, Cout_p), jnp.float32)
        injw = injw.at[jnp.arange(Cg), Cout + jnp.arange(Cg)].set(1.0)
        injw = injw.astype(jnp.bfloat16)
        inputs += [injq, injw]
        in_specs += [pl.BlockSpec((1, TRo, Wo, GEO_P), lambda n, r: (n, r, 0, 0)),
                     pl.BlockSpec((GEO_P, Cout_p), lambda n, r: (0, 0))]

    if has_res:
        resq = _prep_residual(residual, Cout_p, Ho, Wo, Ho_pad)
        inputs.append(resq)
        in_specs.append(pl.BlockSpec((1, TRo, Wo, Cout_p),
                                     lambda n, r: (n, r, 0, 0)))

    out_shapes = [jax.ShapeDtypeStruct((N, Ho_pad, Wo, Cout_p), out_dtype)]
    out_specs = [pl.BlockSpec((1, TRo, Wo, Cout_p), lambda n, r: (n, r, 0, 0))]
    if has_ds:
        # fused downsample identity is kept in bf16 (written then re-read once).
        out_shapes.append(jax.ShapeDtypeStruct((N, Ho_pad, Wo, Cout_p), jnp.bfloat16))
        out_specs.append(pl.BlockSpec((1, TRo, Wo, Cout_p),
                                      lambda n, r: (n, r, 0, 0)))

    scratch = [pltpu.VMEM((Hq, Wq, Cq), jnp.bfloat16),
               pltpu.SemaphoreType.DMA((1,))]

    kernel = _make_kernel(k_eff=k_eff, tro=TRo, wo=Wo, cq=Cq, cout_p=Cout_p,
                          geo_p=GEO_P, has_inj=has_inj, has_res=has_res,
                          has_ds=has_ds, ds_a=ds_a, ds_b=ds_b,
                          apply_relu=apply_relu)

    n_taps = k_eff * k_eff
    flops = 2 * N * Ho_pad * Wo * Cout_p * (n_taps * Cq
                                            + (Cq if has_ds else 0)
                                            + (GEO_P if has_inj else 0))
    bytes_accessed = sum(int(a.size) * a.dtype.itemsize for a in inputs)
    bytes_accessed += sum(math.prod(o.shape) * jnp.dtype(o.dtype).itemsize
                          for o in out_shapes)

    # Explicit VMEM budget (matters for v7x's 64 MiB VMEM / 32 MiB default scoped limit).
    tile_elems = TRo * Wo * Cout_p
    const_bytes = w_stack.size * 2 + Cout_p * 4
    if has_ds:
        const_bytes += wdq.size * 2 + Cout_p * 4
    if has_inj:
        const_bytes += GEO_P * Cout_p * 2
    tile_bytes = tile_elems * 2 * (1 + (1 if has_ds else 0) + (1 if has_res else 0))
    if has_inj:
        tile_bytes += TRo * Wo * GEO_P * 2
    vmem_need = (Hq * Wq * Cq * 2 + 2 * const_bytes + 2 * tile_bytes
                 + 8 * tile_elems * 4)
    cp_kwargs = dict(dimension_semantics=("parallel", "arbitrary"))
    if vmem_need > 24 * 1024 * 1024:
        cp_kwargs["vmem_limit_bytes"] = int(min(vmem_need * 1.5, 100 * 2**20))

    outs = pl.pallas_call(
        kernel,
        out_shape=tuple(out_shapes),
        grid_spec=pltpu.PrefetchScalarGridSpec(
            num_scalar_prefetch=0,
            grid=(N, n_rt),
            in_specs=in_specs,
            out_specs=tuple(out_specs),
            scratch_shapes=scratch),
        compiler_params=pltpu.CompilerParams(**cp_kwargs),
        cost_estimate=pl.CostEstimate(flops=int(flops), transcendentals=0,
                                      bytes_accessed=int(bytes_accessed)),
    )(*inputs)

    out_main = outs[0][:, :Ho]
    if has_ds:
        return out_main, outs[1][:, :Ho]
    return out_main


# -----------------------------------------------------------------------------
# BasicBlockGeo parameters (deterministic synthetic init) and forward pass.
# -----------------------------------------------------------------------------
def fold_bn(gamma, beta, mean, var, eps=1e-5):
    scale = gamma / jnp.sqrt(var + eps)
    bias = beta - mean * scale
    return scale, bias


def init_params(key, inplanes, planes, geoplanes, stride):
    ks = jax.random.split(key, 12)
    c1_in = inplanes + geoplanes

    def conv_w(k, cout, cin, kh, kw):
        fan_in = cin * kh * kw
        bound = 1.0 / (fan_in ** 0.5)
        return jax.random.uniform(k, (cout, cin, kh, kw), jnp.float32,
                                  -bound, bound)

    def bn_params(k, c):
        g = 1.0 + 0.1 * jax.random.normal(k, (c,), jnp.float32)
        b = 0.1 * jax.random.normal(jax.random.fold_in(k, 1), (c,), jnp.float32)
        m = 0.05 * jax.random.normal(jax.random.fold_in(k, 2), (c,), jnp.float32)
        v = 1.0 + 0.1 * jax.random.uniform(jax.random.fold_in(k, 3), (c,),
                                           jnp.float32)
        return g, b, m, v

    p = {}
    p["w1"] = conv_w(ks[0], planes, c1_in, 3, 3)                # conv1 (OIHW)
    p["bn1"] = bn_params(ks[1], planes)
    p["w2"] = conv_w(ks[2], planes, planes + geoplanes, 3, 3)   # conv2 (OIHW)
    p["bn2"] = bn_params(ks[3], planes)
    p["has_downsample"] = (stride != 1) or (inplanes != planes)
    if p["has_downsample"]:
        p["wd"] = conv_w(ks[4], planes, c1_in, 1, 1)            # 1x1 downsample
        p["bnd"] = bn_params(ks[5], planes)
    return p


def basic_block_geo_forward(x, g1, g2, params, stride):
    """x, g1, g2 are NCHW (PyTorch convention).  Returns NCHW float32."""
    planes = params["w1"].shape[0]
    x_nhwc = jnp.transpose(x, (0, 2, 3, 1))
    if g1 is not None:
        xcat = jnp.concatenate([x_nhwc, jnp.transpose(g1, (0, 2, 3, 1))], axis=-1)
    else:
        xcat = x_nhwc

    s1, b1 = fold_bn(*params["bn1"])
    w1 = jnp.transpose(params["w1"], (2, 3, 1, 0))              # OIHW -> HWIO
    ds = None
    if params["has_downsample"]:
        sd, bd = fold_bn(*params["bnd"])
        ds = (jnp.transpose(params["wd"], (2, 3, 1, 0)), sd, bd)

    geoplanes = 0 if g2 is None else g2.shape[1]
    cout_p1 = _round_up(planes, LANE)
    can_inject = (g2 is not None) and (planes + geoplanes <= cout_p1)
    g2_nhwc = None if g2 is None else jnp.transpose(g2, (0, 2, 3, 1))

    # conv1 + bn1 + relu (+ fused 1x1 downsample, + g2 injected into spare lanes)
    res1 = conv_bn_block(xcat, w1, s1, b1, stride=stride, padding=1,
                         apply_relu=True, downsample=ds,
                         inject=g2_nhwc if can_inject else None,
                         out_dtype=jnp.bfloat16)
    if ds is not None:
        out1, identity = res1
    else:
        out1 = res1
        identity = x_nhwc

    s2, b2 = fold_bn(*params["bn2"])
    w2 = jnp.transpose(params["w2"], (2, 3, 1, 0))              # (3,3,geo+planes,planes)
    if g2 is None:
        x2, w2_in = out1, w2
    else:
        # conv2's input channel order becomes [conv1-output, g2]; reorder weights to match.
        w2_in = jnp.concatenate([w2[:, :, geoplanes:, :], w2[:, :, :geoplanes, :]],
                                axis=2)
        if can_inject:
            x2 = out1                       # g2 already sits in out1's padded lanes
        else:
            # TODO(synk): no spare padded lanes (planes % 128 == 0) -> fall back to an
            # XLA concat; a fused path for this case is not implemented.
            x2 = jnp.concatenate([out1[..., :planes], g2_nhwc.astype(out1.dtype)],
                                 axis=-1)

    # conv2 + bn2 + residual add + relu
    out = conv_bn_block(x2, w2_in, s2, b2, stride=1, padding=1,
                        apply_relu=True, residual=identity,
                        out_dtype=jnp.bfloat16)

    out = out[:, :, :, :planes].astype(jnp.float32)             # drop lane padding
    return jnp.transpose(out, (0, 3, 1, 2))                     # back to NCHW


# -----------------------------------------------------------------------------
# Plain-JAX reference (lax.conv) for correctness checking.
# -----------------------------------------------------------------------------
def _conv_ref(x, w, stride, padding):
    return lax.conv_general_dilated(
        x, w, window_strides=(stride, stride),
        padding=[(padding, padding), (padding, padding)],
        dimension_numbers=("NCHW", "OIHW", "NCHW"))


def _bn_ref(x, gamma, beta, mean, var, eps=1e-5):
    scale = (gamma / jnp.sqrt(var + eps))[None, :, None, None]
    bias = (beta - mean * gamma / jnp.sqrt(var + eps))[None, :, None, None]
    return x * scale + bias


def reference_forward(x, g1, g2, params, stride):
    xcat = jnp.concatenate([x, g1], axis=1) if g1 is not None else x
    out = _conv_ref(xcat, params["w1"], stride, 1)
    out = jnp.maximum(_bn_ref(out, *params["bn1"]), 0.0)
    if g2 is not None:
        out = jnp.concatenate([g2, out], axis=1)
    out = _bn_ref(_conv_ref(out, params["w2"], 1, 1), *params["bn2"])
    if params["has_downsample"]:
        identity = _bn_ref(_conv_ref(xcat, params["wd"], stride, 0),
                           *params["bnd"])
    else:
        identity = x
    return jnp.maximum(out + identity, 0.0)


# -----------------------------------------------------------------------------
if __name__ == "__main__":
    configs = [
        # (inplanes, planes, geoplanes, stride, H, W)
        (4, 8, 3, 1, 16, 16),   # downsample via channel change, stride 1
        (8, 8, 3, 2, 16, 16),   # downsample via stride 2 (strided conv path)
        (8, 8, 3, 1, 16, 16),   # no downsample (identity = x)
    ]
    key = jax.random.PRNGKey(0)
    N = 2
    for idx, (inplanes, planes, geoplanes, stride, H, W) in enumerate(configs):
        kx, kg1, kg2, kp, key = jax.random.split(jax.random.fold_in(key, idx), 5)
        x = jax.random.normal(kx, (N, inplanes, H, W), jnp.float32)
        g1 = jax.random.normal(kg1, (N, geoplanes, H, W), jnp.float32)
        g2 = jax.random.normal(kg2, (N, geoplanes, H // stride, W // stride),
                               jnp.float32)
        params = init_params(kp, inplanes, planes, geoplanes, stride)

        out = jax.block_until_ready(
            basic_block_geo_forward(x, g1, g2, params, stride))
        ref = jax.block_until_ready(reference_forward(x, g1, g2, params, stride))

        assert out.shape == ref.shape == (N, planes, H // stride, W // stride), \
            (out.shape, ref.shape)
        # bf16 matmul inputs / bf16 activations -> magnitude-normalized tolerance
        # vs the f32 reference.
        err = float(jnp.max(jnp.abs(out - ref)))
        denom = 1.0 + float(jnp.max(jnp.abs(ref)))
        assert err / denom < 4e-2, f"config {idx}: max abs err {err} (denom {denom})"

    print("KERNEL_OK")
</pallas_src>

<mosaic_0001>
module attributes {stable_mosaic.version = 11 : i64} {
  func.func @kernel(%arg0: i32, %arg1: i32, %arg2: memref<2x18x24x128xbf16, #tpu.memory_space<any>>, %arg3: memref<1152x128xbf16, #tpu.memory_space<vmem>>, %arg4: memref<1x128xf32, #tpu.memory_space<vmem>>, %arg5: memref<128x128xbf16, #tpu.memory_space<vmem>>, %arg6: memref<1x128xf32, #tpu.memory_space<vmem>>, %arg7: memref<1x16x16x8xbf16, #tpu.memory_space<vmem>>, %arg8: memref<8x128xbf16, #tpu.memory_space<vmem>>, %arg9: memref<1x16x16x128xbf16, #tpu.memory_space<vmem>>, %arg10: memref<1x16x16x128xbf16, #tpu.memory_space<vmem>>, %arg11: memref<18x24x128xbf16, #tpu.memory_space<vmem>>, %arg12: memref<1x!tpu.dma_semaphore, #tpu.memory_space<semaphore_mem>>) attributes {dimension_semantics = [#tpu.dimension_semantics<parallel>, #tpu.dimension_semantics<arbitrary>], iteration_bounds = array<i64: 2, 1>, scalar_prefetch = 0 : i64, scratch_operands = 2 : i64, tpu.core_type = #tpu.core_type<tc>, window_params = [{}, {pipeline_mode = #tpu.pipeline_mode<synchronous>, transform_indices = @transform_1, window_bounds = array<i64: 1152, 128>}, {pipeline_mode = #tpu.pipeline_mode<synchronous>, transform_indices = @transform_2, window_bounds = array<i64: 1, 128>}, {pipeline_mode = #tpu.pipeline_mode<synchronous>, transform_indices = @transform_3, window_bounds = array<i64: 128, 128>}, {pipeline_mode = #tpu.pipeline_mode<synchronous>, transform_indices = @transform_4, window_bounds = array<i64: 1, 128>}, {transform_indices = @transform_5, window_bounds = array<i64: 1, 16, 16, 8>}, {pipeline_mode = #tpu.pipeline_mode<synchronous>, transform_indices = @transform_6, window_bounds = array<i64: 8, 128>}, {transform_indices = @transform_7, window_bounds = array<i64: 1, 16, 16, 128>}, {transform_indices = @transform_8, window_bounds = array<i64: 1, 16, 16, 128>}]} {
    %c0_i32 = arith.constant 0 : i32
    %0 = arith.cmpi eq, %arg1, %c0_i32 : i32
    %1 = arith.extui %0 : i1 to i32
    %c0_i32_0 = arith.constant 0 : i32
    %2 = arith.cmpi ne, %1, %c0_i32_0 : i32
    scf.if %2 {
      %c0_i32_64 = arith.constant 0 : i32
      %c0_i32_65 = arith.constant 0 : i32
      %c0_i32_66 = arith.constant 0 : i32
      %c0_i32_67 = arith.constant 0 : i32
      %88 = tpu.memref_slice %arg2[%arg0, %c0_i32_65, %c0_i32_66, %c0_i32_67] : memref<2x18x24x128xbf16, #tpu.memory_space<any>> -> memref<1x18x24x128xbf16, #tpu.memory_space<any>>
      %89 = tpu.memref_squeeze %88 : memref<1x18x24x128xbf16, #tpu.memory_space<any>> -> memref<18x24x128xbf16, #tpu.memory_space<any>>
      %90 = tpu.memref_slice %arg12[%c0_i32_64] : memref<1x!tpu.dma_semaphore, #tpu.memory_space<semaphore_mem>> -> memref<1x!tpu.dma_semaphore, #tpu.memory_space<semaphore_mem>>
      %91 = tpu.memref_squeeze %90 : memref<1x!tpu.dma_semaphore, #tpu.memory_space<semaphore_mem>> -> memref<!tpu.dma_semaphore, #tpu.memory_space<semaphore_mem>>
      tpu.enqueue_dma source(%89 : memref<18x24x128xbf16, #tpu.memory_space<any>>) target(%arg11 : memref<18x24x128xbf16, #tpu.memory_space<vmem>>) target_semaphore(%91 : memref<!tpu.dma_semaphore, #tpu.memory_space<semaphore_mem>>)
      %c0_i32_68 = arith.constant 0 : i32
      %c0_i32_69 = arith.constant 0 : i32
      %c0_i32_70 = arith.constant 0 : i32
      %c0_i32_71 = arith.constant 0 : i32
      %92 = tpu.memref_slice %arg2[%arg0, %c0_i32_69, %c0_i32_70, %c0_i32_71] : memref<2x18x24x128xbf16, #tpu.memory_space<any>> -> memref<1x18x24x128xbf16, #tpu.memory_space<any>>
      %93 = tpu.memref_squeeze %92 : memref<1x18x24x128xbf16, #tpu.memory_space<any>> -> memref<18x24x128xbf16, #tpu.memory_space<any>>
      %94 = tpu.memref_slice %arg12[%c0_i32_68] : memref<1x!tpu.dma_semaphore, #tpu.memory_space<semaphore_mem>> -> memref<1x!tpu.dma_semaphore, #tpu.memory_space<semaphore_mem>>
      %95 = tpu.memref_squeeze %94 : memref<1x!tpu.dma_semaphore, #tpu.memory_space<semaphore_mem>> -> memref<!tpu.dma_semaphore, #tpu.memory_space<semaphore_mem>>
      tpu.wait_dma2 semaphore(%95 : memref<!tpu.dma_semaphore, #tpu.memory_space<semaphore_mem>>) src(%93 : memref<18x24x128xbf16, #tpu.memory_space<any>>) dst(%arg11 : memref<18x24x128xbf16, #tpu.memory_space<vmem>>)
    } else {
    }
    %c16_i32 = arith.constant 16 : i32
    %3 = arith.muli %arg1, %c16_i32 : i32
    %4 = tpu.assume_multiple %3, 16 : i32
    %c0_i32_1 = arith.constant 0 : i32
    %5 = arith.addi %4, %c0_i32_1 : i32
    %6 = arith.index_cast %5 : i32 to index
    %c0 = arith.constant 0 : index
    %c0_2 = arith.constant 0 : index
    %7 = vector.load %arg11[%6, %c0, %c0_2] : memref<18x24x128xbf16, #tpu.memory_space<vmem>>, vector<16x16x128xbf16>
    %8 = vector.shape_cast %7 : vector<16x16x128xbf16> to vector<256x128xbf16>
    %c0_3 = arith.constant 0 : index
    %c0_4 = arith.constant 0 : index
    %9 = vector.load %arg3[%c0_3, %c0_4] : memref<1152x128xbf16, #tpu.memory_space<vmem>>, vector<128x128xbf16>
    %cst = arith.constant dense<0.000000e+00> : vector<256x128xf32>
    %10 = tpu.matmul %8, %9, %cst {dimension_numbers = #tpu.dot_dimension_numbers<[1], [0], [0], [1], [0, 0, 1, 1], [], []>} : vector<256x128xbf16>, vector<128x128xbf16>, vector<256x128xf32> -> vector<256x128xf32>
    %c0_i32_5 = arith.constant 0 : i32
    %11 = arith.addi %4, %c0_i32_5 : i32
    %12 = arith.index_cast %11 : i32 to index
    %c1 = arith.constant 1 : index
    %c0_6 = arith.constant 0 : index
    %13 = vector.load %arg11[%12, %c1, %c0_6] : memref<18x24x128xbf16, #tpu.memory_space<vmem>>, vector<16x16x128xbf16>
    %14 = vector.shape_cast %13 : vector<16x16x128xbf16> to vector<256x128xbf16>
    %c128 = arith.constant 128 : index
    %c0_7 = arith.constant 0 : index
    %15 = vector.load %arg3[%c128, %c0_7] : memref<1152x128xbf16, #tpu.memory_space<vmem>>, vector<128x128xbf16>
    %cst_8 = arith.constant dense<0.000000e+00> : vector<256x128xf32>
    %16 = tpu.matmul %14, %15, %cst_8 {dimension_numbers = #tpu.dot_dimension_numbers<[1], [0], [0], [1], [0, 0, 1, 1], [], []>} : vector<256x128xbf16>, vector<128x128xbf16>, vector<256x128xf32> -> vector<256x128xf32>
    %17 = arith.addf %10, %16 : vector<256x128xf32>
    %c0_i32_9 = arith.constant 0 : i32
    %18 = arith.addi %4, %c0_i32_9 : i32
    %19 = arith.index_cast %18 : i32 to index
    %c2 = arith.constant 2 : index
    %c0_10 = arith.constant 0 : index
    %20 = vector.load %arg11[%19, %c2, %c0_10] : memref<18x24x128xbf16, #tpu.memory_space<vmem>>, vector<16x16x128xbf16>
    %21 = vector.shape_cast %20 : vector<16x16x128xbf16> to vector<256x128xbf16>
    %c256 = arith.constant 256 : index
    %c0_11 = arith.constant 0 : index
    %22 = vector.load %arg3[%c256, %c0_11] : memref<1152x128xbf16, #tpu.memory_space<vmem>>, vector<128x128xbf16>
    %cst_12 = arith.constant dense<0.000000e+00> : vector<256x128xf32>
    %23 = tpu.matmul %21, %22, %cst_12 {dimension_numbers = #tpu.dot_dimension_numbers<[1], [0], [0], [1], [0, 0, 1, 1], [], []>} : vector<256x128xbf16>, vector<128x128xbf16>, vector<256x128xf32> -> vector<256x128xf32>
    %24 = arith.addf %17, %23 : vector<256x128xf32>
    %c1_i32 = arith.constant 1 : i32
    %25 = arith.addi %4, %c1_i32 : i32
    %26 = arith.index_cast %25 : i32 to index
    %c0_13 = arith.constant 0 : index
    %c0_14 = arith.constant 0 : index
    %27 = vector.load %arg11[%26, %c0_13, %c0_14] : memref<18x24x128xbf16, #tpu.memory_space<vmem>>, vector<16x16x128xbf16>
    %28 = vector.shape_cast %27 : vector<16x16x128xbf16> to vector<256x128xbf16>
    %c384 = arith.constant 384 : index
    %c0_15 = arith.constant 0 : index
    %29 = vector.load %arg3[%c384, %c0_15] : memref<1152x128xbf16, #tpu.memory_space<vmem>>, vector<128x128xbf16>
    %cst_16 = arith.constant dense<0.000000e+00> : vector<256x128xf32>
    %30 = tpu.matmul %28, %29, %cst_16 {dimension_numbers = #tpu.dot_dimension_numbers<[1], [0], [0], [1], [0, 0, 1, 1], [], []>} : vector<256x128xbf16>, vector<128x128xbf16>, vector<256x128xf32> -> vector<256x128xf32>
    %31 = arith.addf %24, %30 : vector<256x128xf32>
    %c1_i32_17 = arith.constant 1 : i32
    %32 = arith.addi %4, %c1_i32_17 : i32
    %33 = arith.index_cast %32 : i32 to index
    %c1_18 = arith.constant 1 : index
    %c0_19 = arith.constant 0 : index
    %34 = vector.load %arg11[%33, %c1_18, %c0_19] : memref<18x24x128xbf16, #tpu.memory_space<vmem>>, vector<16x16x128xbf16>
    %35 = vector.shape_cast %34 : vector<16x16x128xbf16> to vector<256x128xbf16>
    %c512 = arith.constant 512 : index
    %c0_20 = arith.constant 0 : index
    %36 = vector.load %arg3[%c512, %c0_20] : memref<1152x128xbf16, #tpu.memory_space<vmem>>, vector<128x128xbf16>
    %cst_21 = arith.constant dense<0.000000e+00> : vector<256x128xf32>
    %37 = tpu.matmul %35, %36, %cst_21 {dimension_numbers = #tpu.dot_dimension_numbers<[1], [0], [0], [1], [0, 0, 1, 1], [], []>} : vector<256x128xbf16>, vector<128x128xbf16>, vector<256x128xf32> -> vector<256x128xf32>
    %38 = arith.addf %31, %37 : vector<256x128xf32>
    %c1_i32_22 = arith.constant 1 : i32
    %39 = arith.addi %4, %c1_i32_22 : i32
    %40 = arith.index_cast %39 : i32 to index
    %c2_23 = arith.constant 2 : index
    %c0_24 = arith.constant 0 : index
    %41 = vector.load %arg11[%40, %c2_23, %c0_24] : memref<18x24x128xbf16, #tpu.memory_space<vmem>>, vector<16x16x128xbf16>
    %42 = vector.shape_cast %41 : vector<16x16x128xbf16> to vector<256x128xbf16>
    %c640 = arith.constant 640 : index
    %c0_25 = arith.constant 0 : index
    %43 = vector.load %arg3[%c640, %c0_25] : memref<1152x128xbf16, #tpu.memory_space<vmem>>, vector<128x128xbf16>
    %cst_26 = arith.constant dense<0.000000e+00> : vector<256x128xf32>
    %44 = tpu.matmul %42, %43, %cst_26 {dimension_numbers = #tpu.dot_dimension_numbers<[1], [0], [0], [1], [0, 0, 1, 1], [], []>} : vector<256x128xbf16>, vector<128x128xbf16>, vector<256x128xf32> -> vector<256x128xf32>
    %45 = arith.addf %38, %44 : vector<256x128xf32>
    %c2_i32 = arith.constant 2 : i32
    %46 = arith.addi %4, %c2_i32 : i32
    %47 = arith.index_cast %46 : i32 to index
    %c0_27 = arith.constant 0 : index
    %c0_28 = arith.constant 0 : index
    %48 = vector.load %arg11[%47, %c0_27, %c0_28] : memref<18x24x128xbf16, #tpu.memory_space<vmem>>, vector<16x16x128xbf16>
    %49 = vector.shape_cast %48 : vector<16x16x128xbf16> to vector<256x128xbf16>
    %c768 = arith.constant 768 : index
    %c0_29 = arith.constant 0 : index
    %50 = vector.load %arg3[%c768, %c0_29] : memref<1152x128xbf16, #tpu.memory_space<vmem>>, vector<128x128xbf16>
    %cst_30 = arith.constant dense<0.000000e+00> : vector<256x128xf32>
    %51 = tpu.matmul %49, %50, %cst_30 {dimension_numbers = #tpu.dot_dimension_numbers<[1], [0], [0], [1], [0, 0, 1, 1], [], []>} : vector<256x128xbf16>, vector<128x128xbf16>, vector<256x128xf32> -> vector<256x128xf32>
    %52 = arith.addf %45, %51 : vector<256x128xf32>
    %c2_i32_31 = arith.constant 2 : i32
    %53 = arith.addi %4, %c2_i32_31 : i32
    %54 = arith.index_cast %53 : i32 to index
    %c1_32 = arith.constant 1 : index
    %c0_33 = arith.constant 0 : index
    %55 = vector.load %arg11[%54, %c1_32, %c0_33] : memref<18x24x128xbf16, #tpu.memory_space<vmem>>, vector<16x16x128xbf16>
    %56 = vector.shape_cast %55 : vector<16x16x128xbf16> to vector<256x128xbf16>
    %c896 = arith.constant 896 : index
    %c0_34 = arith.constant 0 : index
    %57 = vector.load %arg3[%c896, %c0_34] : memref<1152x128xbf16, #tpu.memory_space<vmem>>, vector<128x128xbf16>
    %cst_35 = arith.constant dense<0.000000e+00> : vector<256x128xf32>
    %58 = tpu.matmul %56, %57, %cst_35 {dimension_numbers = #tpu.dot_dimension_numbers<[1], [0], [0], [1], [0, 0, 1, 1], [], []>} : vector<256x128xbf16>, vector<128x128xbf16>, vector<256x128xf32> -> vector<256x128xf32>
    %59 = arith.addf %52, %58 : vector<256x128xf32>
    %c2_i32_36 = arith.constant 2 : i32
    %60 = arith.addi %4, %c2_i32_36 : i32
    %61 = arith.index_cast %60 : i32 to index
    %c2_37 = arith.constant 2 : index
    %c0_38 = arith.constant 0 : index
    %62 = vector.load %arg11[%61, %c2_37, %c0_38] : memref<18x24x128xbf16, #tpu.memory_space<vmem>>, vector<16x16x128xbf16>
    %63 = vector.shape_cast %62 : vector<16x16x128xbf16> to vector<256x128xbf16>
    %c1024 = arith.constant 1024 : index
    %c0_39 = arith.constant 0 : index
    %64 = vector.load %arg3[%c1024, %c0_39] : memref<1152x128xbf16, #tpu.memory_space<vmem>>, vector<128x128xbf16>
    %cst_40 = arith.constant dense<0.000000e+00> : vector<256x128xf32>
    %65 = tpu.matmul %63, %64, %cst_40 {dimension_numbers = #tpu.dot_dimension_numbers<[1], [0], [0], [1], [0, 0, 1, 1], [], []>} : vector<256x128xbf16>, vector<128x128xbf16>, vector<256x128xf32> -> vector<256x128xf32>
    %66 = arith.addf %59, %65 : vector<256x128xf32>
    %c0_41 = arith.constant 0 : index
    %c0_42 = arith.constant 0 : index
    %67 = vector.load %arg4[%c0_41, %c0_42] : memref<1x128xf32, #tpu.memory_space<vmem>>, vector<1x128xf32>
    %68 = vector.broadcast %67 : vector<1x128xf32> to vector<256x128xf32>
    %69 = arith.addf %66, %68 : vector<256x128xf32>
    %cst_43 = arith.constant 0.000000e+00 : f32
    %70 = vector.broadcast %cst_43 : f32 to vector<256x128xf32>
    %71 = arith.maximumf %69, %70 : vector<256x128xf32>
    %c0_44 = arith.constant 0 : index
    %c0_45 = arith.constant 0 : index
    %c0_46 = arith.constant 0 : index
    %c0_47 = arith.constant 0 : index
    %72 = vector.load %arg7[%c0_44, %c0_45, %c0_46, %c0_47] : memref<1x16x16x8xbf16, #tpu.memory_space<vmem>>, vector<1x16x16x8xbf16>
    %73 = vector.shape_cast %72 : vector<1x16x16x8xbf16> to vector<256x8xbf16>
    %c0_48 = arith.constant 0 : index
    %c0_49 = arith.constant 0 : index
    %74 = vector.load %arg8[%c0_48, %c0_49] : memref<8x128xbf16, #tpu.memory_space<vmem>>, vector<8x128xbf16>
    %cst_50 = arith.constant dense<0.000000e+00> : vector<256x128xf32>
    %75 = tpu.matmul %73, %74, %cst_50 {dimension_numbers = #tpu.dot_dimension_numbers<[1], [0], [0], [1], [0, 0, 1, 1], [], []>} : vector<256x8xbf16>, vector<8x128xbf16>, vector<256x128xf32> -> vector<256x128xf32>
    %76 = arith.addf %71, %75 : vector<256x128xf32>
    %77 = vector.shape_cast %76 : vector<256x128xf32> to vector<1x16x16x128xf32>
    %78 = arith.truncf %77 : vector<1x16x16x128xf32> to vector<1x16x16x128xbf16>
    %c0_51 = arith.constant 0 : index
    %c0_52 = arith.constant 0 : index
    %c0_53 = arith.constant 0 : index
    %c0_54 = arith.constant 0 : index
    %79 = vector.load %arg9[%c0_51, %c0_52, %c0_53, %c0_54] : memref<1x16x16x128xbf16, #tpu.memory_space<vmem>>, vector<1x16x16x128xbf16>
    tpu.vector_store %arg9[%c0_51, %c0_52, %c0_53, %c0_54], %78 {strides = array<i32>} : memref<1x16x16x128xbf16, #tpu.memory_space<vmem>>, vector<1x16x16x128xbf16>,
    %c0_55 = arith.constant 0 : index
    %c0_56 = arith.constant 0 : index
    %80 = vector.load %arg5[%c0_55, %c0_56] : memref<128x128xbf16, #tpu.memory_space<vmem>>, vector<128x128xbf16>
    %cst_57 = arith.constant dense<0.000000e+00> : vector<256x128xf32>
    %81 = tpu.matmul %35, %80, %cst_57 {dimension_numbers = #tpu.dot_dimension_numbers<[1], [0], [0], [1], [0, 0, 1, 1], [], []>} : vector<256x128xbf16>, vector<128x128xbf16>, vector<256x128xf32> -> vector<256x128xf32>
    %c0_58 = arith.constant 0 : index
    %c0_59 = arith.constant 0 : index
    %82 = vector.load %arg6[%c0_58, %c0_59] : memref<1x128xf32, #tpu.memory_space<vmem>>, vector<1x128xf32>
    %83 = vector.broadcast %82 : vector<1x128xf32> to vector<256x128xf32>
    %84 = arith.addf %81, %83 : vector<256x128xf32>
    %85 = vector.shape_cast %84 : vector<256x128xf32> to vector<1x16x16x128xf32>
    %86 = arith.truncf %85 : vector<1x16x16x128xf32> to vector<1x16x16x128xbf16>
    %c0_60 = arith.constant 0 : index
    %c0_61 = arith.constant 0 : index
    %c0_62 = arith.constant 0 : index
    %c0_63 = arith.constant 0 : index
    %87 = vector.load %arg10[%c0_60, %c0_61, %c0_62, %c0_63] : memref<1x16x16x128xbf16, #tpu.memory_space<vmem>>, vector<1x16x16x128xbf16>
    tpu.vector_store %arg10[%c0_60, %c0_61, %c0_62, %c0_63], %86 {strides = array<i32>} : memref<1x16x16x128xbf16, #tpu.memory_space<vmem>>, vector<1x16x16x128xbf16>,
    return
  }
  func.func @transform_1(%arg0: i32, %arg1: i32) -> (i32, i32) {
    %c0_i32 = arith.constant 0 : i32
    %c0_i32_0 = arith.constant 0 : i32
    %c0_i32_1 = arith.constant 0 : i32
    return %c0_i32, %c0_i32_0 : i32, i32
  }
  func.func @transform_2(%arg0: i32, %arg1: i32) -> (i32, i32) {
    %c0_i32 = arith.constant 0 : i32
    %c0_i32_0 = arith.constant 0 : i32
    %c0_i32_1 = arith.constant 0 : i32
    return %c0_i32, %c0_i32_0 : i32, i32
  }
  func.func @transform_3(%arg0: i32, %arg1: i32) -> (i32, i32) {
    %c0_i32 = arith.constant 0 : i32
    %c0_i32_0 = arith.constant 0 : i32
    %c0_i32_1 = arith.constant 0 : i32
    return %c0_i32, %c0_i32_0 : i32, i32
  }
  func.func @transform_4(%arg0: i32, %arg1: i32) -> (i32, i32) {
    %c0_i32 = arith.constant 0 : i32
    %c0_i32_0 = arith.constant 0 : i32
    %c0_i32_1 = arith.constant 0 : i32
    return %c0_i32, %c0_i32_0 : i32, i32
  }
  func.func @transform_5(%arg0: i32, %arg1: i32) -> (i32, i32, i32, i32) {
    %c0_i32 = arith.constant 0 : i32
    %c0_i32_0 = arith.constant 0 : i32
    %c0_i32_1 = arith.constant 0 : i32
    return %arg0, %arg1, %c0_i32, %c0_i32_0 : i32, i32, i32, i32
  }
  func.func @transform_6(%arg0: i32, %arg1: i32) -> (i32, i32) {
    %c0_i32 = arith.constant 0 : i32
    %c0_i32_0 = arith.constant 0 : i32
    %c0_i32_1 = arith.constant 0 : i32
    return %c0_i32, %c0_i32_0 : i32, i32
  }
  func.func @transform_7(%arg0: i32, %arg1: i32) -> (i32, i32, i32, i32) {
    %c0_i32 = arith.constant 0 : i32
    %c0_i32_0 = arith.constant 0 : i32
    %c0_i32_1 = arith.constant 0 : i32
    return %arg0, %arg1, %c0_i32, %c0_i32_0 : i32, i32, i32, i32
  }
  func.func @transform_8(%arg0: i32, %arg1: i32) -> (i32, i32, i32, i32) {
    %c0_i32 = arith.constant 0 : i32
    %c0_i32_0 = arith.constant 0 : i32
    %c0_i32_1 = arith.constant 0 : i32
    return %arg0, %arg1, %c0_i32, %c0_i32_0 : i32, i32, i32, i32
  }
}

</mosaic_0001>

<llo_original>
// kernel: tpu_custom_call.1
$region0: #{tpu_custom_call.1}
  #allocation0 [shape = 'u32[]', space=smem, size = 0x4, offset = 0x4, fixed_abs, tag = 'smem constant byte address 0x4 - core index']
  #allocation1 [shape = 'u32[144,128]{1,0:T(1,128)}', space=vmem, size = 0x12000, scoped, tag = 'internal scratch']
  #allocation2 [shape = 'bf16[18,24,128]{2,1,0:T(8,128)(2,1)}', space=vmem, size = 0x1b000, scoped, tag = 'scratch operand']
  #allocation3 [shape = 's32[1]{0}', space=sflag, size = 0x4, scoped, tag = 'scratch operand']
  #allocation10 [shape = 's32[]', space=sflag, size = 0x4, offset = 0, fixed_abs, tag = 'sflag constant byte address 0x0 - dummy sync flag']
  #allocation11 [shape = 's32[]', space=sflag, size = 0x4, offset = 0, fixed_abs, tag = 'sflag constant byte address 0x0 - dummy sync flag']
  #allocation12 [shape = 'u32[]', space=smem, size = 0x4, offset = 0x44, fixed_abs, tag = 'smem constant byte address 0x44 - assertion arg 0']
  #allocation13 [shape = 'u32[]', space=smem, size = 0x4, offset = 0x48, fixed_abs, tag = 'smem constant byte address 0x48 - assertion arg 1']
  %s0 = inlined_call_operand.hbm [shape: bf16[2,18,24,128], index: 0, kind: input, shape index: {}]
  %s1 = inlined_call_operand.hbm [shape: bf16[1152,128], index: 1, kind: input, shape index: {}]
  %s2 = inlined_call_operand.vmem [shape: f32[1,128], index: 2, kind: input, shape index: {}]
  %s3 = inlined_call_operand.vmem [shape: bf16[128,128], index: 3, kind: input, shape index: {}]
  %s4 = inlined_call_operand.vmem [shape: f32[1,128], index: 4, kind: input, shape index: {}]
  %s5 = inlined_call_operand.vmem [shape: bf16[2,16,16,8], index: 5, kind: input, shape index: {}]
  %s6 = inlined_call_operand.vmem [shape: bf16[8,128], index: 6, kind: input, shape index: {}]
  %s7 = inlined_call_operand.hbm [shape: bf16[2,16,16,128], index: 7, kind: output, shape index: {0}]
  %s8 = inlined_call_operand.hbm [shape: bf16[2,16,16,128], index: 8, kind: output, shape index: {1}]
  %9 = xla_tuple %s7, %s8
  %s10 = sld [smem:[#allocation0]]
  $region77: #{tpu_custom_call.1} parent=0
    _
  %s12 = ssub.s32 1, %s10
  %s13 = scalar_select 0, %s12, %s10
  $region1: #{tpu_custom_call.1} parent=0
    #allocation4 [shape = 'u8[294912]{0}', space=vmem, size = 0x48000, scoped, tag = 'input window, operand 1, single buffered']
    #allocation5 [shape = 's32[2]{0}', space=sflag, size = 0x8, scoped, tag = 'scoped memory for tpu_custom_call.1']
    #allocation6 [shape = 's32[2]{0}', space=sflag, size = 0x8, scoped, tag = 'scoped memory for tpu_custom_call.1']
    #allocation7 [shape = 'u8[131072]{0}', space=vmem, size = 0x20000, scoped, tag = 'output window, operand 0']
    #allocation8 [shape = 'u8[131072]{0}', space=vmem, size = 0x20000, scoped, tag = 'output window, operand 1']
    #allocation9 [shape = 's32[2]{0}', space=sflag, size = 0x8, scoped, tag = 'scoped memory for tpu_custom_call.1']
    %14 = vsyncpa [#allocation5], 0
    %15 = vsyncpa [#allocation6], 0
    %s16 = scalar_lea.sflag [#allocation6], 1
    %17 = vsyncpa %s16, 0
    %18 = vsyncpa [#allocation9], 0
    %s19 = scalar_lea.sflag [#allocation9], 1
    %20 = vsyncpa %s19, 0
    loop: start=0, step=1, limit=4
    $region2: #{tpu_custom_call.1} parent=1 // loop_pre_header
      _
    $region3: #{tpu_custom_call.1} parent=1 // loop_header
      %s22 = sphi 0, %s26
      %p23 = scmp.ge.s32.totalorder %s22, 4
      %s29 = sphi 0, %s41
      %s30 = sphi 0, %s37
      %s31 = sphi 0, %s29
      %s32 = sphi 0, %s30
      %s33 = sphi 0, %s31
      %s34 = sphi 0, %s32
      %s42 = sphi 0, %s42
      %s44 = sphi 0, %s42
      %s45 = sphi 0, %s44
      %s59 = sphi 0, %s45
      %s63 = sphi 0, %s63
      %s65 = sphi 0, %s63
      %s66 = sphi 0, %s65
      %s80 = sphi 0, %s66
      %s84 = sphi 0, %s84
      %s86 = sphi 0, %s84
      %s87 = sphi 0, %s86
      %s101 = sphi 0, %s87
      %s105 = sphi 0, %s105
      %s107 = sphi 0, %s105
      %s108 = sphi 0, %s107
      %s122 = sphi 0, %s108
      %s130 = sphi 0, %s132
      %s133 = sphi 0, %s130
      %s134 = sphi 0, %s133
      %s150 = sphi 0, %s134
      %s154 = sphi 0, %s154
      %s156 = sphi 0, %s154
      %s157 = sphi 0, %s156
      %s171 = sphi 0, %s157
      %s179 = sphi 0, %s181
      %s182 = sphi 0, %s179
      %s183 = sphi 0, %s182
      %s199 = sphi 0, %s183
      %s207 = sphi 0, %s209
      %s210 = sphi 0, %s207
      %s211 = sphi 0, %s210
      %s227 = sphi 0, %s211
    $region4: #{tpu_custom_call.1} parent=1 // loop_header_branch
      %25 = sbr.rel (%p23) target = $region8
    $region5: #{tpu_custom_call.1} parent=1 // loop_body
      %s27 = ssub.s32 %s22, 1
      %s28 = ssub.s32 %s22, 2
      %s35 = sadd.s32 1, %s30
      %p36 = scmp.ge.s32.totalorder %s35, 1
      %s37 = scalar_select %p36, 0, %s35
      %s38 = sadd.s32 1, %s29
      %s39 = scalar_select %p36, %s38, %s29
      %p40 = scmp.ge.s32.totalorder %s39, 2
      %s41 = scalar_select %p40, 0, %s39
      %s43 = sadd.s32 %s42, 1
      %p46 = scmp.eq.s32.totalorder %s22, 1
      %p47 = scmp.ne.s32.totalorder %s42, %s44
      %p48 = scmp.eq.s32.totalorder %s22, 0
      %p49 = por %p47, %p48
      %p50 = scmp.ne.s32.totalorder %s42, %s44
      %p51 = scmp.eq.s32.totalorder %s27, 1
      %p52 = por %p50, %p51
      %p53 = scmp.ne.s32.totalorder %s44, %s45
      %p54 = scmp.eq.s32.totalorder %s27, 0
      %p55 = por %p53, %p54
      %p56 = scmp.ne.s32.totalorder %s44, %s45
      %p57 = scmp.eq.s32.totalorder %s28, 1
      %p58 = por %p56, %p57
      %p60 = scmp.ne.s32.totalorder %s45, %s59
      %p61 = scmp.eq.s32.totalorder %s28, 0
      %p62 = por %p60, %p61
      %s64 = sadd.s32 %s63, 1
      %p67 = scmp.eq.s32.totalorder %s22, 1
      %p68 = scmp.ne.s32.totalorder %s63, %s65
      %p69 = scmp.eq.s32.totalorder %s22, 0
      %p70 = por %p68, %p69
      %p71 = scmp.ne.s32.totalorder %s63, %s65
      %p72 = scmp.eq.s32.totalorder %s27, 1
      %p73 = por %p71, %p72
      %p74 = scmp.ne.s32.totalorder %s65, %s66
      %p75 = scmp.eq.s32.totalorder %s27, 0
      %p76 = por %p74, %p75
      %p77 = scmp.ne.s32.totalorder %s65, %s66
      %p78 = scmp.eq.s32.totalorder %s28, 1
      %p79 = por %p77, %p78
      %p81 = scmp.ne.s32.totalorder %s66, %s80
      %p82 = scmp.eq.s32.totalorder %s28, 0
      %p83 = por %p81, %p82
      %s85 = sadd.s32 %s84, 1
      %p88 = scmp.eq.s32.totalorder %s22, 1
      %p89 = scmp.ne.s32.totalorder %s84, %s86
      %p90 = scmp.eq.s32.totalorder %s22, 0
      %p91 = por %p89, %p90
      %p92 = scmp.ne.s32.totalorder %s84, %s86
      %p93 = scmp.eq.s32.totalorder %s27, 1
      %p94 = por %p92, %p93
      %p95 = scmp.ne.s32.totalorder %s86, %s87
      %p96 = scmp.eq.s32.totalorder %s27, 0
      %p97 = por %p95, %p96
      %p98 = scmp.ne.s32.totalorder %s86, %s87
      %p99 = scmp.eq.s32.totalorder %s28, 1
      %p100 = por %p98, %p99
      %p102 = scmp.ne.s32.totalorder %s87, %s101
      %p103 = scmp.eq.s32.totalorder %s28, 0
      %p104 = por %p102, %p103
      %s106 = sadd.s32 %s105, 1
      %p109 = scmp.eq.s32.totalorder %s22, 1
      %p110 = scmp.ne.s32.totalorder %s105, %s107
      %p111 = scmp.eq.s32.totalorder %s22, 0
      %p112 = por %p110, %p111
      %p113 = scmp.ne.s32.totalorder %s105, %s107
      %p114 = scmp.eq.s32.totalorder %s27, 1
      %p115 = por %p113, %p114
      %p116 = scmp.ne.s32.totalorder %s107, %s108
      %p117 = scmp.eq.s32.totalorder %s27, 0
      %p118 = por %p116, %p117
      %p119 = scmp.ne.s32.totalorder %s107, %s108
      %p120 = scmp.eq.s32.totalorder %s28, 1
      %p121 = por %p119, %p120
      %p123 = scmp.ne.s32.totalorder %s108, %s122
      %p124 = scmp.eq.s32.totalorder %s28, 0
      %p125 = por %p123, %p124
      %s126 = ssub.s32 %s29, %s41
      %s127 = ssub.s32 %s30, %s37
      %s128 = sor.u32 %s126, %s127
      %p129 = scmp.eq.s32.totalorder %s128, 0
      %s131 = sadd.s32 %s130, 1
      %s132 = scalar_select %p129, %s130, %s131
      %p135 = pneg %p129
      %p136 = scmp.eq.s32.totalorder %s22, 1
      %p137 = por %p135, %p136
      %p138 = scmp.ne.s32.totalorder %s130, %s133
      %p139 = scmp.eq.s32.totalorder %s22, 0
      %p140 = por %p138, %p139
      %p141 = scmp.ne.s32.totalorder %s130, %s133
      %p142 = scmp.eq.s32.totalorder %s27, 1
      %p143 = por %p141, %p142
      %p144 = scmp.ne.s32.totalorder %s133, %s134
      %p145 = scmp.eq.s32.totalorder %s27, 0
      %p146 = por %p144, %p145
      %p147 = scmp.ne.s32.totalorder %s133, %s134
      %p148 = scmp.eq.s32.totalorder %s28, 1
      %p149 = por %p147, %p148
      %p151 = scmp.ne.s32.totalorder %s134, %s150
      %p152 = scmp.eq.s32.totalorder %s28, 0
      %p153 = por %p151, %p152
      %s155 = sadd.s32 %s154, 1
      %p158 = scmp.eq.s32.totalorder %s22, 1
      %p159 = scmp.ne.s32.totalorder %s154, %s156
      %p160 = scmp.eq.s32.totalorder %s22, 0
      %p161 = por %p159, %p160
      %p162 = scmp.ne.s32.totalorder %s154, %s156
      %p163 = scmp.eq.s32.totalorder %s27, 1
      %p164 = por %p162, %p163
      %p165 = scmp.ne.s32.totalorder %s156, %s157
      %p166 = scmp.eq.s32.totalorder %s27, 0
      %p167 = por %p165, %p166
      %p168 = scmp.ne.s32.totalorder %s156, %s157
      %p169 = scmp.eq.s32.totalorder %s28, 1
      %p170 = por %p168, %p169
      %p172 = scmp.ne.s32.totalorder %s157, %s171
      %p173 = scmp.eq.s32.totalorder %s28, 0
      %p174 = por %p172, %p173
      %s175 = ssub.s32 %s29, %s41
      %s176 = ssub.s32 %s30, %s37
      %s177 = sor.u32 %s175, %s176
      %p178 = scmp.eq.s32.totalorder %s177, 0
      %s180 = sadd.s32 %s179, 1
      %s181 = scalar_select %p178, %s179, %s180
      %p184 = pneg %p178
      %p185 = scmp.eq.s32.totalorder %s22, 1
      %p186 = por %p184, %p185
      %p187 = scmp.ne.s32.totalorder %s179, %s182
      %p188 = scmp.eq.s32.totalorder %s22, 0
      %p189 = por %p187, %p188
      %p190 = scmp.ne.s32.totalorder %s179, %s182
      %p191 = scmp.eq.s32.totalorder %s27, 1
      %p192 = por %p190, %p191
      %p193 = scmp.ne.s32.totalorder %s182, %s183
      %p194 = scmp.eq.s32.totalorder %s27, 0
      %p195 = por %p193, %p194
      %p196 = scmp.ne.s32.totalorder %s182, %s183
      %p197 = scmp.eq.s32.totalorder %s28, 1
      %p198 = por %p196, %p197
      %p200 = scmp.ne.s32.totalorder %s183, %s199
      %p201 = scmp.eq.s32.totalorder %s28, 0
      %p202 = por %p200, %p201
      %s203 = ssub.s32 %s29, %s41
      %s204 = ssub.s32 %s30, %s37
      %s205 = sor.u32 %s203, %s204
      %p206 = scmp.eq.s32.totalorder %s205, 0
      %s208 = sadd.s32 %s207, 1
      %s209 = scalar_select %p206, %s207, %s208
      %p212 = pneg %p206
      %p213 = scmp.eq.s32.totalorder %s22, 1
      %p214 = por %p212, %p213
      %p215 = scmp.ne.s32.totalorder %s207, %s210
      %p216 = scmp.eq.s32.totalorder %s22, 0
      %p217 = por %p215, %p216
      %p218 = scmp.ne.s32.totalorder %s207, %s210
      %p219 = scmp.eq.s32.totalorder %s27, 1
      %p220 = por %p218, %p219
      %p221 = scmp.ne.s32.totalorder %s210, %s211
      %p222 = scmp.eq.s32.totalorder %s27, 0
      %p223 = por %p221, %p222
      %p224 = scmp.ne.s32.totalorder %s210, %s211
      %p225 = scmp.eq.s32.totalorder %s28, 1
      %p226 = por %p224, %p225
      %p228 = scmp.ne.s32.totalorder %s211, %s227
      %p229 = scmp.eq.s32.totalorder %s28, 0
      %p230 = por %p228, %p229
      %p231 = scmp.le.s32.totalorder 1, %s22
      %p232 = scmp.lt.s32.totalorder %s22, 3
      %p233 = pnand %p231, %p232
      %p234 = pneg %p233
      // Predicated region
      $region9: #{tpu_custom_call.1} parent=5 // pred_check
        _
      $region10: #{tpu_custom_call.1} parent=5 // pred_check_branch
        %236 = sbr.rel (%p233) target = $region12
      $region11: #{tpu_custom_call.1} parent=5 // pred_region
        %s237 = ssub.s32 %s22, 1
        // Predicated region
        $region13: #{tpu_custom_call.1} parent=11 // pred_check
          %p238 = pneg %p55
        $region14: #{tpu_custom_call.1} parent=11 // pred_check_branch
          %240 = sbr.rel (%p238) target = $region16
        $region15: #{tpu_custom_call.1} parent=11 // pred_region
          %s242 = ssub.s32 9216, 9216
          %243 = vsyncadd [#allocation5], %s242
          %s244 = sshll.u32 [#allocation4], 4
          %s245 = int_to_ptr.vmem [resolvable:$true] %s244
          %250 = dma.hbm_to_vmem [thread:$0]  %s1, 9216, %s245, [#allocation5], 64, 64, 4
        $region16: #{tpu_custom_call.1} parent=11 // pred_fallthru
          _
        // Predicated region
        $region17: #{tpu_custom_call.1} parent=11 // pred_check
          %p251 = pneg %p76
        $region18: #{tpu_custom_call.1} parent=11 // pred_check_branch
          %253 = sbr.rel (%p251) target = $region20
        $region19: #{tpu_custom_call.1} parent=11 // pred_region
          _
        $region20: #{tpu_custom_call.1} parent=11 // pred_fallthru
          _
        // Predicated region
        $region21: #{tpu_custom_call.1} parent=11 // pred_check
          %p254 = pneg %p97
        $region22: #{tpu_custom_call.1} parent=11 // pred_check_branch
          %256 = sbr.rel (%p254) target = $region24
        $region23: #{tpu_custom_call.1} parent=11 // pred_region
          _
        $region24: #{tpu_custom_call.1} parent=11 // pred_fallthru
          _
        // Predicated region
        $region25: #{tpu_custom_call.1} parent=11 // pred_check
          %p257 = pneg %p118
        $region26: #{tpu_custom_call.1} parent=11 // pred_check_branch
          %259 = sbr.rel (%p257) target = $region28
        $region27: #{tpu_custom_call.1} parent=11 // pred_region
          _
        $region28: #{tpu_custom_call.1} parent=11 // pred_fallthru
          _
        // Predicated region
        $region29: #{tpu_custom_call.1} parent=11 // pred_check
          %p260 = pneg %p167
        $region30: #{tpu_custom_call.1} parent=11 // pred_check_branch
          %262 = sbr.rel (%p260) target = $region32
        $region31: #{tpu_custom_call.1} parent=11 // pred_region
          _
        $region32: #{tpu_custom_call.1} parent=11 // pred_fallthru
          _
      $region12: #{tpu_custom_call.1} parent=5 // pred_fallthru
        _
      %p263 = scmp.lt.s32.totalorder %s22, 2
      // Predicated region
      $region33: #{tpu_custom_call.1} parent=5 // pred_check
        %p264 = pneg %p263
      $region34: #{tpu_custom_call.1} parent=5 // pred_check_branch
        %266 = sbr.rel (%p264) target = $region36
      $region35: #{tpu_custom_call.1} parent=5 // pred_region
        // Predicated region
        $region37: #{tpu_custom_call.1} parent=35 // pred_check
          %p267 = pneg %p140
        $region38: #{tpu_custom_call.1} parent=35 // pred_check_branch
          %269 = sbr.rel (%p267) target = $region40
        $region39: #{tpu_custom_call.1} parent=35 // pred_region
          %s270 = smul.u32 16, %s30
          %p271 = scmp.lt.s32.totalorder %s29, 1
          %s272 = scalar_select %p271, %s29, 1
          %p273 = scmp.lt.s32.totalorder %s270, 15
          %s274 = scalar_select %p273, %s270, 15
          %s275 = smul.addr %s274, 2
          %s276 = smul.addr %s272, 32
          %s277 = sadd.s32 %s275, %s276
          %s278 = smul.addr %s277, 4
          %s279 = scalar_lea.vmem %s5, %s278
          %s280 = smul.u32 16, %s30
        $region40: #{tpu_custom_call.1} parent=35 // pred_fallthru
          _
      $region36: #{tpu_custom_call.1} parent=5 // pred_fallthru
        _
      %p281 = scmp.le.s32.totalorder 1, %s22
      %p282 = scmp.lt.s32.totalorder %s22, 3
      %p283 = pnand %p281, %p282
      %p284 = pneg %p283
      // Predicated region
      $region41: #{tpu_custom_call.1} parent=5 // pred_check
        _
      $region42: #{tpu_custom_call.1} parent=5 // pred_check_branch
        %286 = sbr.rel (%p283) target = $region44
      $region43: #{tpu_custom_call.1} parent=5 // pred_region
        %s287 = ssub.s32 %s22, 1
        // Predicated region
        $region45: #{tpu_custom_call.1} parent=43 // pred_check
          %p288 = pneg %p55
        $region46: #{tpu_custom_call.1} parent=43 // pred_check_branch
          %290 = sbr.rel (%p288) target = $region48
        $region47: #{tpu_custom_call.1} parent=43 // pred_region
          %291 = dma.done [#allocation5], 9216
        $region48: #{tpu_custom_call.1} parent=43 // pred_fallthru
          _
        %p292 = pneg %p55
        %p293 = pneg %p52
        %p294 = pneg %p76
        %p295 = pneg %p73
        %p296 = pneg %p97
        %p297 = pneg %p94
        %p298 = pneg %p118
        %p299 = pneg %p115
        %s300 = smul.u32 16, %s32
        %p301 = scmp.lt.s32.totalorder %s31, 1
        %s302 = scalar_select %p301, %s31, 1
        %p303 = scmp.lt.s32.totalorder %s300, 15
        %s304 = scalar_select %p303, %s300, 15
        %s305 = smul.addr %s304, 2
        %s306 = smul.addr %s302, 32
        %s307 = sadd.s32 %s305, %s306
        %s308 = smul.addr %s307, 4
        %s309 = scalar_lea.vmem %s5, %s308
        %p310 = pneg %p146
        %p311 = pneg %p143
        %p312 = pneg %p167
        %p313 = pneg %p164
        %p314 = pneg %p195
        %p315 = pneg %p192
        %s316 = sand.u32 %s182, 1
        %s317 = scalar_lea.sflag [#allocation6], %s316
        %s318 = sand.u32 %s182, 1
        %s319 = smul.addr %s318, 128
        %s320 = scalar_lea.vmem [#allocation7], %s319
        %p321 = pneg %p223
        %p322 = pneg %p220
        %s323 = sand.u32 %s210, 1
        %s324 = scalar_lea.sflag [#allocation9], %s323
        %s325 = sand.u32 %s210, 1
        %s326 = smul.addr %s325, 128
        %s327 = scalar_lea.vmem [#allocation8], %s326
        %s328 = smul.u32 16, %s32
        %p329 = scmp.lt.s32.totalorder %s31, 1
        %s330 = scalar_select %p329, %s31, 1
        %p331 = scmp.lt.s32.totalorder %s328, 15
        %s332 = scalar_select %p331, %s328, 15
        %s333 = smul.addr %s332, 2
        %s334 = smul.addr %s330, 32
        %s335 = sadd.s32 %s333, %s334
        %s336 = smul.addr %s335, 4
        %s337 = scalar_lea.vmem %s5, %s336
        %s338 = smul.u32 16, %s32
        %s339 = smul.u32 16, %s32
        %s340 = smul.u32 16, %s32
        %p342 = scmp.eq.s32.totalorder %s32, 0
        // Predicated region
        $region49: #{tpu_custom_call.1} parent=43 // pred_check
          %p343 = pneg %p342
        $region50: #{tpu_custom_call.1} parent=43 // pred_check_branch
          %345 = sbr.rel (%p343) target = $region52
        $region51: #{tpu_custom_call.1} parent=43 // pred_region
          %s346 = smul.u32 %s31, 54
          %s347 = smul.addr %s346, 64
          %s348 = scalar_lea.hbm %s0, %s347
          // Predicated region
          $region53: #{tpu_custom_call.1} parent=51 // pred_check
            _
          $region54: #{tpu_custom_call.1} parent=51 // pred_check_branch
            %350 = sbr.rel target = $region56
          $region55: #{tpu_custom_call.1} parent=51 // pred_region
            %351 = sst [smem:[#allocation12]] [#allocation11]
            %352 = sst [smem:[#allocation13]] [#allocation10]
          $region56: #{tpu_custom_call.1} parent=51 // pred_fallthru
            _
          %354 = shalt.err (0)
          %s356 = sshll.u32 [#allocation2], 4
          %s357 = int_to_ptr.vmem [resolvable:$true] %s356
          %359 = dma.hbm_to_vmem [thread:$0]  %s348, 3456, %s357, [#allocation3]
          %s360 = smul.u32 4, 18
          %s361 = smul.u32 %s360, 3
          %s362 = smul.u32 %s361, 1
          %s363 = sshll.u32 %s362, 4
          %364 = dma.done [#allocation3], %s363
        $region52: #{tpu_custom_call.1} parent=43 // pred_fallthru
          _
        %s365 = smul.u32 %s32, 16
        %s366 = smul.u32 %s365, 3
        %s367 = smul.addr %s366, 4
        %s368 = scalar_lea.vmem [#allocation2], %s367
        %v369 = vld [vmem:[%s368] sm:$0xf]
        %v370 = vld [vmem:[%s368 + $0x4] sm:$0xf]
        %v371 = vld [vmem:[%s368 + $0xc] sm:$0xf]
        %v372 = vld [vmem:[%s368 + $0x10] sm:$0xf]
        %v373 = vld [vmem:[%s368 + $0x18] sm:$0xf]
        %v374 = vld [vmem:[%s368 + $0x1c] sm:$0xf]
        %v375 = vld [vmem:[%s368 + $0x24] sm:$0xf]
        %v376 = vld [vmem:[%s368 + $0x28] sm:$0xf]
        %v377 = vld [vmem:[%s368 + $0x30] sm:$0xf]
        %v378 = vld [vmem:[%s368 + $0x34] sm:$0xf]
        %v379 = vld [vmem:[%s368 + $0x3c] sm:$0xf]
        %v380 = vld [vmem:[%s368 + $0x40] sm:$0xf]
        %v381 = vld [vmem:[%s368 + $0x48] sm:$0xf]
        %v382 = vld [vmem:[%s368 + $0x4c] sm:$0xf]
        %v383 = vld [vmem:[%s368 + $0x54] sm:$0xf]
        %v384 = vld [vmem:[%s368 + $0x58] sm:$0xf]
        %v385 = vld [vmem:[%s368 + $0x60] sm:$0xf]
        %v386 = vld [vmem:[%s368 + $0x64] sm:$0xf]
        %v387 = vld [vmem:[%s368 + $0x6c] sm:$0xf]
        %v388 = vld [vmem:[%s368 + $0x70] sm:$0xf]
        %v389 = vld [vmem:[%s368 + $0x78] sm:$0xf]
        %v390 = vld [vmem:[%s368 + $0x7c] sm:$0xf]
        %v391 = vld [vmem:[%s368 + $0x84] sm:$0xf]
        %v392 = vld [vmem:[%s368 + $0x88] sm:$0xf]
        %v393 = vld [vmem:[%s368 + $0x90] sm:$0xf]
        %v394 = vld [vmem:[%s368 + $0x94] sm:$0xf]
        %v395 = vld [vmem:[%s368 + $0x9c] sm:$0xf]
        %v396 = vld [vmem:[%s368 + $0xa0] sm:$0xf]
        %v397 = vld [vmem:[%s368 + $0xa8] sm:$0xf]
        %v398 = vld [vmem:[%s368 + $0xac] sm:$0xf]
        %v399 = vld [vmem:[%s368 + $0xb4] sm:$0xf]
        %v400 = vld [vmem:[%s368 + $0xb8] sm:$0xf]
        %v401 = vld [vmem:[#allocation4] sm:$0xf]
        %v402 = vld [vmem:[#allocation4 + $0x4] sm:$0xf]
        %v403 = vld [vmem:[#allocation4 + $0x8] sm:$0xf]
        %v404 = vld [vmem:[#allocation4 + $0xc] sm:$0xf]
        %v405 = vld [vmem:[#allocation4 + $0x10] sm:$0xf]
        %v406 = vld [vmem:[#allocation4 + $0x14] sm:$0xf]
        %v407 = vld [vmem:[#allocation4 + $0x18] sm:$0xf]
        %v408 = vld [vmem:[#allocation4 + $0x1c] sm:$0xf]
        %v409 = vld [vmem:[#allocation4 + $0x20] sm:$0xf]
        %v410 = vld [vmem:[#allocation4 + $0x24] sm:$0xf]
        %v411 = vld [vmem:[#allocation4 + $0x28] sm:$0xf]
        %v412 = vld [vmem:[#allocation4 + $0x2c] sm:$0xf]
        %v413 = vld [vmem:[#allocation4 + $0x30] sm:$0xf]
        %v414 = vld [vmem:[#allocation4 + $0x34] sm:$0xf]
        %v415 = vld [vmem:[#allocation4 + $0x38] sm:$0xf]
        %v416 = vld [vmem:[#allocation4 + $0x3c] sm:$0xf]
        %v417 = vld [vmem:[%s368 + $0x8] sm:$0x1]
        %v418 = vld [vmem:[%s368 + $0x14] sm:$0x1]
        %v419 = vld [vmem:[%s368 + $0x20] sm:$0x1]
        %v420 = vld [vmem:[%s368 + $0x2c] sm:$0x1]
        %v421 = vld [vmem:[%s368 + $0x38] sm:$0x1]
        %v422 = vld [vmem:[%s368 + $0x44] sm:$0x1]
        %v423 = vld [vmem:[%s368 + $0x50] sm:$0x1]
        %v424 = vld [vmem:[%s368 + $0x5c] sm:$0x1]
        %v425 = vld [vmem:[%s368 + $0x68] sm:$0x1]
        %v426 = vld [vmem:[%s368 + $0x74] sm:$0x1]
        %v427 = vld [vmem:[%s368 + $0x80] sm:$0x1]
        %v428 = vld [vmem:[%s368 + $0x8c] sm:$0x1]
        %v429 = vld [vmem:[%s368 + $0x98] sm:$0x1]
        %v430 = vld [vmem:[%s368 + $0xa4] sm:$0x1]
        %v431 = vld [vmem:[%s368 + $0xb0] sm:$0x1]
        %v432 = vld [vmem:[%s368 + $0xbc] sm:$0x1]
        %vm433 = vsmask.f32 3328
        %vm434 = vsmask.f32 7440
        %vm435 = vmor %vm433, %vm434
        %v437 = vshrl.u32 %v369, 16
        %v439 = vrot.slane %v437, 4
        %v440 = vshll.u32 %v369, 16
        %v442 = vrot.slane %v440, 5
        %v443 = vor.u32 %v439, %v442
        %v444 = vrot.slane %v443, 4
        %v446 = vshll.u32 %v370, 16
        %v448 = vrot.slane %v446, 5
        %v449 = vsel %vm435, %v444, %v448
        %v450 = vshrl.u32 %v370, 16
        %v452 = vrot.slane %v450, 4
        %v453 = vor.u32 %v452, %v448
        %v454 = vrot.slane %v453, 4
        %v456 = vshll.u32 %v417, 16
        %v458 = vrot.slane %v456, 5
        %v459 = vsel %vm435, %v454, %v458
        %v461 = vshrl.u32 %v371, 16
        %v463 = vrot.slane %v461, 4
        %v464 = vshll.u32 %v371, 16
        %v466 = vrot.slane %v464, 5
        %v467 = vor.u32 %v463, %v466
        %v468 = vrot.slane %v467, 4
        %v470 = vshll.u32 %v372, 16
        %v472 = vrot.slane %v470, 5
        %v473 = vsel %vm435, %v468, %v472
        %v474 = vshrl.u32 %v372, 16
        %v476 = vrot.slane %v474, 4
        %v477 = vor.u32 %v476, %v472
        %v478 = vrot.slane %v477, 4
        %v480 = vshll.u32 %v418, 16
        %v482 = vrot.slane %v480, 5
        %v483 = vsel %vm435, %v478, %v482
        %v485 = vshrl.u32 %v373, 16
        %v487 = vrot.slane %v485, 4
        %v488 = vshll.u32 %v373, 16
        %v490 = vrot.slane %v488, 5
        %v491 = vor.u32 %v487, %v490
        %v492 = vrot.slane %v491, 4
        %v494 = vshll.u32 %v374, 16
        %v496 = vrot.slane %v494, 5
        %v497 = vsel %vm435, %v492, %v496
        %v498 = vshrl.u32 %v374, 16
        %v500 = vrot.slane %v498, 4
        %v501 = vor.u32 %v500, %v496
        %v502 = vrot.slane %v501, 4
        %v504 = vshll.u32 %v419, 16
        %v506 = vrot.slane %v504, 5
        %v507 = vsel %vm435, %v502, %v506
        %v509 = vshrl.u32 %v375, 16
        %v511 = vrot.slane %v509, 4
        %v512 = vshll.u32 %v375, 16
        %v514 = vrot.slane %v512, 5
        %v515 = vor.u32 %v511, %v514
        %v516 = vrot.slane %v515, 4
        %v518 = vshll.u32 %v376, 16
        %v520 = vrot.slane %v518, 5
        %v521 = vsel %vm435, %v516, %v520
        %v522 = vshrl.u32 %v376, 16
        %v524 = vrot.slane %v522, 4
        %v525 = vor.u32 %v524, %v520
        %v526 = vrot.slane %v525, 4
        %v528 = vshll.u32 %v420, 16
        %v530 = vrot.slane %v528, 5
        %v531 = vsel %vm435, %v526, %v530
        %v533 = vshrl.u32 %v377, 16
        %v535 = vrot.slane %v533, 4
        %v536 = vshll.u32 %v377, 16
        %v538 = vrot.slane %v536, 5
        %v539 = vor.u32 %v535, %v538
        %v540 = vrot.slane %v539, 4
        %v542 = vshll.u32 %v378, 16
        %v544 = vrot.slane %v542, 5
        %v545 = vsel %vm435, %v540, %v544
        %v546 = vshrl.u32 %v378, 16
        %v548 = vrot.slane %v546, 4
        %v549 = vor.u32 %v548, %v544
        %v550 = vrot.slane %v549, 4
        %v552 = vshll.u32 %v421, 16
        %v554 = vrot.slane %v552, 5
        %v555 = vsel %vm435, %v550, %v554
        %v557 = vshrl.u32 %v379, 16
        %v559 = vrot.slane %v557, 4
        %v560 = vshll.u32 %v379, 16
        %v562 = vrot.slane %v560, 5
        %v563 = vor.u32 %v559, %v562
        %v564 = vrot.slane %v563, 4
        %v566 = vshll.u32 %v380, 16
        %v568 = vrot.slane %v566, 5
        %v569 = vsel %vm435, %v564, %v568
        %v570 = vshrl.u32 %v380, 16
        %v572 = vrot.slane %v570, 4
        %v573 = vor.u32 %v572, %v568
        %v574 = vrot.slane %v573, 4
        %v576 = vshll.u32 %v422, 16
        %v578 = vrot.slane %v576, 5
        %v579 = vsel %vm435, %v574, %v578
        %v581 = vshrl.u32 %v381, 16
        %v583 = vrot.slane %v581, 4
        %v584 = vshll.u32 %v381, 16
        %v586 = vrot.slane %v584, 5
        %v587 = vor.u32 %v583, %v586
        %v588 = vrot.slane %v587, 4
        %v590 = vshll.u32 %v382, 16
        %v592 = vrot.slane %v590, 5
        %v593 = vsel %vm435, %v588, %v592
        %v594 = vshrl.u32 %v382, 16
        %v596 = vrot.slane %v594, 4
        %v597 = vor.u32 %v596, %v592
        %v598 = vrot.slane %v597, 4
        %v600 = vshll.u32 %v423, 16
        %v602 = vrot.slane %v600, 5
        %v603 = vsel %vm435, %v598, %v602
        %v605 = vshrl.u32 %v383, 16
        %v607 = vrot.slane %v605, 4
        %v608 = vshll.u32 %v383, 16
        %v610 = vrot.slane %v608, 5
        %v611 = vor.u32 %v607, %v610
        %v612 = vrot.slane %v611, 4
        %v614 = vshll.u32 %v384, 16
        %v616 = vrot.slane %v614, 5
        %v617 = vsel %vm435, %v612, %v616
        %v618 = vshrl.u32 %v384, 16
        %v620 = vrot.slane %v618, 4
        %v621 = vor.u32 %v620, %v616
        %v622 = vrot.slane %v621, 4
        %v624 = vshll.u32 %v424, 16
        %v626 = vrot.slane %v624, 5
        %v627 = vsel %vm435, %v622, %v626
        %v629 = vshrl.u32 %v385, 16
        %v631 = vrot.slane %v629, 4
        %v632 = vshll.u32 %v385, 16
        %v634 = vrot.slane %v632, 5
        %v635 = vor.u32 %v631, %v634
        %v636 = vrot.slane %v635, 4
        %v638 = vshll.u32 %v386, 16
        %v640 = vrot.slane %v638, 5
        %v641 = vsel %vm435, %v636, %v640
        %v642 = vshrl.u32 %v386, 16
        %v644 = vrot.slane %v642, 4
        %v645 = vor.u32 %v644, %v640
        %v646 = vrot.slane %v645, 4
        %v648 = vshll.u32 %v425, 16
        %v650 = vrot.slane %v648, 5
        %v651 = vsel %vm435, %v646, %v650
        %v653 = vshrl.u32 %v387, 16
        %v655 = vrot.slane %v653, 4
        %v656 = vshll.u32 %v387, 16
        %v658 = vrot.slane %v656, 5
        %v659 = vor.u32 %v655, %v658
        %v660 = vrot.slane %v659, 4
        %v662 = vshll.u32 %v388, 16
        %v664 = vrot.slane %v662, 5
        %v665 = vsel %vm435, %v660, %v664
        %v666 = vshrl.u32 %v388, 16
        %v668 = vrot.slane %v666, 4
        %v669 = vor.u32 %v668, %v664
        %v670 = vrot.slane %v669, 4
        %v672 = vshll.u32 %v426, 16
        %v674 = vrot.slane %v672, 5
        %v675 = vsel %vm435, %v670, %v674
        %v677 = vshrl.u32 %v389, 16
        %v679 = vrot.slane %v677, 4
        %v680 = vshll.u32 %v389, 16
        %v682 = vrot.slane %v680, 5
        %v683 = vor.u32 %v679, %v682
        %v684 = vrot.slane %v683, 4
        %v686 = vshll.u32 %v390, 16
        %v688 = vrot.slane %v686, 5
        %v689 = vsel %vm435, %v684, %v688
        %v690 = vshrl.u32 %v390, 16
        %v692 = vrot.slane %v690, 4
        %v693 = vor.u32 %v692, %v688
        %v694 = vrot.slane %v693, 4
        %v696 = vshll.u32 %v427, 16
        %v698 = vrot.slane %v696, 5
        %v699 = vsel %vm435, %v694, %v698
        %v701 = vshrl.u32 %v391, 16
        %v703 = vrot.slane %v701, 4
        %v704 = vshll.u32 %v391, 16
        %v706 = vrot.slane %v704, 5
        %v707 = vor.u32 %v703, %v706
        %v708 = vrot.slane %v707, 4
        %v710 = vshll.u32 %v392, 16
        %v712 = vrot.slane %v710, 5
        %v713 = vsel %vm435, %v708, %v712
        %v714 = vshrl.u32 %v392, 16
        %v716 = vrot.slane %v714, 4
        %v717 = vor.u32 %v716, %v712
        %v718 = vrot.slane %v717, 4
        %v720 = vshll.u32 %v428, 16
        %v722 = vrot.slane %v720, 5
        %v723 = vsel %vm435, %v718, %v722
        %v725 = vshrl.u32 %v393, 16
        %v727 = vrot.slane %v725, 4
        %v728 = vshll.u32 %v393, 16
        %v730 = vrot.slane %v728, 5
        %v731 = vor.u32 %v727, %v730
        %v732 = vrot.slane %v731, 4
        %v734 = vshll.u32 %v394, 16
        %v736 = vrot.slane %v734, 5
        %v737 = vsel %vm435, %v732, %v736
        %v738 = vshrl.u32 %v394, 16
        %v740 = vrot.slane %v738, 4
        %v741 = vor.u32 %v740, %v736
        %v742 = vrot.slane %v741, 4
        %v744 = vshll.u32 %v429, 16
        %v746 = vrot.slane %v744, 5
        %v747 = vsel %vm435, %v742, %v746
        %v749 = vshrl.u32 %v395, 16
        %v751 = vrot.slane %v749, 4
        %v752 = vshll.u32 %v395, 16
        %v754 = vrot.slane %v752, 5
        %v755 = vor.u32 %v751, %v754
        %v756 = vrot.slane %v755, 4
        %v758 = vshll.u32 %v396, 16
        %v760 = vrot.slane %v758, 5
        %v761 = vsel %vm435, %v756, %v760
        %v762 = vshrl.u32 %v396, 16
        %v764 = vrot.slane %v762, 4
        %v765 = vor.u32 %v764, %v760
        %v766 = vrot.slane %v765, 4
        %v768 = vshll.u32 %v430, 16
        %v770 = vrot.slane %v768, 5
        %v771 = vsel %vm435, %v766, %v770
        %v773 = vshrl.u32 %v397, 16
        %v775 = vrot.slane %v773, 4
        %v776 = vshll.u32 %v397, 16
        %v778 = vrot.slane %v776, 5
        %v779 = vor.u32 %v775, %v778
        %v780 = vrot.slane %v779, 4
        %v782 = vshll.u32 %v398, 16
        %v784 = vrot.slane %v782, 5
        %v785 = vsel %vm435, %v780, %v784
        %v786 = vshrl.u32 %v398, 16
        %v788 = vrot.slane %v786, 4
        %v789 = vor.u32 %v788, %v784
        %v790 = vrot.slane %v789, 4
        %v792 = vshll.u32 %v431, 16
        %v794 = vrot.slane %v792, 5
        %v795 = vsel %vm435, %v790, %v794
        %v797 = vshrl.u32 %v399, 16
        %v799 = vrot.slane %v797, 4
        %v800 = vshll.u32 %v399, 16
        %v802 = vrot.slane %v800, 5
        %v803 = vor.u32 %v799, %v802
        %v804 = vrot.slane %v803, 4
        %v806 = vshll.u32 %v400, 16
        %v808 = vrot.slane %v806, 5
        %v809 = vsel %vm435, %v804, %v808
        %v810 = vshrl.u32 %v400, 16
        %v812 = vrot.slane %v810, 4
        %v813 = vor.u32 %v812, %v808
        %v814 = vrot.slane %v813, 4
        %v816 = vshll.u32 %v432, 16
        %v818 = vrot.slane %v816, 5
        %v819 = vsel %vm435, %v814, %v818
        %v820 = vld [vmem:[#allocation4 + $0x40] sm:$0xf]
        %v821 = vld [vmem:[#allocation4 + $0x44] sm:$0xf]
        %v822 = vld [vmem:[#allocation4 + $0x48] sm:$0xf]
        %v823 = vld [vmem:[#allocation4 + $0x4c] sm:$0xf]
        %v824 = vld [vmem:[#allocation4 + $0x50] sm:$0xf]
        %v825 = vld [vmem:[#allocation4 + $0x54] sm:$0xf]
        %v826 = vld [vmem:[#allocation4 + $0x58] sm:$0xf]
        %v827 = vld [vmem:[#allocation4 + $0x5c] sm:$0xf]
        %v828 = vld [vmem:[#allocation4 + $0x60] sm:$0xf]
        %v829 = vld [vmem:[#allocation4 + $0x64] sm:$0xf]
        %v830 = vld [vmem:[#allocation4 + $0x68] sm:$0xf]
        %v831 = vld [vmem:[#allocation4 + $0x6c] sm:$0xf]
        %v832 = vld [vmem:[#allocation4 + $0x70] sm:$0xf]
        %v833 = vld [vmem:[#allocation4 + $0x74] sm:$0xf]
        %v834 = vld [vmem:[#allocation4 + $0x78] sm:$0xf]
        %v835 = vld [vmem:[#allocation4 + $0x7c] sm:$0xf]
        %v836 = vunpack.c.l.b16 %v449
        %v837 = vunpack.c.l.b16 %v459
        %v838 = vunpack.c.l.b16 %v473
        %v839 = vunpack.c.l.b16 %v483
        %v840 = vunpack.c.l.b16 %v497
        %v841 = vunpack.c.l.b16 %v507
        %v842 = vunpack.c.l.b16 %v521
        %v843 = vunpack.c.l.b16 %v531
        %v844 = vunpack.c.l.b16 %v545
        %v845 = vunpack.c.l.b16 %v555
        %v846 = vunpack.c.l.b16 %v569
        %v847 = vunpack.c.l.b16 %v579
        %v848 = vunpack.c.l.b16 %v593
        %v849 = vunpack.c.l.b16 %v603
        %v850 = vunpack.c.l.b16 %v617
        %v851 = vunpack.c.l.b16 %v627
        %v852 = vunpack.c.l.b16 %v641
        %v853 = vunpack.c.l.b16 %v651
        %v854 = vunpack.c.l.b16 %v665
        %v855 = vunpack.c.l.b16 %v675
        %v856 = vunpack.c.l.b16 %v689
        %v857 = vunpack.c.l.b16 %v699
        %v858 = vunpack.c.l.b16 %v713
        %v859 = vunpack.c.l.b16 %v723
        %v860 = vunpack.c.l.b16 %v737
        %v861 = vunpack.c.l.b16 %v747
        %v862 = vunpack.c.l.b16 %v761
        %v863 = vunpack.c.l.b16 %v771
        %v864 = vunpack.c.l.b16 %v785
        %v865 = vunpack.c.l.b16 %v795
        %v866 = vunpack.c.l.b16 %v809
        %v867 = vunpack.c.l.b16 %v819
        %v868 = vpack.c.b16 %v837, %v836
        %v869 = vpack.c.b16 %v839, %v838
        %v870 = vpack.c.b16 %v841, %v840
        %v871 = vpack.c.b16 %v843, %v842
        %v872 = vpack.c.b16 %v845, %v844
        %v873 = vpack.c.b16 %v847, %v846
        %v874 = vpack.c.b16 %v849, %v848
        %v875 = vpack.c.b16 %v851, %v850
        %v876 = vpack.c.b16 %v853, %v852
        %v877 = vpack.c.b16 %v855, %v854
        %v878 = vpack.c.b16 %v857, %v856
        %v879 = vpack.c.b16 %v859, %v858
        %v880 = vpack.c.b16 %v861, %v860
        %v881 = vpack.c.b16 %v863, %v862
        %v882 = vpack.c.b16 %v865, %v864
        %v883 = vpack.c.b16 %v867, %v866
        %v916 = vunpack.c.l.b16 %v820
        %v917 = vunpack.c.l.b16 %v821
        %v918 = vunpack.c.l.b16 %v822
        %v919 = vunpack.c.l.b16 %v823
        %v920 = vunpack.c.l.b16 %v824
        %v921 = vunpack.c.l.b16 %v825
        %v922 = vunpack.c.l.b16 %v826
        %v923 = vunpack.c.l.b16 %v827
        %v924 = vunpack.c.l.b16 %v828
        %v925 = vunpack.c.l.b16 %v829
        %v926 = vunpack.c.l.b16 %v830
        %v927 = vunpack.c.l.b16 %v831
        %v928 = vunpack.c.l.b16 %v832
        %v929 = vunpack.c.l.b16 %v833
        %v930 = vunpack.c.l.b16 %v834
        %v931 = vunpack.c.l.b16 %v835
        %v932 = vpack.c.b16 %v917, %v916
        %v933 = vpack.c.b16 %v919, %v918
        %v934 = vpack.c.b16 %v921, %v920
        %v935 = vpack.c.b16 %v923, %v922
        %v936 = vpack.c.b16 %v925, %v924
        %v937 = vpack.c.b16 %v927, %v926
        %v938 = vpack.c.b16 %v929, %v928
        %v939 = vpack.c.b16 %v931, %v930
        %948 = vmatprep.subr.bf16.mxu0 0
        %949 = vmatpush1.bf16.msra.mxu0 %v939
        %950 = vmatprep.subr.bf16.mxu0 0
        %951 = vmatpush1.bf16.msra.mxu0 %v938
        %952 = vmatprep.subr.bf16.mxu0 0
        %953 = vmatpush1.bf16.msra.mxu0 %v937
        %954 = vmatprep.subr.bf16.mxu0 0
        %955 = vmatpush1.bf16.msra.mxu0 %v936
        %956 = vmatprep.subr.bf16.mxu0 0
        %957 = vmatpush1.bf16.msra.mxu0 %v935
        %958 = vmatprep.subr.bf16.mxu0 0
        %959 = vmatpush1.bf16.msra.mxu0 %v934
        %960 = vmatprep.subr.bf16.mxu0 0
        %961 = vmatpush1.bf16.msra.mxu0 %v933
        %962 = vmatprep.subr.bf16.mxu0 0
        %963 = vmatpush1.bf16.msra.mxu0 %v932
        %964 = vmatprep.subr.bf16.mxu0 0
        %965 = vmatpush2.bf16.msra.mxu0 0
        %966 = vmatprep.subr.bf16.mxu0 0
        %967 = vmatpush2.bf16.msra.mxu0 0
        %968 = vmatprep.subr.bf16.mxu0 0
        %969 = vmatpush2.bf16.msra.mxu0 0
        %970 = vmatprep.subr.bf16.mxu0 0
        %971 = vmatpush2.bf16.msra.mxu0 0
        %972 = vmatprep.subr.bf16.mxu0 0
        %973 = vmatpush2.bf16.msra.mxu0 0
        %974 = vmatprep.subr.bf16.mxu0 0
        %975 = vmatpush2.bf16.msra.mxu0 0
        %976 = vmatprep.subr.bf16.mxu0 0
        %977 = vmatpush2.bf16.msra.mxu0 0
        %978 = vmatprep.subr.bf16.mxu0 0
        %979 = vmatpush2.bf16.msra.mxu0 0
        %980 = vmatprep.mubr.bf16.mxu0 0
        %981 = vmatmul.mubr.bf16.gmra.mxu0 %v868
        %v982 = vpop.f32.mrf.mxu0
        %v983 = vadd.f32 0.0, %v982
        %v984 = vpop.f32.mrf.mxu0
        %v985 = vpop.f32.mrf.mxu0
        %v986 = vadd.f32 0.0, %v985
        %v987 = vpop.f32.mrf.mxu0
        %988 = vmatprep.mubr.bf16.mxu0 0
        %989 = vmatmul.mubr.bf16.gmra.mxu0 %v869
        %v990 = vpop.f32.mrf.mxu0
        %v991 = vadd.f32 0.0, %v990
        %v992 = vpop.f32.mrf.mxu0
        %v993 = vpop.f32.mrf.mxu0
        %v994 = vadd.f32 0.0, %v993
        %v995 = vpop.f32.mrf.mxu0
        %996 = vmatprep.mubr.bf16.mxu0 0
        %997 = vmatmul.mubr.bf16.gmra.mxu0 %v870
        %v998 = vpop.f32.mrf.mxu0
        %v999 = vadd.f32 0.0, %v998
        %v1000 = vpop.f32.mrf.mxu0
        %v1001 = vpop.f32.mrf.mxu0
        %v1002 = vadd.f32 0.0, %v1001
        %v1003 = vpop.f32.mrf.mxu0
        %1004 = vmatprep.mubr.bf16.mxu0 0
        %1005 = vmatmul.mubr.bf16.gmra.mxu0 %v871
        %v1006 = vpop.f32.mrf.mxu0
        %v1007 = vadd.f32 0.0, %v1006
        %v1008 = vpop.f32.mrf.mxu0
        %v1009 = vpop.f32.mrf.mxu0
        %v1010 = vadd.f32 0.0, %v1009
        %v1011 = vpop.f32.mrf.mxu0
        %1012 = vmatprep.mubr.bf16.mxu0 0
        %1013 = vmatmul.mubr.bf16.gmra.mxu0 %v872
        %v1014 = vpop.f32.mrf.mxu0
        %v1015 = vadd.f32 0.0, %v1014
        %v1016 = vpop.f32.mrf.mxu0
        %v1017 = vpop.f32.mrf.mxu0
        %v1018 = vadd.f32 0.0, %v1017
        %v1019 = vpop.f32.mrf.mxu0
        %1020 = vmatprep.mubr.bf16.mxu0 0
        %1021 = vmatmul.mubr.bf16.gmra.mxu0 %v873
        %v1022 = vpop.f32.mrf.mxu0
        %v1023 = vadd.f32 0.0, %v1022
        %v1024 = vpop.f32.mrf.mxu0
        %v1025 = vpop.f32.mrf.mxu0
        %v1026 = vadd.f32 0.0, %v1025
        %v1027 = vpop.f32.mrf.mxu0
        %1028 = vmatprep.mubr.bf16.mxu0 0
        %1029 = vmatmul.mubr.bf16.gmra.mxu0 %v874
        %v1030 = vpop.f32.mrf.mxu0
        %v1031 = vadd.f32 0.0, %v1030
        %v1032 = vpop.f32.mrf.mxu0
        %v1033 = vpop.f32.mrf.mxu0
        %v1034 = vadd.f32 0.0, %v1033
        %v1035 = vpop.f32.mrf.mxu0
        %1036 = vmatprep.mubr.bf16.mxu0 0
        %1037 = vmatmul.mubr.bf16.gmra.mxu0 %v875
        %v1038 = vpop.f32.mrf.mxu0
        %v1039 = vadd.f32 0.0, %v1038
        %v1040 = vpop.f32.mrf.mxu0
        %v1041 = vpop.f32.mrf.mxu0
        %v1042 = vadd.f32 0.0, %v1041
        %v1043 = vpop.f32.mrf.mxu0
        %1044 = vmatprep.mubr.bf16.mxu0 0
        %1045 = vmatmul.mubr.bf16.gmra.mxu0 %v876
        %v1046 = vpop.f32.mrf.mxu0
        %v1047 = vadd.f32 0.0, %v1046
        %v1048 = vpop.f32.mrf.mxu0
        %v1049 = vpop.f32.mrf.mxu0
        %v1050 = vadd.f32 0.0, %v1049
        %v1051 = vpop.f32.mrf.mxu0
        %1052 = vmatprep.mubr.bf16.mxu0 0
        %1053 = vmatmul.mubr.bf16.gmra.mxu0 %v877
        %v1054 = vpop.f32.mrf.mxu0
        %v1055 = vadd.f32 0.0, %v1054
        %v1056 = vpop.f32.mrf.mxu0
        %v1057 = vpop.f32.mrf.mxu0
        %v1058 = vadd.f32 0.0, %v1057
        %v1059 = vpop.f32.mrf.mxu0
        %1060 = vmatprep.mubr.bf16.mxu0 0
        %1061 = vmatmul.mubr.bf16.gmra.mxu0 %v878
        %v1062 = vpop.f32.mrf.mxu0
        %v1063 = vadd.f32 0.0, %v1062
        %v1064 = vpop.f32.mrf.mxu0
        %v1065 = vpop.f32.mrf.mxu0
        %v1066 = vadd.f32 0.0, %v1065
        %v1067 = vpop.f32.mrf.mxu0
        %1068 = vmatprep.mubr.bf16.mxu0 0
        %1069 = vmatmul.mubr.bf16.gmra.mxu0 %v879
        %v1070 = vpop.f32.mrf.mxu0
        %v1071 = vadd.f32 0.0, %v1070
        %v1072 = vpop.f32.mrf.mxu0
        %v1073 = vpop.f32.mrf.mxu0
        %v1074 = vadd.f32 0.0, %v1073
        %v1075 = vpop.f32.mrf.mxu0
        %1076 = vmatprep.mubr.bf16.mxu0 0
        %1077 = vmatmul.mubr.bf16.gmra.mxu0 %v880
        %v1078 = vpop.f32.mrf.mxu0
        %v1079 = vadd.f32 0.0, %v1078
        %v1080 = vpop.f32.mrf.mxu0
        %v1081 = vpop.f32.mrf.mxu0
        %v1082 = vadd.f32 0.0, %v1081
        %v1083 = vpop.f32.mrf.mxu0
        %1084 = vmatprep.mubr.bf16.mxu0 0
        %1085 = vmatmul.mubr.bf16.gmra.mxu0 %v881
        %v1086 = vpop.f32.mrf.mxu0
        %v1087 = vadd.f32 0.0, %v1086
        %v1088 = vpop.f32.mrf.mxu0
        %v1089 = vpop.f32.mrf.mxu0
        %v1090 = vadd.f32 0.0, %v1089
        %v1091 = vpop.f32.mrf.mxu0
        %1092 = vmatprep.mubr.bf16.mxu0 0
        %1093 = vmatmul.mubr.bf16.gmra.mxu0 %v882
        %v1094 = vpop.f32.mrf.mxu0
        %v1095 = vadd.f32 0.0, %v1094
        %v1096 = vpop.f32.mrf.mxu0
        %v1097 = vpop.f32.mrf.mxu0
        %v1098 = vadd.f32 0.0, %v1097
        %v1099 = vpop.f32.mrf.mxu0
        %1100 = vmatprep.mubr.bf16.mxu0 0
        %1101 = vmatmul.mubr.bf16.gmra.mxu0 %v883
        %v1102 = vpop.f32.mrf.mxu0
        %v1103 = vadd.f32 0.0, %v1102
        %v1104 = vpop.f32.mrf.mxu0
        %v1105 = vpop.f32.mrf.mxu0
        %v1106 = vadd.f32 0.0, %v1105
        %v1107 = vpop.f32.mrf.mxu0
        %1108 = vdwg.mxu0
        %v1141 = vunpack.c.l.b16 %v369
        %v1142 = vunpack.c.l.b16 %v370
        %v1143 = vunpack.c.l.b16 %v371
        %v1144 = vunpack.c.l.b16 %v372
        %v1145 = vunpack.c.l.b16 %v373
        %v1146 = vunpack.c.l.b16 %v374
        %v1147 = vunpack.c.l.b16 %v375
        %v1148 = vunpack.c.l.b16 %v376
        %v1149 = vunpack.c.l.b16 %v377
        %v1150 = vunpack.c.l.b16 %v378
        %v1151 = vunpack.c.l.b16 %v379
        %v1152 = vunpack.c.l.b16 %v380
        %v1153 = vunpack.c.l.b16 %v381
        %v1154 = vunpack.c.l.b16 %v382
        %v1155 = vunpack.c.l.b16 %v383
        %v1156 = vunpack.c.l.b16 %v384
        %v1157 = vunpack.c.l.b16 %v385
        %v1158 = vunpack.c.l.b16 %v386
        %v1159 = vunpack.c.l.b16 %v387
        %v1160 = vunpack.c.l.b16 %v388
        %v1161 = vunpack.c.l.b16 %v389
        %v1162 = vunpack.c.l.b16 %v390
        %v1163 = vunpack.c.l.b16 %v391
        %v1164 = vunpack.c.l.b16 %v392
        %v1165 = vunpack.c.l.b16 %v393
        %v1166 = vunpack.c.l.b16 %v394
        %v1167 = vunpack.c.l.b16 %v395
        %v1168 = vunpack.c.l.b16 %v396
        %v1169 = vunpack.c.l.b16 %v397
        %v1170 = vunpack.c.l.b16 %v398
        %v1171 = vunpack.c.l.b16 %v399
        %v1172 = vunpack.c.l.b16 %v400
        %v1173 = vpack.c.b16 %v1142, %v1141
        %v1174 = vpack.c.b16 %v1144, %v1143
        %v1175 = vpack.c.b16 %v1146, %v1145
        %v1176 = vpack.c.b16 %v1148, %v1147
        %v1177 = vpack.c.b16 %v1150, %v1149
        %v1178 = vpack.c.b16 %v1152, %v1151
        %v1179 = vpack.c.b16 %v1154, %v1153
        %v1180 = vpack.c.b16 %v1156, %v1155
        %v1181 = vpack.c.b16 %v1158, %v1157
        %v1182 = vpack.c.b16 %v1160, %v1159
        %v1183 = vpack.c.b16 %v1162, %v1161
        %v1184 = vpack.c.b16 %v1164, %v1163
        %v1185 = vpack.c.b16 %v1166, %v1165
        %v1186 = vpack.c.b16 %v1168, %v1167
        %v1187 = vpack.c.b16 %v1170, %v1169
        %v1188 = vpack.c.b16 %v1172, %v1171
        %v1221 = vunpack.c.l.b16 %v401
        %v1222 = vunpack.c.l.b16 %v402
        %v1223 = vunpack.c.l.b16 %v403
        %v1224 = vunpack.c.l.b16 %v404
        %v1225 = vunpack.c.l.b16 %v405
        %v1226 = vunpack.c.l.b16 %v406
        %v1227 = vunpack.c.l.b16 %v407
        %v1228 = vunpack.c.l.b16 %v408
        %v1229 = vunpack.c.l.b16 %v409
        %v1230 = vunpack.c.l.b16 %v410
        %v1231 = vunpack.c.l.b16 %v411
        %v1232 = vunpack.c.l.b16 %v412
        %v1233 = vunpack.c.l.b16 %v413
        %v1234 = vunpack.c.l.b16 %v414
        %v1235 = vunpack.c.l.b16 %v415
        %v1236 = vunpack.c.l.b16 %v416
        %v1237 = vpack.c.b16 %v1222, %v1221
        %v1238 = vpack.c.b16 %v1224, %v1223
        %v1239 = vpack.c.b16 %v1226, %v1225
        %v1240 = vpack.c.b16 %v1228, %v1227
        %v1241 = vpack.c.b16 %v1230, %v1229
        %v1242 = vpack.c.b16 %v1232, %v1231
        %v1243 = vpack.c.b16 %v1234, %v1233
        %v1244 = vpack.c.b16 %v1236, %v1235
        %1253 = vmatprep.subr.bf16.mxu0 0
        %1254 = vmatpush1.bf16.msra.mxu0 %v1244
        %1255 = vmatprep.subr.bf16.mxu0 0
        %1256 = vmatpush1.bf16.msra.mxu0 %v1243
        %1257 = vmatprep.subr.bf16.mxu0 0
        %1258 = vmatpush1.bf16.msra.mxu0 %v1242
        %1259 = vmatprep.subr.bf16.mxu0 0
        %1260 = vmatpush1.bf16.msra.mxu0 %v1241
        %1261 = vmatprep.subr.bf16.mxu0 0
        %1262 = vmatpush1.bf16.msra.mxu0 %v1240
        %1263 = vmatprep.subr.bf16.mxu0 0
        %1264 = vmatpush1.bf16.msra.mxu0 %v1239
        %1265 = vmatprep.subr.bf16.mxu0 0
        %1266 = vmatpush1.bf16.msra.mxu0 %v1238
        %1267 = vmatprep.subr.bf16.mxu0 0
        %1268 = vmatpush1.bf16.msra.mxu0 %v1237
        %1269 = vmatprep.subr.bf16.mxu0 0
        %1270 = vmatpush2.bf16.msra.mxu0 0
        %1271 = vmatprep.subr.bf16.mxu0 0
        %1272 = vmatpush2.bf16.msra.mxu0 0
        %1273 = vmatprep.subr.bf16.mxu0 0
        %1274 = vmatpush2.bf16.msra.mxu0 0
        %1275 = vmatprep.subr.bf16.mxu0 0
        %1276 = vmatpush2.bf16.msra.mxu0 0
        %1277 = vmatprep.subr.bf16.mxu0 0
        %1278 = vmatpush2.bf16.msra.mxu0 0
        %1279 = vmatprep.subr.bf16.mxu0 0
        %1280 = vmatpush2.bf16.msra.mxu0 0
        %1281 = vmatprep.subr.bf16.mxu0 0
        %1282 = vmatpush2.bf16.msra.mxu0 0
        %1283 = vmatprep.subr.bf16.mxu0 0
        %1284 = vmatpush2.bf16.msra.mxu0 0
        %1285 = vmatprep.mubr.bf16.mxu0 0
        %1286 = vmatmul.mubr.bf16.gmra.mxu0 %v1173
        %v1287 = vpop.f32.mrf.mxu0
        %v1288 = vadd.f32 %v983, %v1287
        %v1289 = vpop.f32.mrf.mxu0
        %v1290 = vpop.f32.mrf.mxu0
        %v1291 = vadd.f32 %v986, %v1290
        %v1292 = vpop.f32.mrf.mxu0
        %1293 = vmatprep.mubr.bf16.mxu0 0
        %1294 = vmatmul.mubr.bf16.gmra.mxu0 %v1174
        %v1295 = vpop.f32.mrf.mxu0
        %v1296 = vadd.f32 %v991, %v1295
        %v1297 = vpop.f32.mrf.mxu0
        %v1298 = vpop.f32.mrf.mxu0
        %v1299 = vadd.f32 %v994, %v1298
        %v1300 = vpop.f32.mrf.mxu0
        %1301 = vmatprep.mubr.bf16.mxu0 0
        %1302 = vmatmul.mubr.bf16.gmra.mxu0 %v1175
        %v1303 = vpop.f32.mrf.mxu0
        %v1304 = vadd.f32 %v999, %v1303
        %v1305 = vpop.f32.mrf.mxu0
        %v1306 = vpop.f32.mrf.mxu0
        %v1307 = vadd.f32 %v1002, %v1306
        %v1308 = vpop.f32.mrf.mxu0
        %1309 = vmatprep.mubr.bf16.mxu0 0
        %1310 = vmatmul.mubr.bf16.gmra.mxu0 %v1176
        %v1311 = vpop.f32.mrf.mxu0
        %v1312 = vadd.f32 %v1007, %v1311
        %v1313 = vpop.f32.mrf.mxu0
        %v1314 = vpop.f32.mrf.mxu0
        %v1315 = vadd.f32 %v1010, %v1314
        %v1316 = vpop.f32.mrf.mxu0
        %1317 = vmatprep.mubr.bf16.mxu0 0
        %1318 = vmatmul.mubr.bf16.gmra.mxu0 %v1177
        %v1319 = vpop.f32.mrf.mxu0
        %v1320 = vadd.f32 %v1015, %v1319
        %v1321 = vpop.f32.mrf.mxu0
        %v1322 = vpop.f32.mrf.mxu0
        %v1323 = vadd.f32 %v1018, %v1322
        %v1324 = vpop.f32.mrf.mxu0
        %1325 = vmatprep.mubr.bf16.mxu0 0
        %1326 = vmatmul.mubr.bf16.gmra.mxu0 %v1178
        %v1327 = vpop.f32.mrf.mxu0
        %v1328 = vadd.f32 %v1023, %v1327
        %v1329 = vpop.f32.mrf.mxu0
        %v1330 = vpop.f32.mrf.mxu0
        %v1331 = vadd.f32 %v1026, %v1330
        %v1332 = vpop.f32.mrf.mxu0
        %1333 = vmatprep.mubr.bf16.mxu0 0
        %1334 = vmatmul.mubr.bf16.gmra.mxu0 %v1179
        %v1335 = vpop.f32.mrf.mxu0
        %v1336 = vadd.f32 %v1031, %v1335
        %v1337 = vpop.f32.mrf.mxu0
        %v1338 = vpop.f32.mrf.mxu0
        %v1339 = vadd.f32 %v1034, %v1338
        %v1340 = vpop.f32.mrf.mxu0
        %1341 = vmatprep.mubr.bf16.mxu0 0
        %1342 = vmatmul.mubr.bf16.gmra.mxu0 %v1180
        %v1343 = vpop.f32.mrf.mxu0
        %v1344 = vadd.f32 %v1039, %v1343
        %v1345 = vpop.f32.mrf.mxu0
        %v1346 = vpop.f32.mrf.mxu0
        %v1347 = vadd.f32 %v1042, %v1346
        %v1348 = vpop.f32.mrf.mxu0
        %1349 = vmatprep.mubr.bf16.mxu0 0
        %1350 = vmatmul.mubr.bf16.gmra.mxu0 %v1181
        %v1351 = vpop.f32.mrf.mxu0
        %v1352 = vadd.f32 %v1047, %v1351
        %v1353 = vpop.f32.mrf.mxu0
        %v1354 = vpop.f32.mrf.mxu0
        %v1355 = vadd.f32 %v1050, %v1354
        %v1356 = vpop.f32.mrf.mxu0
        %1357 = vmatprep.mubr.bf16.mxu0 0
        %1358 = vmatmul.mubr.bf16.gmra.mxu0 %v1182
        %v1359 = vpop.f32.mrf.mxu0
        %v1360 = vadd.f32 %v1055, %v1359
        %v1361 = vpop.f32.mrf.mxu0
        %v1362 = vpop.f32.mrf.mxu0
        %v1363 = vadd.f32 %v1058, %v1362
        %v1364 = vpop.f32.mrf.mxu0
        %1365 = vmatprep.mubr.bf16.mxu0 0
        %1366 = vmatmul.mubr.bf16.gmra.mxu0 %v1183
        %v1367 = vpop.f32.mrf.mxu0
        %v1368 = vadd.f32 %v1063, %v1367
        %v1369 = vpop.f32.mrf.mxu0
        %v1370 = vpop.f32.mrf.mxu0
        %v1371 = vadd.f32 %v1066, %v1370
        %v1372 = vpop.f32.mrf.mxu0
        %1373 = vmatprep.mubr.bf16.mxu0 0
        %1374 = vmatmul.mubr.bf16.gmra.mxu0 %v1184
        %v1375 = vpop.f32.mrf.mxu0
        %v1376 = vadd.f32 %v1071, %v1375
        %v1377 = vpop.f32.mrf.mxu0
        %v1378 = vpop.f32.mrf.mxu0
        %v1379 = vadd.f32 %v1074, %v1378
        %v1380 = vpop.f32.mrf.mxu0
        %1381 = vmatprep.mubr.bf16.mxu0 0
        %1382 = vmatmul.mubr.bf16.gmra.mxu0 %v1185
        %v1383 = vpop.f32.mrf.mxu0
        %v1384 = vadd.f32 %v1079, %v1383
        %v1385 = vpop.f32.mrf.mxu0
        %v1386 = vpop.f32.mrf.mxu0
        %v1387 = vadd.f32 %v1082, %v1386
        %v1388 = vpop.f32.mrf.mxu0
        %1389 = vmatprep.mubr.bf16.mxu0 0
        %1390 = vmatmul.mubr.bf16.gmra.mxu0 %v1186
        %v1391 = vpop.f32.mrf.mxu0
        %v1392 = vadd.f32 %v1087, %v1391
        %v1393 = vpop.f32.mrf.mxu0
        %v1394 = vpop.f32.mrf.mxu0
        %v1395 = vadd.f32 %v1090, %v1394
        %v1396 = vpop.f32.mrf.mxu0
        %1397 = vmatprep.mubr.bf16.mxu0 0
        %1398 = vmatmul.mubr.bf16.gmra.mxu0 %v1187
        %v1399 = vpop.f32.mrf.mxu0
        %v1400 = vadd.f32 %v1095, %v1399
        %v1401 = vpop.f32.mrf.mxu0
        %v1402 = vpop.f32.mrf.mxu0
        %v1403 = vadd.f32 %v1098, %v1402
        %v1404 = vpop.f32.mrf.mxu0
        %1405 = vmatprep.mubr.bf16.mxu0 0
        %1406 = vmatmul.mubr.bf16.gmra.mxu0 %v1188
        %v1407 = vpop.f32.mrf.mxu0
        %v1408 = vadd.f32 %v1103, %v1407
        %v1409 = vpop.f32.mrf.mxu0
        %v1410 = vpop.f32.mrf.mxu0
        %v1411 = vadd.f32 %v1106, %v1410
        %v1412 = vpop.f32.mrf.mxu0
        %1413 = vdwg.mxu0
        %v1414 = vld [vmem:[%s368] sm:$0xe]
        %v1415 = vld [vmem:[%s368 + $0xc] sm:$0xe]
        %v1416 = vld [vmem:[%s368 + $0x18] sm:$0xe]
        %v1417 = vld [vmem:[%s368 + $0x24] sm:$0xe]
        %v1418 = vld [vmem:[%s368 + $0x30] sm:$0xe]
        %v1419 = vld [vmem:[%s368 + $0x3c] sm:$0xe]
        %v1420 = vld [vmem:[%s368 + $0x48] sm:$0xe]
        %v1421 = vld [vmem:[%s368 + $0x54] sm:$0xe]
        %v1422 = vld [vmem:[%s368 + $0x60] sm:$0xe]
        %v1423 = vld [vmem:[%s368 + $0x6c] sm:$0xe]
        %v1424 = vld [vmem:[%s368 + $0x78] sm:$0xe]
        %v1425 = vld [vmem:[%s368 + $0x84] sm:$0xe]
        %v1426 = vld [vmem:[%s368 + $0x90] sm:$0xe]
        %v1427 = vld [vmem:[%s368 + $0x9c] sm:$0xe]
        %v1428 = vld [vmem:[%s368 + $0xa8] sm:$0xe]
        %v1429 = vld [vmem:[%s368 + $0xb4] sm:$0xe]
        %vm1462 = vcmask 1042432
        %vm1463 = vcmask 1046532
        %vm1464 = vmor %vm1462, %vm1463
        %v1465 = vrot.slane %v1414, 5
        %v1466 = vrot.slane %v1465, 4
        %v1467 = vrot.slane %v370, 5
        %v1468 = vsel %vm1464, %v1466, %v1467
        %v1469 = vrot.slane %v1467, 4
        %v1470 = vrot.slane %v417, 5
        %v1471 = vsel %vm1464, %v1469, %v1470
        %v1472 = vrot.slane %v1415, 5
        %v1473 = vrot.slane %v1472, 4
        %v1474 = vrot.slane %v372, 5
        %v1475 = vsel %vm1464, %v1473, %v1474
        %v1476 = vrot.slane %v1474, 4
        %v1477 = vrot.slane %v418, 5
        %v1478 = vsel %vm1464, %v1476, %v1477
        %v1479 = vrot.slane %v1416, 5
        %v1480 = vrot.slane %v1479, 4
        %v1481 = vrot.slane %v374, 5
        %v1482 = vsel %vm1464, %v1480, %v1481
        %v1483 = vrot.slane %v1481, 4
        %v1484 = vrot.slane %v419, 5
        %v1485 = vsel %vm1464, %v1483, %v1484
        %v1486 = vrot.slane %v1417, 5
        %v1487 = vrot.slane %v1486, 4
        %v1488 = vrot.slane %v376, 5
        %v1489 = vsel %vm1464, %v1487, %v1488
        %v1490 = vrot.slane %v1488, 4
        %v1491 = vrot.slane %v420, 5
        %v1492 = vsel %vm1464, %v1490, %v1491
        %v1493 = vrot.slane %v1418, 5
        %v1494 = vrot.slane %v1493, 4
        %v1495 = vrot.slane %v378, 5
        %v1496 = vsel %vm1464, %v1494, %v1495
        %v1497 = vrot.slane %v1495, 4
        %v1498 = vrot.slane %v421, 5
        %v1499 = vsel %vm1464, %v1497, %v1498
        %v1500 = vrot.slane %v1419, 5
        %v1501 = vrot.slane %v1500, 4
        %v1502 = vrot.slane %v380, 5
        %v1503 = vsel %vm1464, %v1501, %v1502
        %v1504 = vrot.slane %v1502, 4
        %v1505 = vrot.slane %v422, 5
        %v1506 = vsel %vm1464, %v1504, %v1505
        %v1507 = vrot.slane %v1420, 5
        %v1508 = vrot.slane %v1507, 4
        %v1509 = vrot.slane %v382, 5
        %v1510 = vsel %vm1464, %v1508, %v1509
        %v1511 = vrot.slane %v1509, 4
        %v1512 = vrot.slane %v423, 5
        %v1513 = vsel %vm1464, %v1511, %v1512
        %v1514 = vrot.slane %v1421, 5
        %v1515 = vrot.slane %v1514, 4
        %v1516 = vrot.slane %v384, 5
        %v1517 = vsel %vm1464, %v1515, %v1516
        %v1518 = vrot.slane %v1516, 4
        %v1519 = vrot.slane %v424, 5
        %v1520 = vsel %vm1464, %v1518, %v1519
        %v1521 = vrot.slane %v1422, 5
        %v1522 = vrot.slane %v1521, 4
        %v1523 = vrot.slane %v386, 5
        %v1524 = vsel %vm1464, %v1522, %v1523
        %v1525 = vrot.slane %v1523, 4
        %v1526 = vrot.slane %v425, 5
        %v1527 = vsel %vm1464, %v1525, %v1526
        %v1528 = vrot.slane %v1423, 5
        %v1529 = vrot.slane %v1528, 4
        %v1530 = vrot.slane %v388, 5
        %v1531 = vsel %vm1464, %v1529, %v1530
        %v1532 = vrot.slane %v1530, 4
        %v1533 = vrot.slane %v426, 5
        %v1534 = vsel %vm1464, %v1532, %v1533
        %v1535 = vrot.slane %v1424, 5
        %v1536 = vrot.slane %v1535, 4
        %v1537 = vrot.slane %v390, 5
        %v1538 = vsel %vm1464, %v1536, %v1537
        %v1539 = vrot.slane %v1537, 4
        %v1540 = vrot.slane %v427, 5
        %v1541 = vsel %vm1464, %v1539, %v1540
        %v1542 = vrot.slane %v1425, 5
        %v1543 = vrot.slane %v1542, 4
        %v1544 = vrot.slane %v392, 5
        %v1545 = vsel %vm1464, %v1543, %v1544
        %v1546 = vrot.slane %v1544, 4
        %v1547 = vrot.slane %v428, 5
        %v1548 = vsel %vm1464, %v1546, %v1547
        %v1549 = vrot.slane %v1426, 5
        %v1550 = vrot.slane %v1549, 4
        %v1551 = vrot.slane %v394, 5
        %v1552 = vsel %vm1464, %v1550, %v1551
        %v1553 = vrot.slane %v1551, 4
        %v1554 = vrot.slane %v429, 5
        %v1555 = vsel %vm1464, %v1553, %v1554
        %v1556 = vrot.slane %v1427, 5
        %v1557 = vrot.slane %v1556, 4
        %v1558 = vrot.slane %v396, 5
        %v1559 = vsel %vm1464, %v1557, %v1558
        %v1560 = vrot.slane %v1558, 4
        %v1561 = vrot.slane %v430, 5
        %v1562 = vsel %vm1464, %v1560, %v1561
        %v1563 = vrot.slane %v1428, 5
        %v1564 = vrot.slane %v1563, 4
        %v1565 = vrot.slane %v398, 5
        %v1566 = vsel %vm1464, %v1564, %v1565
        %v1567 = vrot.slane %v1565, 4
        %v1568 = vrot.slane %v431, 5
        %v1569 = vsel %vm1464, %v1567, %v1568
        %v1570 = vrot.slane %v1429, 5
        %v1571 = vrot.slane %v1570, 4
        %v1572 = vrot.slane %v400, 5
        %v1573 = vsel %vm1464, %v1571, %v1572
        %v1574 = vrot.slane %v1572, 4
        %v1575 = vrot.slane %v432, 5
        %v1576 = vsel %vm1464, %v1574, %v1575
        %v1577 = vld [vmem:[#allocation4 + $0x80] sm:$0xf]
        %v1578 = vld [vmem:[#allocation4 + $0x84] sm:$0xf]
        %v1579 = vld [vmem:[#allocation4 + $0x88] sm:$0xf]
        %v1580 = vld [vmem:[#allocation4 + $0x8c] sm:$0xf]
        %v1581 = vld [vmem:[#allocation4 + $0x90] sm:$0xf]
        %v1582 = vld [vmem:[#allocation4 + $0x94] sm:$0xf]
        %v1583 = vld [vmem:[#allocation4 + $0x98] sm:$0xf]
        %v1584 = vld [vmem:[#allocation4 + $0x9c] sm:$0xf]
        %v1585 = vld [vmem:[#allocation4 + $0xa0] sm:$0xf]
        %v1586 = vld [vmem:[#allocation4 + $0xa4] sm:$0xf]
        %v1587 = vld [vmem:[#allocation4 + $0xa8] sm:$0xf]
        %v1588 = vld [vmem:[#allocation4 + $0xac] sm:$0xf]
        %v1589 = vld [vmem:[#allocation4 + $0xb0] sm:$0xf]
        %v1590 = vld [vmem:[#allocation4 + $0xb4] sm:$0xf]
        %v1591 = vld [vmem:[#allocation4 + $0xb8] sm:$0xf]
        %v1592 = vld [vmem:[#allocation4 + $0xbc] sm:$0xf]
        %v1593 = vunpack.c.l.b16 %v1468
        %v1594 = vunpack.c.l.b16 %v1471
        %v1595 = vunpack.c.l.b16 %v1475
        %v1596 = vunpack.c.l.b16 %v1478
        %v1597 = vunpack.c.l.b16 %v1482
        %v1598 = vunpack.c.l.b16 %v1485
        %v1599 = vunpack.c.l.b16 %v1489
        %v1600 = vunpack.c.l.b16 %v1492
        %v1601 = vunpack.c.l.b16 %v1496
        %v1602 = vunpack.c.l.b16 %v1499
        %v1603 = vunpack.c.l.b16 %v1503
        %v1604 = vunpack.c.l.b16 %v1506
        %v1605 = vunpack.c.l.b16 %v1510
        %v1606 = vunpack.c.l.b16 %v1513
        %v1607 = vunpack.c.l.b16 %v1517
        %v1608 = vunpack.c.l.b16 %v1520
        %v1609 = vunpack.c.l.b16 %v1524
        %v1610 = vunpack.c.l.b16 %v1527
        %v1611 = vunpack.c.l.b16 %v1531
        %v1612 = vunpack.c.l.b16 %v1534
        %v1613 = vunpack.c.l.b16 %v1538
        %v1614 = vunpack.c.l.b16 %v1541
        %v1615 = vunpack.c.l.b16 %v1545
        %v1616 = vunpack.c.l.b16 %v1548
        %v1617 = vunpack.c.l.b16 %v1552
        %v1618 = vunpack.c.l.b16 %v1555
        %v1619 = vunpack.c.l.b16 %v1559
        %v1620 = vunpack.c.l.b16 %v1562
        %v1621 = vunpack.c.l.b16 %v1566
        %v1622 = vunpack.c.l.b16 %v1569
        %v1623 = vunpack.c.l.b16 %v1573
        %v1624 = vunpack.c.l.b16 %v1576
        %v1625 = vpack.c.b16 %v1594, %v1593
        %v1626 = vpack.c.b16 %v1596, %v1595
        %v1627 = vpack.c.b16 %v1598, %v1597
        %v1628 = vpack.c.b16 %v1600, %v1599
        %v1629 = vpack.c.b16 %v1602, %v1601
        %v1630 = vpack.c.b16 %v1604, %v1603
        %v1631 = vpack.c.b16 %v1606, %v1605
        %v1632 = vpack.c.b16 %v1608, %v1607
        %v1633 = vpack.c.b16 %v1610, %v1609
        %v1634 = vpack.c.b16 %v1612, %v1611
        %v1635 = vpack.c.b16 %v1614, %v1613
        %v1636 = vpack.c.b16 %v1616, %v1615
        %v1637 = vpack.c.b16 %v1618, %v1617
        %v1638 = vpack.c.b16 %v1620, %v1619
        %v1639 = vpack.c.b16 %v1622, %v1621
        %v1640 = vpack.c.b16 %v1624, %v1623
        %v1673 = vunpack.c.l.b16 %v1577
        %v1674 = vunpack.c.l.b16 %v1578
        %v1675 = vunpack.c.l.b16 %v1579
        %v1676 = vunpack.c.l.b16 %v1580
        %v1677 = vunpack.c.l.b16 %v1581
        %v1678 = vunpack.c.l.b16 %v1582
        %v1679 = vunpack.c.l.b16 %v1583
        %v1680 = vunpack.c.l.b16 %v1584
        %v1681 = vunpack.c.l.b16 %v1585
        %v1682 = vunpack.c.l.b16 %v1586
        %v1683 = vunpack.c.l.b16 %v1587
        %v1684 = vunpack.c.l.b16 %v1588
        %v1685 = vunpack.c.l.b16 %v1589
        %v1686 = vunpack.c.l.b16 %v1590
        %v1687 = vunpack.c.l.b16 %v1591
        %v1688 = vunpack.c.l.b16 %v1592
        %v1689 = vpack.c.b16 %v1674, %v1673
        %v1690 = vpack.c.b16 %v1676, %v1675
        %v1691 = vpack.c.b16 %v1678, %v1677
        %v1692 = vpack.c.b16 %v1680, %v1679
        %v1693 = vpack.c.b16 %v1682, %v1681
        %v1694 = vpack.c.b16 %v1684, %v1683
        %v1695 = vpack.c.b16 %v1686, %v1685
        %v1696 = vpack.c.b16 %v1688, %v1687
        %1705 = vmatprep.subr.bf16.mxu0 0
        %1706 = vmatpush1.bf16.msra.mxu0 %v1696
        %1707 = vmatprep.subr.bf16.mxu0 0
        %1708 = vmatpush1.bf16.msra.mxu0 %v1695
        %1709 = vmatprep.subr.bf16.mxu0 0
        %1710 = vmatpush1.bf16.msra.mxu0 %v1694
        %1711 = vmatprep.subr.bf16.mxu0 0
        %1712 = vmatpush1.bf16.msra.mxu0 %v1693
        %1713 = vmatprep.subr.bf16.mxu0 0
        %1714 = vmatpush1.bf16.msra.mxu0 %v1692
        %1715 = vmatprep.subr.bf16.mxu0 0
        %1716 = vmatpush1.bf16.msra.mxu0 %v1691
        %1717 = vmatprep.subr.bf16.mxu0 0
        %1718 = vmatpush1.bf16.msra.mxu0 %v1690
        %1719 = vmatprep.subr.bf16.mxu0 0
        %1720 = vmatpush1.bf16.msra.mxu0 %v1689
        %1721 = vmatprep.subr.bf16.mxu0 0
        %1722 = vmatpush2.bf16.msra.mxu0 0
        %1723 = vmatprep.subr.bf16.mxu0 0
        %1724 = vmatpush2.bf16.msra.mxu0 0
        %1725 = vmatprep.subr.bf16.mxu0 0
        %1726 = vmatpush2.bf16.msra.mxu0 0
        %1727 = vmatprep.subr.bf16.mxu0 0
        %1728 = vmatpush2.bf16.msra.mxu0 0
        %1729 = vmatprep.subr.bf16.mxu0 0
        %1730 = vmatpush2.bf16.msra.mxu0 0
        %1731 = vmatprep.subr.bf16.mxu0 0
        %1732 = vmatpush2.bf16.msra.mxu0 0
        %1733 = vmatprep.subr.bf16.mxu0 0
        %1734 = vmatpush2.bf16.msra.mxu0 0
        %1735 = vmatprep.subr.bf16.mxu0 0
        %1736 = vmatpush2.bf16.msra.mxu0 0
        %1737 = vmatprep.mubr.bf16.mxu0 0
        %1738 = vmatmul.mubr.bf16.gmra.mxu0 %v1625
        %v1739 = vpop.f32.mrf.mxu0
        %v1740 = vadd.f32 0.0, %v1739
        %v1741 = vpop.f32.mrf.mxu0
        %v1742 = vpop.f32.mrf.mxu0
        %v1743 = vadd.f32 0.0, %v1742
        %v1744 = vpop.f32.mrf.mxu0
        %1745 = vmatprep.mubr.bf16.mxu0 0
        %1746 = vmatmul.mubr.bf16.gmra.mxu0 %v1626
        %v1747 = vpop.f32.mrf.mxu0
        %v1748 = vadd.f32 0.0, %v1747
        %v1749 = vpop.f32.mrf.mxu0
        %v1750 = vpop.f32.mrf.mxu0
        %v1751 = vadd.f32 0.0, %v1750
        %v1752 = vpop.f32.mrf.mxu0
        %1753 = vmatprep.mubr.bf16.mxu0 0
        %1754 = vmatmul.mubr.bf16.gmra.mxu0 %v1627
        %v1755 = vpop.f32.mrf.mxu0
        %v1756 = vadd.f32 0.0, %v1755
        %v1757 = vpop.f32.mrf.mxu0
        %v1758 = vpop.f32.mrf.mxu0
        %v1759 = vadd.f32 0.0, %v1758
        %v1760 = vpop.f32.mrf.mxu0
        %1761 = vmatprep.mubr.bf16.mxu0 0
        %1762 = vmatmul.mubr.bf16.gmra.mxu0 %v1628
        %v1763 = vpop.f32.mrf.mxu0
        %v1764 = vadd.f32 0.0, %v1763
        %v1765 = vpop.f32.mrf.mxu0
        %v1766 = vpop.f32.mrf.mxu0
        %v1767 = vadd.f32 0.0, %v1766
        %v1768 = vpop.f32.mrf.mxu0
        %1769 = vmatprep.mubr.bf16.mxu0 0
        %1770 = vmatmul.mubr.bf16.gmra.mxu0 %v1629
        %v1771 = vpop.f32.mrf.mxu0
        %v1772 = vadd.f32 0.0, %v1771
        %v1773 = vpop.f32.mrf.mxu0
        %v1774 = vpop.f32.mrf.mxu0
        %v1775 = vadd.f32 0.0, %v1774
        %v1776 = vpop.f32.mrf.mxu0
        %1777 = vmatprep.mubr.bf16.mxu0 0
        %1778 = vmatmul.mubr.bf16.gmra.mxu0 %v1630
        %v1779 = vpop.f32.mrf.mxu0
        %v1780 = vadd.f32 0.0, %v1779
        %v1781 = vpop.f32.mrf.mxu0
        %v1782 = vpop.f32.mrf.mxu0
        %v1783 = vadd.f32 0.0, %v1782
        %v1784 = vpop.f32.mrf.mxu0
        %1785 = vmatprep.mubr.bf16.mxu0 0
        %1786 = vmatmul.mubr.bf16.gmra.mxu0 %v1631
        %v1787 = vpop.f32.mrf.mxu0
        %v1788 = vadd.f32 0.0, %v1787
        %v1789 = vpop.f32.mrf.mxu0
        %v1790 = vpop.f32.mrf.mxu0
        %v1791 = vadd.f32 0.0, %v1790
        %v1792 = vpop.f32.mrf.mxu0
        %1793 = vmatprep.mubr.bf16.mxu0 0
        %1794 = vmatmul.mubr.bf16.gmra.mxu0 %v1632
        %v1795 = vpop.f32.mrf.mxu0
        %v1796 = vadd.f32 0.0, %v1795
        %v1797 = vpop.f32.mrf.mxu0
        %v1798 = vpop.f32.mrf.mxu0
        %v1799 = vadd.f32 0.0, %v1798
        %v1800 = vpop.f32.mrf.mxu0
        %1801 = vmatprep.mubr.bf16.mxu0 0
        %1802 = vmatmul.mubr.bf16.gmra.mxu0 %v1633
        %v1803 = vpop.f32.mrf.mxu0
        %v1804 = vadd.f32 0.0, %v1803
        %v1805 = vpop.f32.mrf.mxu0
        %v1806 = vpop.f32.mrf.mxu0
        %v1807 = vadd.f32 0.0, %v1806
        %v1808 = vpop.f32.mrf.mxu0
        %1809 = vmatprep.mubr.bf16.mxu0 0
        %1810 = vmatmul.mubr.bf16.gmra.mxu0 %v1634
        %v1811 = vpop.f32.mrf.mxu0
        %v1812 = vadd.f32 0.0, %v1811
        %v1813 = vpop.f32.mrf.mxu0
        %v1814 = vpop.f32.mrf.mxu0
        %v1815 = vadd.f32 0.0, %v1814
        %v1816 = vpop.f32.mrf.mxu0
        %1817 = vmatprep.mubr.bf16.mxu0 0
        %1818 = vmatmul.mubr.bf16.gmra.mxu0 %v1635
        %v1819 = vpop.f32.mrf.mxu0
        %v1820 = vadd.f32 0.0, %v1819
        %v1821 = vpop.f32.mrf.mxu0
        %v1822 = vpop.f32.mrf.mxu0
        %v1823 = vadd.f32 0.0, %v1822
        %v1824 = vpop.f32.mrf.mxu0
        %1825 = vmatprep.mubr.bf16.mxu0 0
        %1826 = vmatmul.mubr.bf16.gmra.mxu0 %v1636
        %v1827 = vpop.f32.mrf.mxu0
        %v1828 = vadd.f32 0.0, %v1827
        %v1829 = vpop.f32.mrf.mxu0
        %v1830 = vpop.f32.mrf.mxu0
        %v1831 = vadd.f32 0.0, %v1830
        %v1832 = vpop.f32.mrf.mxu0
        %1833 = vmatprep.mubr.bf16.mxu0 0
        %1834 = vmatmul.mubr.bf16.gmra.mxu0 %v1637
        %v1835 = vpop.f32.mrf.mxu0
        %v1836 = vadd.f32 0.0, %v1835
        %v1837 = vpop.f32.mrf.mxu0
        %v1838 = vpop.f32.mrf.mxu0
        %v1839 = vadd.f32 0.0, %v1838
        %v1840 = vpop.f32.mrf.mxu0
        %1841 = vmatprep.mubr.bf16.mxu0 0
        %1842 = vmatmul.mubr.bf16.gmra.mxu0 %v1638
        %v1843 = vpop.f32.mrf.mxu0
        %v1844 = vadd.f32 0.0, %v1843
        %v1845 = vpop.f32.mrf.mxu0
        %v1846 = vpop.f32.mrf.mxu0
        %v1847 = vadd.f32 0.0, %v1846
        %v1848 = vpop.f32.mrf.mxu0
        %1849 = vmatprep.mubr.bf16.mxu0 0
        %1850 = vmatmul.mubr.bf16.gmra.mxu0 %v1639
        %v1851 = vpop.f32.mrf.mxu0
        %v1852 = vadd.f32 0.0, %v1851
        %v1853 = vpop.f32.mrf.mxu0
        %v1854 = vpop.f32.mrf.mxu0
        %v1855 = vadd.f32 0.0, %v1854
        %v1856 = vpop.f32.mrf.mxu0
        %1857 = vmatprep.mubr.bf16.mxu0 0
        %1858 = vmatmul.mubr.bf16.gmra.mxu0 %v1640
        %v1859 = vpop.f32.mrf.mxu0
        %v1860 = vadd.f32 0.0, %v1859
        %v1861 = vpop.f32.mrf.mxu0
        %v1862 = vpop.f32.mrf.mxu0
        %v1863 = vadd.f32 0.0, %v1862
        %v1864 = vpop.f32.mrf.mxu0
        %1865 = vdwg.mxu0
        %v1866 = vadd.f32 %v1288, %v1740
        %v1867 = vadd.f32 %v1291, %v1743
        %v1868 = vadd.f32 %v1296, %v1748
        %v1869 = vadd.f32 %v1299, %v1751
        %v1870 = vadd.f32 %v1304, %v1756
        %v1871 = vadd.f32 %v1307, %v1759
        %v1872 = vadd.f32 %v1312, %v1764
        %v1873 = vadd.f32 %v1315, %v1767
        %v1874 = vadd.f32 %v1320, %v1772
        %v1875 = vadd.f32 %v1323, %v1775
        %v1876 = vadd.f32 %v1328, %v1780
        %v1877 = vadd.f32 %v1331, %v1783
        %v1878 = vadd.f32 %v1336, %v1788
        %v1879 = vadd.f32 %v1339, %v1791
        %v1880 = vadd.f32 %v1344, %v1796
        %v1881 = vadd.f32 %v1347, %v1799
        %v1882 = vadd.f32 %v1352, %v1804
        %v1883 = vadd.f32 %v1355, %v1807
        %v1884 = vadd.f32 %v1360, %v1812
        %v1885 = vadd.f32 %v1363, %v1815
        %v1886 = vadd.f32 %v1368, %v1820
        %v1887 = vadd.f32 %v1371, %v1823
        %v1888 = vadd.f32 %v1376, %v1828
        %v1889 = vadd.f32 %v1379, %v1831
        %v1890 = vadd.f32 %v1384, %v1836
        %v1891 = vadd.f32 %v1387, %v1839
        %v1892 = vadd.f32 %v1392, %v1844
        %v1893 = vadd.f32 %v1395, %v1847
        %v1894 = vadd.f32 %v1400, %v1852
        %v1895 = vadd.f32 %v1403, %v1855
        %v1896 = vadd.f32 %v1408, %v1860
        %v1897 = vadd.f32 %v1411, %v1863
        %s1898 = sadd.s32 %s365, 1
        %s1899 = smul.u32 %s1898, 3
        %s1900 = smul.addr %s1899, 4
        %s1901 = scalar_lea.vmem [#allocation2], %s1900
        %v1902 = vld [vmem:[%s1901] sm:$0xf]
        %v1903 = vld [vmem:[%s1901 + $0x4] sm:$0xf]
        %v1904 = vld [vmem:[%s1901 + $0xc] sm:$0xf]
        %v1905 = vld [vmem:[%s1901 + $0x10] sm:$0xf]
        %v1906 = vld [vmem:[%s1901 + $0x18] sm:$0xf]
        %v1907 = vld [vmem:[%s1901 + $0x1c] sm:$0xf]
        %v1908 = vld [vmem:[%s1901 + $0x24] sm:$0xf]
        %v1909 = vld [vmem:[%s1901 + $0x28] sm:$0xf]
        %v1910 = vld [vmem:[%s1901 + $0x30] sm:$0xf]
        %v1911 = vld [vmem:[%s1901 + $0x34] sm:$0xf]
        %v1912 = vld [vmem:[%s1901 + $0x3c] sm:$0xf]
        %v1913 = vld [vmem:[%s1901 + $0x40] sm:$0xf]
        %v1914 = vld [vmem:[%s1901 + $0x48] sm:$0xf]
        %v1915 = vld [vmem:[%s1901 + $0x4c] sm:$0xf]
        %v1916 = vld [vmem:[%s1901 + $0x54] sm:$0xf]
        %v1917 = vld [vmem:[%s1901 + $0x58] sm:$0xf]
        %v1918 = vld [vmem:[%s1901 + $0x60] sm:$0xf]
        %v1919 = vld [vmem:[%s1901 + $0x64] sm:$0xf]
        %v1920 = vld [vmem:[%s1901 + $0x6c] sm:$0xf]
        %v1921 = vld [vmem:[%s1901 + $0x70] sm:$0xf]
        %v1922 = vld [vmem:[%s1901 + $0x78] sm:$0xf]
        %v1923 = vld [vmem:[%s1901 + $0x7c] sm:$0xf]
        %v1924 = vld [vmem:[%s1901 + $0x84] sm:$0xf]
        %v1925 = vld [vmem:[%s1901 + $0x88] sm:$0xf]
        %v1926 = vld [vmem:[%s1901 + $0x90] sm:$0xf]
        %v1927 = vld [vmem:[%s1901 + $0x94] sm:$0xf]
        %v1928 = vld [vmem:[%s1901 + $0x9c] sm:$0xf]
        %v1929 = vld [vmem:[%s1901 + $0xa0] sm:$0xf]
        %v1930 = vld [vmem:[%s1901 + $0xa8] sm:$0xf]
        %v1931 = vld [vmem:[%s1901 + $0xac] sm:$0xf]
        %v1932 = vld [vmem:[%s1901 + $0xb4] sm:$0xf]
        %v1933 = vld [vmem:[%s1901 + $0xb8] sm:$0xf]
        %v1934 = vld [vmem:[#allocation4 + $0xc0] sm:$0xf]
        %v1935 = vld [vmem:[#allocation4 + $0xc4] sm:$0xf]
        %v1936 = vld [vmem:[#allocation4 + $0xc8] sm:$0xf]
        %v1937 = vld [vmem:[#allocation4 + $0xcc] sm:$0xf]
        %v1938 = vld [vmem:[#allocation4 + $0xd0] sm:$0xf]
        %v1939 = vld [vmem:[#allocation4 + $0xd4] sm:$0xf]
        %v1940 = vld [vmem:[#allocation4 + $0xd8] sm:$0xf]
        %v1941 = vld [vmem:[#allocation4 + $0xdc] sm:$0xf]
        %v1942 = vld [vmem:[#allocation4 + $0xe0] sm:$0xf]
        %v1943 = vld [vmem:[#allocation4 + $0xe4] sm:$0xf]
        %v1944 = vld [vmem:[#allocation4 + $0xe8] sm:$0xf]
        %v1945 = vld [vmem:[#allocation4 + $0xec] sm:$0xf]
        %v1946 = vld [vmem:[#allocation4 + $0xf0] sm:$0xf]
        %v1947 = vld [vmem:[#allocation4 + $0xf4] sm:$0xf]
        %v1948 = vld [vmem:[#allocation4 + $0xf8] sm:$0xf]
        %v1949 = vld [vmem:[#allocation4 + $0xfc] sm:$0xf]
        %v1982 = vunpack.c.l.b16 %v1902
        %v1983 = vunpack.c.l.b16 %v1903
        %v1984 = vunpack.c.l.b16 %v1904
        %v1985 = vunpack.c.l.b16 %v1905
        %v1986 = vunpack.c.l.b16 %v1906
        %v1987 = vunpack.c.l.b16 %v1907
        %v1988 = vunpack.c.l.b16 %v1908
        %v1989 = vunpack.c.l.b16 %v1909
        %v1990 = vunpack.c.l.b16 %v1910
        %v1991 = vunpack.c.l.b16 %v1911
        %v1992 = vunpack.c.l.b16 %v1912
        %v1993 = vunpack.c.l.b16 %v1913
        %v1994 = vunpack.c.l.b16 %v1914
        %v1995 = vunpack.c.l.b16 %v1915
        %v1996 = vunpack.c.l.b16 %v1916
        %v1997 = vunpack.c.l.b16 %v1917
        %v1998 = vunpack.c.l.b16 %v1918
        %v1999 = vunpack.c.l.b16 %v1919
        %v2000 = vunpack.c.l.b16 %v1920
        %v2001 = vunpack.c.l.b16 %v1921
        %v2002 = vunpack.c.l.b16 %v1922
        %v2003 = vunpack.c.l.b16 %v1923
        %v2004 = vunpack.c.l.b16 %v1924
        %v2005 = vunpack.c.l.b16 %v1925
        %v2006 = vunpack.c.l.b16 %v1926
        %v2007 = vunpack.c.l.b16 %v1927
        %v2008 = vunpack.c.l.b16 %v1928
        %v2009 = vunpack.c.l.b16 %v1929
        %v2010 = vunpack.c.l.b16 %v1930
        %v2011 = vunpack.c.l.b16 %v1931
        %v2012 = vunpack.c.l.b16 %v1932
        %v2013 = vunpack.c.l.b16 %v1933
        %v2014 = vpack.c.b16 %v1983, %v1982
        %v2015 = vpack.c.b16 %v1985, %v1984
        %v2016 = vpack.c.b16 %v1987, %v1986
        %v2017 = vpack.c.b16 %v1989, %v1988
        %v2018 = vpack.c.b16 %v1991, %v1990
        %v2019 = vpack.c.b16 %v1993, %v1992
        %v2020 = vpack.c.b16 %v1995, %v1994
        %v2021 = vpack.c.b16 %v1997, %v1996
        %v2022 = vpack.c.b16 %v1999, %v1998
        %v2023 = vpack.c.b16 %v2001, %v2000
        %v2024 = vpack.c.b16 %v2003, %v2002
        %v2025 = vpack.c.b16 %v2005, %v2004
        %v2026 = vpack.c.b16 %v2007, %v2006
        %v2027 = vpack.c.b16 %v2009, %v2008
        %v2028 = vpack.c.b16 %v2011, %v2010
        %v2029 = vpack.c.b16 %v2013, %v2012
        %v2062 = vunpack.c.l.b16 %v1934
        %v2063 = vunpack.c.l.b16 %v1935
        %v2064 = vunpack.c.l.b16 %v1936
        %v2065 = vunpack.c.l.b16 %v1937
        %v2066 = vunpack.c.l.b16 %v1938
        %v2067 = vunpack.c.l.b16 %v1939
        %v2068 = vunpack.c.l.b16 %v1940
        %v2069 = vunpack.c.l.b16 %v1941
        %v2070 = vunpack.c.l.b16 %v1942
        %v2071 = vunpack.c.l.b16 %v1943
        %v2072 = vunpack.c.l.b16 %v1944
        %v2073 = vunpack.c.l.b16 %v1945
        %v2074 = vunpack.c.l.b16 %v1946
        %v2075 = vunpack.c.l.b16 %v1947
        %v2076 = vunpack.c.l.b16 %v1948
        %v2077 = vunpack.c.l.b16 %v1949
        %v2078 = vpack.c.b16 %v2063, %v2062
        %v2079 = vpack.c.b16 %v2065, %v2064
        %v2080 = vpack.c.b16 %v2067, %v2066
        %v2081 = vpack.c.b16 %v2069, %v2068
        %v2082 = vpack.c.b16 %v2071, %v2070
        %v2083 = vpack.c.b16 %v2073, %v2072
        %v2084 = vpack.c.b16 %v2075, %v2074
        %v2085 = vpack.c.b16 %v2077, %v2076
        %2094 = vmatprep.subr.bf16.mxu0 0
        %2095 = vmatpush1.bf16.msra.mxu0 %v2085
        %2096 = vmatprep.subr.bf16.mxu0 0
        %2097 = vmatpush1.bf16.msra.mxu0 %v2084
        %2098 = vmatprep.subr.bf16.mxu0 0
        %2099 = vmatpush1.bf16.msra.mxu0 %v2083
        %2100 = vmatprep.subr.bf16.mxu0 0
        %2101 = vmatpush1.bf16.msra.mxu0 %v2082
        %2102 = vmatprep.subr.bf16.mxu0 0
        %2103 = vmatpush1.bf16.msra.mxu0 %v2081
        %2104 = vmatprep.subr.bf16.mxu0 0
        %2105 = vmatpush1.bf16.msra.mxu0 %v2080
        %2106 = vmatprep.subr.bf16.mxu0 0
        %2107 = vmatpush1.bf16.msra.mxu0 %v2079
        %2108 = vmatprep.subr.bf16.mxu0 0
        %2109 = vmatpush1.bf16.msra.mxu0 %v2078
        %2110 = vmatprep.subr.bf16.mxu0 0
        %2111 = vmatpush2.bf16.msra.mxu0 0
        %2112 = vmatprep.subr.bf16.mxu0 0
        %2113 = vmatpush2.bf16.msra.mxu0 0
        %2114 = vmatprep.subr.bf16.mxu0 0
        %2115 = vmatpush2.bf16.msra.mxu0 0
        %2116 = vmatprep.subr.bf16.mxu0 0
        %2117 = vmatpush2.bf16.msra.mxu0 0
        %2118 = vmatprep.subr.bf16.mxu0 0
        %2119 = vmatpush2.bf16.msra.mxu0 0
        %2120 = vmatprep.subr.bf16.mxu0 0
        %2121 = vmatpush2.bf16.msra.mxu0 0
        %2122 = vmatprep.subr.bf16.mxu0 0
        %2123 = vmatpush2.bf16.msra.mxu0 0
        %2124 = vmatprep.subr.bf16.mxu0 0
        %2125 = vmatpush2.bf16.msra.mxu0 0
        %2126 = vmatprep.mubr.bf16.mxu0 0
        %2127 = vmatmul.mubr.bf16.gmra.mxu0 %v2014
        %v2128 = vpop.f32.mrf.mxu0
        %v2129 = vadd.f32 0.0, %v2128
        %v2130 = vpop.f32.mrf.mxu0
        %v2131 = vpop.f32.mrf.mxu0
        %v2132 = vadd.f32 0.0, %v2131
        %v2133 = vpop.f32.mrf.mxu0
        %2134 = vmatprep.mubr.bf16.mxu0 0
        %2135 = vmatmul.mubr.bf16.gmra.mxu0 %v2015
        %v2136 = vpop.f32.mrf.mxu0
        %v2137 = vadd.f32 0.0, %v2136
        %v2138 = vpop.f32.mrf.mxu0
        %v2139 = vpop.f32.mrf.mxu0
        %v2140 = vadd.f32 0.0, %v2139
        %v2141 = vpop.f32.mrf.mxu0
        %2142 = vmatprep.mubr.bf16.mxu0 0
        %2143 = vmatmul.mubr.bf16.gmra.mxu0 %v2016
        %v2144 = vpop.f32.mrf.mxu0
        %v2145 = vadd.f32 0.0, %v2144
        %v2146 = vpop.f32.mrf.mxu0
        %v2147 = vpop.f32.mrf.mxu0
        %v2148 = vadd.f32 0.0, %v2147
        %v2149 = vpop.f32.mrf.mxu0
        %2150 = vmatprep.mubr.bf16.mxu0 0
        %2151 = vmatmul.mubr.bf16.gmra.mxu0 %v2017
        %v2152 = vpop.f32.mrf.mxu0
        %v2153 = vadd.f32 0.0, %v2152
        %v2154 = vpop.f32.mrf.mxu0
        %v2155 = vpop.f32.mrf.mxu0
        %v2156 = vadd.f32 0.0, %v2155
        %v2157 = vpop.f32.mrf.mxu0
        %2158 = vmatprep.mubr.bf16.mxu0 0
        %2159 = vmatmul.mubr.bf16.gmra.mxu0 %v2018
        %v2160 = vpop.f32.mrf.mxu0
        %v2161 = vadd.f32 0.0, %v2160
        %v2162 = vpop.f32.mrf.mxu0
        %v2163 = vpop.f32.mrf.mxu0
        %v2164 = vadd.f32 0.0, %v2163
        %v2165 = vpop.f32.mrf.mxu0
        %2166 = vmatprep.mubr.bf16.mxu0 0
        %2167 = vmatmul.mubr.bf16.gmra.mxu0 %v2019
        %v2168 = vpop.f32.mrf.mxu0
        %v2169 = vadd.f32 0.0, %v2168
        %v2170 = vpop.f32.mrf.mxu0
        %v2171 = vpop.f32.mrf.mxu0
        %v2172 = vadd.f32 0.0, %v2171
        %v2173 = vpop.f32.mrf.mxu0
        %2174 = vmatprep.mubr.bf16.mxu0 0
        %2175 = vmatmul.mubr.bf16.gmra.mxu0 %v2020
        %v2176 = vpop.f32.mrf.mxu0
        %v2177 = vadd.f32 0.0, %v2176
        %v2178 = vpop.f32.mrf.mxu0
        %v2179 = vpop.f32.mrf.mxu0
        %v2180 = vadd.f32 0.0, %v2179
        %v2181 = vpop.f32.mrf.mxu0
        %2182 = vmatprep.mubr.bf16.mxu0 0
        %2183 = vmatmul.mubr.bf16.gmra.mxu0 %v2021
        %v2184 = vpop.f32.mrf.mxu0
        %v2185 = vadd.f32 0.0, %v2184
        %v2186 = vpop.f32.mrf.mxu0
        %v2187 = vpop.f32.mrf.mxu0
        %v2188 = vadd.f32 0.0, %v2187
        %v2189 = vpop.f32.mrf.mxu0
        %2190 = vmatprep.mubr.bf16.mxu0 0
        %2191 = vmatmul.mubr.bf16.gmra.mxu0 %v2022
        %v2192 = vpop.f32.mrf.mxu0
        %v2193 = vadd.f32 0.0, %v2192
        %v2194 = vpop.f32.mrf.mxu0
        %v2195 = vpop.f32.mrf.mxu0
        %v2196 = vadd.f32 0.0, %v2195
        %v2197 = vpop.f32.mrf.mxu0
        %2198 = vmatprep.mubr.bf16.mxu0 0
        %2199 = vmatmul.mubr.bf16.gmra.mxu0 %v2023
        %v2200 = vpop.f32.mrf.mxu0
        %v2201 = vadd.f32 0.0, %v2200
        %v2202 = vpop.f32.mrf.mxu0
        %v2203 = vpop.f32.mrf.mxu0
        %v2204 = vadd.f32 0.0, %v2203
        %v2205 = vpop.f32.mrf.mxu0
        %2206 = vmatprep.mubr.bf16.mxu0 0
        %2207 = vmatmul.mubr.bf16.gmra.mxu0 %v2024
        %v2208 = vpop.f32.mrf.mxu0
        %v2209 = vadd.f32 0.0, %v2208
        %v2210 = vpop.f32.mrf.mxu0
        %v2211 = vpop.f32.mrf.mxu0
        %v2212 = vadd.f32 0.0, %v2211
        %v2213 = vpop.f32.mrf.mxu0
        %2214 = vmatprep.mubr.bf16.mxu0 0
        %2215 = vmatmul.mubr.bf16.gmra.mxu0 %v2025
        %v2216 = vpop.f32.mrf.mxu0
        %v2217 = vadd.f32 0.0, %v2216
        %v2218 = vpop.f32.mrf.mxu0
        %v2219 = vpop.f32.mrf.mxu0
        %v2220 = vadd.f32 0.0, %v2219
        %v2221 = vpop.f32.mrf.mxu0
        %2222 = vmatprep.mubr.bf16.mxu0 0
        %2223 = vmatmul.mubr.bf16.gmra.mxu0 %v2026
        %v2224 = vpop.f32.mrf.mxu0
        %v2225 = vadd.f32 0.0, %v2224
        %v2226 = vpop.f32.mrf.mxu0
        %v2227 = vpop.f32.mrf.mxu0
        %v2228 = vadd.f32 0.0, %v2227
        %v2229 = vpop.f32.mrf.mxu0
        %2230 = vmatprep.mubr.bf16.mxu0 0
        %2231 = vmatmul.mubr.bf16.gmra.mxu0 %v2027
        %v2232 = vpop.f32.mrf.mxu0
        %v2233 = vadd.f32 0.0, %v2232
        %v2234 = vpop.f32.mrf.mxu0
        %v2235 = vpop.f32.mrf.mxu0
        %v2236 = vadd.f32 0.0, %v2235
        %v2237 = vpop.f32.mrf.mxu0
        %2238 = vmatprep.mubr.bf16.mxu0 0
        %2239 = vmatmul.mubr.bf16.gmra.mxu0 %v2028
        %v2240 = vpop.f32.mrf.mxu0
        %v2241 = vadd.f32 0.0, %v2240
        %v2242 = vpop.f32.mrf.mxu0
        %v2243 = vpop.f32.mrf.mxu0
        %v2244 = vadd.f32 0.0, %v2243
        %v2245 = vpop.f32.mrf.mxu0
        %2246 = vmatprep.mubr.bf16.mxu0 0
        %2247 = vmatmul.mubr.bf16.gmra.mxu0 %v2029
        %v2248 = vpop.f32.mrf.mxu0
        %v2249 = vadd.f32 0.0, %v2248
        %v2250 = vpop.f32.mrf.mxu0
        %v2251 = vpop.f32.mrf.mxu0
        %v2252 = vadd.f32 0.0, %v2251
        %v2253 = vpop.f32.mrf.mxu0
        %2254 = vdwg.mxu0
        %v2255 = vadd.f32 %v1866, %v2129
        %v2256 = vadd.f32 %v1867, %v2132
        %v2257 = vadd.f32 %v1868, %v2137
        %v2258 = vadd.f32 %v1869, %v2140
        %v2259 = vadd.f32 %v1870, %v2145
        %v2260 = vadd.f32 %v1871, %v2148
        %v2261 = vadd.f32 %v1872, %v2153
        %v2262 = vadd.f32 %v1873, %v2156
        %v2263 = vadd.f32 %v1874, %v2161
        %v2264 = vadd.f32 %v1875, %v2164
        %v2265 = vadd.f32 %v1876, %v2169
        %v2266 = vadd.f32 %v1877, %v2172
        %v2267 = vadd.f32 %v1878, %v2177
        %v2268 = vadd.f32 %v1879, %v2180
        %v2269 = vadd.f32 %v1880, %v2185
        %v2270 = vadd.f32 %v1881, %v2188
        %v2271 = vadd.f32 %v1882, %v2193
        %v2272 = vadd.f32 %v1883, %v2196
        %v2273 = vadd.f32 %v1884, %v2201
        %v2274 = vadd.f32 %v1885, %v2204
        %v2275 = vadd.f32 %v1886, %v2209
        %v2276 = vadd.f32 %v1887, %v2212
        %v2277 = vadd.f32 %v1888, %v2217
        %v2278 = vadd.f32 %v1889, %v2220
        %v2279 = vadd.f32 %v1890, %v2225
        %v2280 = vadd.f32 %v1891, %v2228
        %v2281 = vadd.f32 %v1892, %v2233
        %v2282 = vadd.f32 %v1893, %v2236
        %v2283 = vadd.f32 %v1894, %v2241
        %v2284 = vadd.f32 %v1895, %v2244
        %v2285 = vadd.f32 %v1896, %v2249
        %v2286 = vadd.f32 %v1897, %v2252
        %v2287 = vld [vmem:[%s1901] sm:$0xf]
        %v2288 = vld [vmem:[%s1901 + $0x4] sm:$0xf]
        %v2289 = vld [vmem:[%s1901 + $0x8] sm:$0x1]
        %v2290 = vld [vmem:[%s1901 + $0xc] sm:$0xf]
        %v2291 = vld [vmem:[%s1901 + $0x10] sm:$0xf]
        %v2292 = vld [vmem:[%s1901 + $0x14] sm:$0x1]
        %v2293 = vld [vmem:[%s1901 + $0x18] sm:$0xf]
        %v2294 = vld [vmem:[%s1901 + $0x1c] sm:$0xf]
        %v2295 = vld [vmem:[%s1901 + $0x20] sm:$0x1]
        %v2296 = vld [vmem:[%s1901 + $0x24] sm:$0xf]
        %v2297 = vld [vmem:[%s1901 + $0x28] sm:$0xf]
        %v2298 = vld [vmem:[%s1901 + $0x2c] sm:$0x1]
        %v2299 = vld [vmem:[%s1901 + $0x30] sm:$0xf]
        %v2300 = vld [vmem:[%s1901 + $0x34] sm:$0xf]
        %v2301 = vld [vmem:[%s1901 + $0x38] sm:$0x1]
        %v2302 = vld [vmem:[%s1901 + $0x3c] sm:$0xf]
        %v2303 = vld [vmem:[%s1901 + $0x40] sm:$0xf]
        %v2304 = vld [vmem:[%s1901 + $0x44] sm:$0x1]
        %v2305 = vld [vmem:[%s1901 + $0x48] sm:$0xf]
        %v2306 = vld [vmem:[%s1901 + $0x4c] sm:$0xf]
        %v2307 = vld [vmem:[%s1901 + $0x50] sm:$0x1]
        %v2308 = vld [vmem:[%s1901 + $0x54] sm:$0xf]
        %v2309 = vld [vmem:[%s1901 + $0x58] sm:$0xf]
        %v2310 = vld [vmem:[%s1901 + $0x5c] sm:$0x1]
        %v2311 = vld [vmem:[%s1901 + $0x60] sm:$0xf]
        %v2312 = vld [vmem:[%s1901 + $0x64] sm:$0xf]
        %v2313 = vld [vmem:[%s1901 + $0x68] sm:$0x1]
        %v2314 = vld [vmem:[%s1901 + $0x6c] sm:$0xf]
        %v2315 = vld [vmem:[%s1901 + $0x70] sm:$0xf]
        %v2316 = vld [vmem:[%s1901 + $0x74] sm:$0x1]
        %v2317 = vld [vmem:[%s1901 + $0x78] sm:$0xf]
        %v2318 = vld [vmem:[%s1901 + $0x7c] sm:$0xf]
        %v2319 = vld [vmem:[%s1901 + $0x80] sm:$0x1]
        %v2320 = vld [vmem:[%s1901 + $0x84] sm:$0xf]
        %v2321 = vld [vmem:[%s1901 + $0x88] sm:$0xf]
        %v2322 = vld [vmem:[%s1901 + $0x8c] sm:$0x1]
        %v2323 = vld [vmem:[%s1901 + $0x90] sm:$0xf]
        %v2324 = vld [vmem:[%s1901 + $0x94] sm:$0xf]
        %v2325 = vld [vmem:[%s1901 + $0x98] sm:$0x1]
        %v2326 = vld [vmem:[%s1901 + $0x9c] sm:$0xf]
        %v2327 = vld [vmem:[%s1901 + $0xa0] sm:$0xf]
        %v2328 = vld [vmem:[%s1901 + $0xa4] sm:$0x1]
        %v2329 = vld [vmem:[%s1901 + $0xa8] sm:$0xf]
        %v2330 = vld [vmem:[%s1901 + $0xac] sm:$0xf]
        %v2331 = vld [vmem:[%s1901 + $0xb0] sm:$0x1]
        %v2332 = vld [vmem:[%s1901 + $0xb4] sm:$0xf]
        %v2333 = vld [vmem:[%s1901 + $0xb8] sm:$0xf]
        %v2334 = vld [vmem:[%s1901 + $0xbc] sm:$0x1]
        %v2336 = vshrl.u32 %v2287, 16
        %v2338 = vrot.slane %v2336, 4
        %v2339 = vshll.u32 %v2287, 16
        %v2341 = vrot.slane %v2339, 5
        %v2342 = vor.u32 %v2338, %v2341
        %v2343 = vrot.slane %v2342, 4
        %v2345 = vshll.u32 %v2288, 16
        %v2347 = vrot.slane %v2345, 5
        %v2348 = vsel %vm435, %v2343, %v2347
        %v2349 = vshrl.u32 %v2288, 16
        %v2351 = vrot.slane %v2349, 4
        %v2352 = vor.u32 %v2351, %v2347
        %v2353 = vrot.slane %v2352, 4
        %v2355 = vshll.u32 %v2289, 16
        %v2357 = vrot.slane %v2355, 5
        %v2358 = vsel %vm435, %v2353, %v2357
        %v2360 = vshrl.u32 %v2290, 16
        %v2362 = vrot.slane %v2360, 4
        %v2363 = vshll.u32 %v2290, 16
        %v2365 = vrot.slane %v2363, 5
        %v2366 = vor.u32 %v2362, %v2365
        %v2367 = vrot.slane %v2366, 4
        %v2369 = vshll.u32 %v2291, 16
        %v2371 = vrot.slane %v2369, 5
        %v2372 = vsel %vm435, %v2367, %v2371
        %v2373 = vshrl.u32 %v2291, 16
        %v2375 = vrot.slane %v2373, 4
        %v2376 = vor.u32 %v2375, %v2371
        %v2377 = vrot.slane %v2376, 4
        %v2379 = vshll.u32 %v2292, 16
        %v2381 = vrot.slane %v2379, 5
        %v2382 = vsel %vm435, %v2377, %v2381
        %v2384 = vshrl.u32 %v2293, 16
        %v2386 = vrot.slane %v2384, 4
        %v2387 = vshll.u32 %v2293, 16
        %v2389 = vrot.slane %v2387, 5
        %v2390 = vor.u32 %v2386, %v2389
        %v2391 = vrot.slane %v2390, 4
        %v2393 = vshll.u32 %v2294, 16
        %v2395 = vrot.slane %v2393, 5
        %v2396 = vsel %vm435, %v2391, %v2395
        %v2397 = vshrl.u32 %v2294, 16
        %v2399 = vrot.slane %v2397, 4
        %v2400 = vor.u32 %v2399, %v2395
        %v2401 = vrot.slane %v2400, 4
        %v2403 = vshll.u32 %v2295, 16
        %v2405 = vrot.slane %v2403, 5
        %v2406 = vsel %vm435, %v2401, %v2405
        %v2408 = vshrl.u32 %v2296, 16
        %v2410 = vrot.slane %v2408, 4
        %v2411 = vshll.u32 %v2296, 16
        %v2413 = vrot.slane %v2411, 5
        %v2414 = vor.u32 %v2410, %v2413
        %v2415 = vrot.slane %v2414, 4
        %v2417 = vshll.u32 %v2297, 16
        %v2419 = vrot.slane %v2417, 5
        %v2420 = vsel %vm435, %v2415, %v2419
        %v2421 = vshrl.u32 %v2297, 16
        %v2423 = vrot.slane %v2421, 4
        %v2424 = vor.u32 %v2423, %v2419
        %v2425 = vrot.slane %v2424, 4
        %v2427 = vshll.u32 %v2298, 16
        %v2429 = vrot.slane %v2427, 5
        %v2430 = vsel %vm435, %v2425, %v2429
        %v2432 = vshrl.u32 %v2299, 16
        %v2434 = vrot.slane %v2432, 4
        %v2435 = vshll.u32 %v2299, 16
        %v2437 = vrot.slane %v2435, 5
        %v2438 = vor.u32 %v2434, %v2437
        %v2439 = vrot.slane %v2438, 4
        %v2441 = vshll.u32 %v2300, 16
        %v2443 = vrot.slane %v2441, 5
        %v2444 = vsel %vm435, %v2439, %v2443
        %v2445 = vshrl.u32 %v2300, 16
        %v2447 = vrot.slane %v2445, 4
        %v2448 = vor.u32 %v2447, %v2443
        %v2449 = vrot.slane %v2448, 4
        %v2451 = vshll.u32 %v2301, 16
        %v2453 = vrot.slane %v2451, 5
        %v2454 = vsel %vm435, %v2449, %v2453
        %v2456 = vshrl.u32 %v2302, 16
        %v2458 = vrot.slane %v2456, 4
        %v2459 = vshll.u32 %v2302, 16
        %v2461 = vrot.slane %v2459, 5
        %v2462 = vor.u32 %v2458, %v2461
        %v2463 = vrot.slane %v2462, 4
        %v2465 = vshll.u32 %v2303, 16
        %v2467 = vrot.slane %v2465, 5
        %v2468 = vsel %vm435, %v2463, %v2467
        %v2469 = vshrl.u32 %v2303, 16
        %v2471 = vrot.slane %v2469, 4
        %v2472 = vor.u32 %v2471, %v2467
        %v2473 = vrot.slane %v2472, 4
        %v2475 = vshll.u32 %v2304, 16
        %v2477 = vrot.slane %v2475, 5
        %v2478 = vsel %vm435, %v2473, %v2477
        %v2480 = vshrl.u32 %v2305, 16
        %v2482 = vrot.slane %v2480, 4
        %v2483 = vshll.u32 %v2305, 16
        %v2485 = vrot.slane %v2483, 5
        %v2486 = vor.u32 %v2482, %v2485
        %v2487 = vrot.slane %v2486, 4
        %v2489 = vshll.u32 %v2306, 16
        %v2491 = vrot.slane %v2489, 5
        %v2492 = vsel %vm435, %v2487, %v2491
        %v2493 = vshrl.u32 %v2306, 16
        %v2495 = vrot.slane %v2493, 4
        %v2496 = vor.u32 %v2495, %v2491
        %v2497 = vrot.slane %v2496, 4
        %v2499 = vshll.u32 %v2307, 16
        %v2501 = vrot.slane %v2499, 5
        %v2502 = vsel %vm435, %v2497, %v2501
        %v2504 = vshrl.u32 %v2308, 16
        %v2506 = vrot.slane %v2504, 4
        %v2507 = vshll.u32 %v2308, 16
        %v2509 = vrot.slane %v2507, 5
        %v2510 = vor.u32 %v2506, %v2509
        %v2511 = vrot.slane %v2510, 4
        %v2513 = vshll.u32 %v2309, 16
        %v2515 = vrot.slane %v2513, 5
        %v2516 = vsel %vm435, %v2511, %v2515
        %v2517 = vshrl.u32 %v2309, 16
        %v2519 = vrot.slane %v2517, 4
        %v2520 = vor.u32 %v2519, %v2515
        %v2521 = vrot.slane %v2520, 4
        %v2523 = vshll.u32 %v2310, 16
        %v2525 = vrot.slane %v2523, 5
        %v2526 = vsel %vm435, %v2521, %v2525
        %v2528 = vshrl.u32 %v2311, 16
        %v2530 = vrot.slane %v2528, 4
        %v2531 = vshll.u32 %v2311, 16
        %v2533 = vrot.slane %v2531, 5
        %v2534 = vor.u32 %v2530, %v2533
        %v2535 = vrot.slane %v2534, 4
        %v2537 = vshll.u32 %v2312, 16
        %v2539 = vrot.slane %v2537, 5
        %v2540 = vsel %vm435, %v2535, %v2539
        %v2541 = vshrl.u32 %v2312, 16
        %v2543 = vrot.slane %v2541, 4
        %v2544 = vor.u32 %v2543, %v2539
        %v2545 = vrot.slane %v2544, 4
        %v2547 = vshll.u32 %v2313, 16
        %v2549 = vrot.slane %v2547, 5
        %v2550 = vsel %vm435, %v2545, %v2549
        %v2552 = vshrl.u32 %v2314, 16
        %v2554 = vrot.slane %v2552, 4
        %v2555 = vshll.u32 %v2314, 16
        %v2557 = vrot.slane %v2555, 5
        %v2558 = vor.u32 %v2554, %v2557
        %v2559 = vrot.slane %v2558, 4
        %v2561 = vshll.u32 %v2315, 16
        %v2563 = vrot.slane %v2561, 5
        %v2564 = vsel %vm435, %v2559, %v2563
        %v2565 = vshrl.u32 %v2315, 16
        %v2567 = vrot.slane %v2565, 4
        %v2568 = vor.u32 %v2567, %v2563
        %v2569 = vrot.slane %v2568, 4
        %v2571 = vshll.u32 %v2316, 16
        %v2573 = vrot.slane %v2571, 5
        %v2574 = vsel %vm435, %v2569, %v2573
        %v2576 = vshrl.u32 %v2317, 16
        %v2578 = vrot.slane %v2576, 4
        %v2579 = vshll.u32 %v2317, 16
        %v2581 = vrot.slane %v2579, 5
        %v2582 = vor.u32 %v2578, %v2581
        %v2583 = vrot.slane %v2582, 4
        %v2585 = vshll.u32 %v2318, 16
        %v2587 = vrot.slane %v2585, 5
        %v2588 = vsel %vm435, %v2583, %v2587
        %v2589 = vshrl.u32 %v2318, 16
        %v2591 = vrot.slane %v2589, 4
        %v2592 = vor.u32 %v2591, %v2587
        %v2593 = vrot.slane %v2592, 4
        %v2595 = vshll.u32 %v2319, 16
        %v2597 = vrot.slane %v2595, 5
        %v2598 = vsel %vm435, %v2593, %v2597
        %v2600 = vshrl.u32 %v2320, 16
        %v2602 = vrot.slane %v2600, 4
        %v2603 = vshll.u32 %v2320, 16
        %v2605 = vrot.slane %v2603, 5
        %v2606 = vor.u32 %v2602, %v2605
        %v2607 = vrot.slane %v2606, 4
        %v2609 = vshll.u32 %v2321, 16
        %v2611 = vrot.slane %v2609, 5
        %v2612 = vsel %vm435, %v2607, %v2611
        %v2613 = vshrl.u32 %v2321, 16
        %v2615 = vrot.slane %v2613, 4
        %v2616 = vor.u32 %v2615, %v2611
        %v2617 = vrot.slane %v2616, 4
        %v2619 = vshll.u32 %v2322, 16
        %v2621 = vrot.slane %v2619, 5
        %v2622 = vsel %vm435, %v2617, %v2621
        %v2624 = vshrl.u32 %v2323, 16
        %v2626 = vrot.slane %v2624, 4
        %v2627 = vshll.u32 %v2323, 16
        %v2629 = vrot.slane %v2627, 5
        %v2630 = vor.u32 %v2626, %v2629
        %v2631 = vrot.slane %v2630, 4
        %v2633 = vshll.u32 %v2324, 16
        %v2635 = vrot.slane %v2633, 5
        %v2636 = vsel %vm435, %v2631, %v2635
        %v2637 = vshrl.u32 %v2324, 16
        %v2639 = vrot.slane %v2637, 4
        %v2640 = vor.u32 %v2639, %v2635
        %v2641 = vrot.slane %v2640, 4
        %v2643 = vshll.u32 %v2325, 16
        %v2645 = vrot.slane %v2643, 5
        %v2646 = vsel %vm435, %v2641, %v2645
        %v2648 = vshrl.u32 %v2326, 16
        %v2650 = vrot.slane %v2648, 4
        %v2651 = vshll.u32 %v2326, 16
        %v2653 = vrot.slane %v2651, 5
        %v2654 = vor.u32 %v2650, %v2653
        %v2655 = vrot.slane %v2654, 4
        %v2657 = vshll.u32 %v2327, 16
        %v2659 = vrot.slane %v2657, 5
        %v2660 = vsel %vm435, %v2655, %v2659
        %v2661 = vshrl.u32 %v2327, 16
        %v2663 = vrot.slane %v2661, 4
        %v2664 = vor.u32 %v2663, %v2659
        %v2665 = vrot.slane %v2664, 4
        %v2667 = vshll.u32 %v2328, 16
        %v2669 = vrot.slane %v2667, 5
        %v2670 = vsel %vm435, %v2665, %v2669
        %v2672 = vshrl.u32 %v2329, 16
        %v2674 = vrot.slane %v2672, 4
        %v2675 = vshll.u32 %v2329, 16
        %v2677 = vrot.slane %v2675, 5
        %v2678 = vor.u32 %v2674, %v2677
        %v2679 = vrot.slane %v2678, 4
        %v2681 = vshll.u32 %v2330, 16
        %v2683 = vrot.slane %v2681, 5
        %v2684 = vsel %vm435, %v2679, %v2683
        %v2685 = vshrl.u32 %v2330, 16
        %v2687 = vrot.slane %v2685, 4
        %v2688 = vor.u32 %v2687, %v2683
        %v2689 = vrot.slane %v2688, 4
        %v2691 = vshll.u32 %v2331, 16
        %v2693 = vrot.slane %v2691, 5
        %v2694 = vsel %vm435, %v2689, %v2693
        %v2696 = vshrl.u32 %v2332, 16
        %v2698 = vrot.slane %v2696, 4
        %v2699 = vshll.u32 %v2332, 16
        %v2701 = vrot.slane %v2699, 5
        %v2702 = vor.u32 %v2698, %v2701
        %v2703 = vrot.slane %v2702, 4
        %v2705 = vshll.u32 %v2333, 16
        %v2707 = vrot.slane %v2705, 5
        %v2708 = vsel %vm435, %v2703, %v2707
        %v2709 = vshrl.u32 %v2333, 16
        %v2711 = vrot.slane %v2709, 4
        %v2712 = vor.u32 %v2711, %v2707
        %v2713 = vrot.slane %v2712, 4
        %v2715 = vshll.u32 %v2334, 16
        %v2717 = vrot.slane %v2715, 5
        %v2718 = vsel %vm435, %v2713, %v2717
        %v2719 = vld [vmem:[#allocation4 + $0x100] sm:$0xf]
        %v2720 = vld [vmem:[#allocation4 + $0x104] sm:$0xf]
        %v2721 = vld [vmem:[#allocation4 + $0x108] sm:$0xf]
        %v2722 = vld [vmem:[#allocation4 + $0x10c] sm:$0xf]
        %v2723 = vld [vmem:[#allocation4 + $0x110] sm:$0xf]
        %v2724 = vld [vmem:[#allocation4 + $0x114] sm:$0xf]
        %v2725 = vld [vmem:[#allocation4 + $0x118] sm:$0xf]
        %v2726 = vld [vmem:[#allocation4 + $0x11c] sm:$0xf]
        %v2727 = vld [vmem:[#allocation4 + $0x120] sm:$0xf]
        %v2728 = vld [vmem:[#allocation4 + $0x124] sm:$0xf]
        %v2729 = vld [vmem:[#allocation4 + $0x128] sm:$0xf]
        %v2730 = vld [vmem:[#allocation4 + $0x12c] sm:$0xf]
        %v2731 = vld [vmem:[#allocation4 + $0x130] sm:$0xf]
        %v2732 = vld [vmem:[#allocation4 + $0x134] sm:$0xf]
        %v2733 = vld [vmem:[#allocation4 + $0x138] sm:$0xf]
        %v2734 = vld [vmem:[#allocation4 + $0x13c] sm:$0xf]
        %v2735 = vunpack.c.l.b16 %v2348
        %v2736 = vunpack.c.l.b16 %v2358
        %v2737 = vunpack.c.l.b16 %v2372
        %v2738 = vunpack.c.l.b16 %v2382
        %v2739 = vunpack.c.l.b16 %v2396
        %v2740 = vunpack.c.l.b16 %v2406
        %v2741 = vunpack.c.l.b16 %v2420
        %v2742 = vunpack.c.l.b16 %v2430
        %v2743 = vunpack.c.l.b16 %v2444
        %v2744 = vunpack.c.l.b16 %v2454
        %v2745 = vunpack.c.l.b16 %v2468
        %v2746 = vunpack.c.l.b16 %v2478
        %v2747 = vunpack.c.l.b16 %v2492
        %v2748 = vunpack.c.l.b16 %v2502
        %v2749 = vunpack.c.l.b16 %v2516
        %v2750 = vunpack.c.l.b16 %v2526
        %v2751 = vunpack.c.l.b16 %v2540
        %v2752 = vunpack.c.l.b16 %v2550
        %v2753 = vunpack.c.l.b16 %v2564
        %v2754 = vunpack.c.l.b16 %v2574
        %v2755 = vunpack.c.l.b16 %v2588
        %v2756 = vunpack.c.l.b16 %v2598
        %v2757 = vunpack.c.l.b16 %v2612
        %v2758 = vunpack.c.l.b16 %v2622
        %v2759 = vunpack.c.l.b16 %v2636
        %v2760 = vunpack.c.l.b16 %v2646
        %v2761 = vunpack.c.l.b16 %v2660
        %v2762 = vunpack.c.l.b16 %v2670
        %v2763 = vunpack.c.l.b16 %v2684
        %v2764 = vunpack.c.l.b16 %v2694
        %v2765 = vunpack.c.l.b16 %v2708
        %v2766 = vunpack.c.l.b16 %v2718
        %v2767 = vpack.c.b16 %v2736, %v2735
        %v2768 = vpack.c.b16 %v2738, %v2737
        %v2769 = vpack.c.b16 %v2740, %v2739
        %v2770 = vpack.c.b16 %v2742, %v2741
        %v2771 = vpack.c.b16 %v2744, %v2743
        %v2772 = vpack.c.b16 %v2746, %v2745
        %v2773 = vpack.c.b16 %v2748, %v2747
        %v2774 = vpack.c.b16 %v2750, %v2749
        %v2775 = vpack.c.b16 %v2752, %v2751
        %v2776 = vpack.c.b16 %v2754, %v2753
        %v2777 = vpack.c.b16 %v2756, %v2755
        %v2778 = vpack.c.b16 %v2758, %v2757
        %v2779 = vpack.c.b16 %v2760, %v2759
        %v2780 = vpack.c.b16 %v2762, %v2761
        %v2781 = vpack.c.b16 %v2764, %v2763
        %v2782 = vpack.c.b16 %v2766, %v2765
        %v2815 = vunpack.c.l.b16 %v2719
        %v2816 = vunpack.c.l.b16 %v2720
        %v2817 = vunpack.c.l.b16 %v2721
        %v2818 = vunpack.c.l.b16 %v2722
        %v2819 = vunpack.c.l.b16 %v2723
        %v2820 = vunpack.c.l.b16 %v2724
        %v2821 = vunpack.c.l.b16 %v2725
        %v2822 = vunpack.c.l.b16 %v2726
        %v2823 = vunpack.c.l.b16 %v2727
        %v2824 = vunpack.c.l.b16 %v2728
        %v2825 = vunpack.c.l.b16 %v2729
        %v2826 = vunpack.c.l.b16 %v2730
        %v2827 = vunpack.c.l.b16 %v2731
        %v2828 = vunpack.c.l.b16 %v2732
        %v2829 = vunpack.c.l.b16 %v2733
        %v2830 = vunpack.c.l.b16 %v2734
        %v2831 = vpack.c.b16 %v2816, %v2815
        %v2832 = vpack.c.b16 %v2818, %v2817
        %v2833 = vpack.c.b16 %v2820, %v2819
        %v2834 = vpack.c.b16 %v2822, %v2821
        %v2835 = vpack.c.b16 %v2824, %v2823
        %v2836 = vpack.c.b16 %v2826, %v2825
        %v2837 = vpack.c.b16 %v2828, %v2827
        %v2838 = vpack.c.b16 %v2830, %v2829
        %2847 = vmatprep.subr.bf16.mxu0 0
        %2848 = vmatpush1.bf16.msra.mxu0 %v2838
        %2849 = vmatprep.subr.bf16.mxu0 0
        %2850 = vmatpush1.bf16.msra.mxu0 %v2837
        %2851 = vmatprep.subr.bf16.mxu0 0
        %2852 = vmatpush1.bf16.msra.mxu0 %v2836
        %2853 = vmatprep.subr.bf16.mxu0 0
        %2854 = vmatpush1.bf16.msra.mxu0 %v2835
        %2855 = vmatprep.subr.bf16.mxu0 0
        %2856 = vmatpush1.bf16.msra.mxu0 %v2834
        %2857 = vmatprep.subr.bf16.mxu0 0
        %2858 = vmatpush1.bf16.msra.mxu0 %v2833
        %2859 = vmatprep.subr.bf16.mxu0 0
        %2860 = vmatpush1.bf16.msra.mxu0 %v2832
        %2861 = vmatprep.subr.bf16.mxu0 0
        %2862 = vmatpush1.bf16.msra.mxu0 %v2831
        %2863 = vmatprep.subr.bf16.mxu0 0
        %2864 = vmatpush2.bf16.msra.mxu0 0
        %2865 = vmatprep.subr.bf16.mxu0 0
        %2866 = vmatpush2.bf16.msra.mxu0 0
        %2867 = vmatprep.subr.bf16.mxu0 0
        %2868 = vmatpush2.bf16.msra.mxu0 0
        %2869 = vmatprep.subr.bf16.mxu0 0
        %2870 = vmatpush2.bf16.msra.mxu0 0
        %2871 = vmatprep.subr.bf16.mxu0 0
        %2872 = vmatpush2.bf16.msra.mxu0 0
        %2873 = vmatprep.subr.bf16.mxu0 0
        %2874 = vmatpush2.bf16.msra.mxu0 0
        %2875 = vmatprep.subr.bf16.mxu0 0
        %2876 = vmatpush2.bf16.msra.mxu0 0
        %2877 = vmatprep.subr.bf16.mxu0 0
        %2878 = vmatpush2.bf16.msra.mxu0 0
        %2879 = vmatprep.mubr.bf16.mxu0 0
        %2880 = vmatmul.mubr.bf16.gmra.mxu0 %v2767
        %v2881 = vpop.f32.mrf.mxu0
        %v2882 = vadd.f32 0.0, %v2881
        %v2883 = vpop.f32.mrf.mxu0
        %v2884 = vpop.f32.mrf.mxu0
        %v2885 = vadd.f32 0.0, %v2884
        %v2886 = vpop.f32.mrf.mxu0
        %2887 = vmatprep.mubr.bf16.mxu0 0
        %2888 = vmatmul.mubr.bf16.gmra.mxu0 %v2768
        %v2889 = vpop.f32.mrf.mxu0
        %v2890 = vadd.f32 0.0, %v2889
        %v2891 = vpop.f32.mrf.mxu0
        %v2892 = vpop.f32.mrf.mxu0
        %v2893 = vadd.f32 0.0, %v2892
        %v2894 = vpop.f32.mrf.mxu0
        %2895 = vmatprep.mubr.bf16.mxu0 0
        %2896 = vmatmul.mubr.bf16.gmra.mxu0 %v2769
        %v2897 = vpop.f32.mrf.mxu0
        %v2898 = vadd.f32 0.0, %v2897
        %v2899 = vpop.f32.mrf.mxu0
        %v2900 = vpop.f32.mrf.mxu0
        %v2901 = vadd.f32 0.0, %v2900
        %v2902 = vpop.f32.mrf.mxu0
        %2903 = vmatprep.mubr.bf16.mxu0 0
        %2904 = vmatmul.mubr.bf16.gmra.mxu0 %v2770
        %v2905 = vpop.f32.mrf.mxu0
        %v2906 = vadd.f32 0.0, %v2905
        %v2907 = vpop.f32.mrf.mxu0
        %v2908 = vpop.f32.mrf.mxu0
        %v2909 = vadd.f32 0.0, %v2908
        %v2910 = vpop.f32.mrf.mxu0
        %2911 = vmatprep.mubr.bf16.mxu0 0
        %2912 = vmatmul.mubr.bf16.gmra.mxu0 %v2771
        %v2913 = vpop.f32.mrf.mxu0
        %v2914 = vadd.f32 0.0, %v2913
        %v2915 = vpop.f32.mrf.mxu0
        %v2916 = vpop.f32.mrf.mxu0
        %v2917 = vadd.f32 0.0, %v2916
        %v2918 = vpop.f32.mrf.mxu0
        %2919 = vmatprep.mubr.bf16.mxu0 0
        %2920 = vmatmul.mubr.bf16.gmra.mxu0 %v2772
        %v2921 = vpop.f32.mrf.mxu0
        %v2922 = vadd.f32 0.0, %v2921
        %v2923 = vpop.f32.mrf.mxu0
        %v2924 = vpop.f32.mrf.mxu0
        %v2925 = vadd.f32 0.0, %v2924
        %v2926 = vpop.f32.mrf.mxu0
        %2927 = vmatprep.mubr.bf16.mxu0 0
        %2928 = vmatmul.mubr.bf16.gmra.mxu0 %v2773
        %v2929 = vpop.f32.mrf.mxu0
        %v2930 = vadd.f32 0.0, %v2929
        %v2931 = vpop.f32.mrf.mxu0
        %v2932 = vpop.f32.mrf.mxu0
        %v2933 = vadd.f32 0.0, %v2932
        %v2934 = vpop.f32.mrf.mxu0
        %2935 = vmatprep.mubr.bf16.mxu0 0
        %2936 = vmatmul.mubr.bf16.gmra.mxu0 %v2774
        %v2937 = vpop.f32.mrf.mxu0
        %v2938 = vadd.f32 0.0, %v2937
        %v2939 = vpop.f32.mrf.mxu0
        %v2940 = vpop.f32.mrf.mxu0
        %v2941 = vadd.f32 0.0, %v2940
        %v2942 = vpop.f32.mrf.mxu0
        %2943 = vmatprep.mubr.bf16.mxu0 0
        %2944 = vmatmul.mubr.bf16.gmra.mxu0 %v2775
        %v2945 = vpop.f32.mrf.mxu0
        %v2946 = vadd.f32 0.0, %v2945
        %v2947 = vpop.f32.mrf.mxu0
        %v2948 = vpop.f32.mrf.mxu0
        %v2949 = vadd.f32 0.0, %v2948
        %v2950 = vpop.f32.mrf.mxu0
        %2951 = vmatprep.mubr.bf16.mxu0 0
        %2952 = vmatmul.mubr.bf16.gmra.mxu0 %v2776
        %v2953 = vpop.f32.mrf.mxu0
        %v2954 = vadd.f32 0.0, %v2953
        %v2955 = vpop.f32.mrf.mxu0
        %v2956 = vpop.f32.mrf.mxu0
        %v2957 = vadd.f32 0.0, %v2956
        %v2958 = vpop.f32.mrf.mxu0
        %2959 = vmatprep.mubr.bf16.mxu0 0
        %2960 = vmatmul.mubr.bf16.gmra.mxu0 %v2777
        %v2961 = vpop.f32.mrf.mxu0
        %v2962 = vadd.f32 0.0, %v2961
        %v2963 = vpop.f32.mrf.mxu0
        %v2964 = vpop.f32.mrf.mxu0
        %v2965 = vadd.f32 0.0, %v2964
        %v2966 = vpop.f32.mrf.mxu0
        %2967 = vmatprep.mubr.bf16.mxu0 0
        %2968 = vmatmul.mubr.bf16.gmra.mxu0 %v2778
        %v2969 = vpop.f32.mrf.mxu0
        %v2970 = vadd.f32 0.0, %v2969
        %v2971 = vpop.f32.mrf.mxu0
        %v2972 = vpop.f32.mrf.mxu0
        %v2973 = vadd.f32 0.0, %v2972
        %v2974 = vpop.f32.mrf.mxu0
        %2975 = vmatprep.mubr.bf16.mxu0 0
        %2976 = vmatmul.mubr.bf16.gmra.mxu0 %v2779
        %v2977 = vpop.f32.mrf.mxu0
        %v2978 = vadd.f32 0.0, %v2977
        %v2979 = vpop.f32.mrf.mxu0
        %v2980 = vpop.f32.mrf.mxu0
        %v2981 = vadd.f32 0.0, %v2980
        %v2982 = vpop.f32.mrf.mxu0
        %2983 = vmatprep.mubr.bf16.mxu0 0
        %2984 = vmatmul.mubr.bf16.gmra.mxu0 %v2780
        %v2985 = vpop.f32.mrf.mxu0
        %v2986 = vadd.f32 0.0, %v2985
        %v2987 = vpop.f32.mrf.mxu0
        %v2988 = vpop.f32.mrf.mxu0
        %v2989 = vadd.f32 0.0, %v2988
        %v2990 = vpop.f32.mrf.mxu0
        %2991 = vmatprep.mubr.bf16.mxu0 0
        %2992 = vmatmul.mubr.bf16.gmra.mxu0 %v2781
        %v2993 = vpop.f32.mrf.mxu0
        %v2994 = vadd.f32 0.0, %v2993
        %v2995 = vpop.f32.mrf.mxu0
        %v2996 = vpop.f32.mrf.mxu0
        %v2997 = vadd.f32 0.0, %v2996
        %v2998 = vpop.f32.mrf.mxu0
        %2999 = vmatprep.mubr.bf16.mxu0 0
        %3000 = vmatmul.mubr.bf16.gmra.mxu0 %v2782
        %v3001 = vpop.f32.mrf.mxu0
        %v3002 = vadd.f32 0.0, %v3001
        %v3003 = vpop.f32.mrf.mxu0
        %v3004 = vpop.f32.mrf.mxu0
        %v3005 = vadd.f32 0.0, %v3004
        %v3006 = vpop.f32.mrf.mxu0
        %3007 = vdwg.mxu0
        %v3008 = vadd.f32 %v2255, %v2882
        %v3009 = vadd.f32 %v2256, %v2885
        %v3010 = vadd.f32 %v2257, %v2890
        %v3011 = vadd.f32 %v2258, %v2893
        %v3012 = vadd.f32 %v2259, %v2898
        %v3013 = vadd.f32 %v2260, %v2901
        %v3014 = vadd.f32 %v2261, %v2906
        %v3015 = vadd.f32 %v2262, %v2909
        %v3016 = vadd.f32 %v2263, %v2914
        %v3017 = vadd.f32 %v2264, %v2917
        %v3018 = vadd.f32 %v2265, %v2922
        %v3019 = vadd.f32 %v2266, %v2925
        %v3020 = vadd.f32 %v2267, %v2930
        %v3021 = vadd.f32 %v2268, %v2933
        %v3022 = vadd.f32 %v2269, %v2938
        %v3023 = vadd.f32 %v2270, %v2941
        %v3024 = vadd.f32 %v2271, %v2946
        %v3025 = vadd.f32 %v2272, %v2949
        %v3026 = vadd.f32 %v2273, %v2954
        %v3027 = vadd.f32 %v2274, %v2957
        %v3028 = vadd.f32 %v2275, %v2962
        %v3029 = vadd.f32 %v2276, %v2965
        %v3030 = vadd.f32 %v2277, %v2970
        %v3031 = vadd.f32 %v2278, %v2973
        %v3032 = vadd.f32 %v2279, %v2978
        %v3033 = vadd.f32 %v2280, %v2981
        %v3034 = vadd.f32 %v2281, %v2986
        %v3035 = vadd.f32 %v2282, %v2989
        %v3036 = vadd.f32 %v2283, %v2994
        %v3037 = vadd.f32 %v2284, %v2997
        %v3038 = vadd.f32 %v2285, %v3002
        %v3039 = vadd.f32 %v2286, %v3005
        %v3040 = vld [vmem:[%s1901] sm:$0xe]
        %v3041 = vld [vmem:[%s1901 + $0xc] sm:$0xe]
        %v3042 = vld [vmem:[%s1901 + $0x18] sm:$0xe]
        %v3043 = vld [vmem:[%s1901 + $0x24] sm:$0xe]
        %v3044 = vld [vmem:[%s1901 + $0x30] sm:$0xe]
        %v3045 = vld [vmem:[%s1901 + $0x3c] sm:$0xe]
        %v3046 = vld [vmem:[%s1901 + $0x48] sm:$0xe]
        %v3047 = vld [vmem:[%s1901 + $0x54] sm:$0xe]
        %v3048 = vld [vmem:[%s1901 + $0x60] sm:$0xe]
        %v3049 = vld [vmem:[%s1901 + $0x6c] sm:$0xe]
        %v3050 = vld [vmem:[%s1901 + $0x78] sm:$0xe]
        %v3051 = vld [vmem:[%s1901 + $0x84] sm:$0xe]
        %v3052 = vld [vmem:[%s1901 + $0x90] sm:$0xe]
        %v3053 = vld [vmem:[%s1901 + $0x9c] sm:$0xe]
        %v3054 = vld [vmem:[%s1901 + $0xa8] sm:$0xe]
        %v3055 = vld [vmem:[%s1901 + $0xb4] sm:$0xe]
        %v3104 = vrot.slane %v3040, 5
        %v3105 = vrot.slane %v3104, 4
        %v3106 = vrot.slane %v2288, 5
        %v3107 = vsel %vm1464, %v3105, %v3106
        %v3108 = vrot.slane %v3106, 4
        %v3109 = vrot.slane %v2289, 5
        %v3110 = vsel %vm1464, %v3108, %v3109
        %v3111 = vrot.slane %v3041, 5
        %v3112 = vrot.slane %v3111, 4
        %v3113 = vrot.slane %v2291, 5
        %v3114 = vsel %vm1464, %v3112, %v3113
        %v3115 = vrot.slane %v3113, 4
        %v3116 = vrot.slane %v2292, 5
        %v3117 = vsel %vm1464, %v3115, %v3116
        %v3118 = vrot.slane %v3042, 5
        %v3119 = vrot.slane %v3118, 4
        %v3120 = vrot.slane %v2294, 5
        %v3121 = vsel %vm1464, %v3119, %v3120
        %v3122 = vrot.slane %v3120, 4
        %v3123 = vrot.slane %v2295, 5
        %v3124 = vsel %vm1464, %v3122, %v3123
        %v3125 = vrot.slane %v3043, 5
        %v3126 = vrot.slane %v3125, 4
        %v3127 = vrot.slane %v2297, 5
        %v3128 = vsel %vm1464, %v3126, %v3127
        %v3129 = vrot.slane %v3127, 4
        %v3130 = vrot.slane %v2298, 5
        %v3131 = vsel %vm1464, %v3129, %v3130
        %v3132 = vrot.slane %v3044, 5
        %v3133 = vrot.slane %v3132, 4
        %v3134 = vrot.slane %v2300, 5
        %v3135 = vsel %vm1464, %v3133, %v3134
        %v3136 = vrot.slane %v3134, 4
        %v3137 = vrot.slane %v2301, 5
        %v3138 = vsel %vm1464, %v3136, %v3137
        %v3139 = vrot.slane %v3045, 5
        %v3140 = vrot.slane %v3139, 4
        %v3141 = vrot.slane %v2303, 5
        %v3142 = vsel %vm1464, %v3140, %v3141
        %v3143 = vrot.slane %v3141, 4
        %v3144 = vrot.slane %v2304, 5
        %v3145 = vsel %vm1464, %v3143, %v3144
        %v3146 = vrot.slane %v3046, 5
        %v3147 = vrot.slane %v3146, 4
        %v3148 = vrot.slane %v2306, 5
        %v3149 = vsel %vm1464, %v3147, %v3148
        %v3150 = vrot.slane %v3148, 4
        %v3151 = vrot.slane %v2307, 5
        %v3152 = vsel %vm1464, %v3150, %v3151
        %v3153 = vrot.slane %v3047, 5
        %v3154 = vrot.slane %v3153, 4
        %v3155 = vrot.slane %v2309, 5
        %v3156 = vsel %vm1464, %v3154, %v3155
        %v3157 = vrot.slane %v3155, 4
        %v3158 = vrot.slane %v2310, 5
        %v3159 = vsel %vm1464, %v3157, %v3158
        %v3160 = vrot.slane %v3048, 5
        %v3161 = vrot.slane %v3160, 4
        %v3162 = vrot.slane %v2312, 5
        %v3163 = vsel %vm1464, %v3161, %v3162
        %v3164 = vrot.slane %v3162, 4
        %v3165 = vrot.slane %v2313, 5
        %v3166 = vsel %vm1464, %v3164, %v3165
        %v3167 = vrot.slane %v3049, 5
        %v3168 = vrot.slane %v3167, 4
        %v3169 = vrot.slane %v2315, 5
        %v3170 = vsel %vm1464, %v3168, %v3169
        %v3171 = vrot.slane %v3169, 4
        %v3172 = vrot.slane %v2316, 5
        %v3173 = vsel %vm1464, %v3171, %v3172
        %v3174 = vrot.slane %v3050, 5
        %v3175 = vrot.slane %v3174, 4
        %v3176 = vrot.slane %v2318, 5
        %v3177 = vsel %vm1464, %v3175, %v3176
        %v3178 = vrot.slane %v3176, 4
        %v3179 = vrot.slane %v2319, 5
        %v3180 = vsel %vm1464, %v3178, %v3179
        %v3181 = vrot.slane %v3051, 5
        %v3182 = vrot.slane %v3181, 4
        %v3183 = vrot.slane %v2321, 5
        %v3184 = vsel %vm1464, %v3182, %v3183
        %v3185 = vrot.slane %v3183, 4
        %v3186 = vrot.slane %v2322, 5
        %v3187 = vsel %vm1464, %v3185, %v3186
        %v3188 = vrot.slane %v3052, 5
        %v3189 = vrot.slane %v3188, 4
        %v3190 = vrot.slane %v2324, 5
        %v3191 = vsel %vm1464, %v3189, %v3190
        %v3192 = vrot.slane %v3190, 4
        %v3193 = vrot.slane %v2325, 5
        %v3194 = vsel %vm1464, %v3192, %v3193
        %v3195 = vrot.slane %v3053, 5
        %v3196 = vrot.slane %v3195, 4
        %v3197 = vrot.slane %v2327, 5
        %v3198 = vsel %vm1464, %v3196, %v3197
        %v3199 = vrot.slane %v3197, 4
        %v3200 = vrot.slane %v2328, 5
        %v3201 = vsel %vm1464, %v3199, %v3200
        %v3202 = vrot.slane %v3054, 5
        %v3203 = vrot.slane %v3202, 4
        %v3204 = vrot.slane %v2330, 5
        %v3205 = vsel %vm1464, %v3203, %v3204
        %v3206 = vrot.slane %v3204, 4
        %v3207 = vrot.slane %v2331, 5
        %v3208 = vsel %vm1464, %v3206, %v3207
        %v3209 = vrot.slane %v3055, 5
        %v3210 = vrot.slane %v3209, 4
        %v3211 = vrot.slane %v2333, 5
        %v3212 = vsel %vm1464, %v3210, %v3211
        %v3213 = vrot.slane %v3211, 4
        %v3214 = vrot.slane %v2334, 5
        %v3215 = vsel %vm1464, %v3213, %v3214
        %v3216 = vld [vmem:[#allocation4 + $0x140] sm:$0xf]
        %v3217 = vld [vmem:[#allocation4 + $0x144] sm:$0xf]
        %v3218 = vld [vmem:[#allocation4 + $0x148] sm:$0xf]
        %v3219 = vld [vmem:[#allocation4 + $0x14c] sm:$0xf]
        %v3220 = vld [vmem:[#allocation4 + $0x150] sm:$0xf]
        %v3221 = vld [vmem:[#allocation4 + $0x154] sm:$0xf]
        %v3222 = vld [vmem:[#allocation4 + $0x158] sm:$0xf]
        %v3223 = vld [vmem:[#allocation4 + $0x15c] sm:$0xf]
        %v3224 = vld [vmem:[#allocation4 + $0x160] sm:$0xf]
        %v3225 = vld [vmem:[#allocation4 + $0x164] sm:$0xf]
        %v3226 = vld [vmem:[#allocation4 + $0x168] sm:$0xf]
        %v3227 = vld [vmem:[#allocation4 + $0x16c] sm:$0xf]
        %v3228 = vld [vmem:[#allocation4 + $0x170] sm:$0xf]
        %v3229 = vld [vmem:[#allocation4 + $0x174] sm:$0xf]
        %v3230 = vld [vmem:[#allocation4 + $0x178] sm:$0xf]
        %v3231 = vld [vmem:[#allocation4 + $0x17c] sm:$0xf]
        %v3232 = vunpack.c.l.b16 %v3107
        %v3233 = vunpack.c.l.b16 %v3110
        %v3234 = vunpack.c.l.b16 %v3114
        %v3235 = vunpack.c.l.b16 %v3117
        %v3236 = vunpack.c.l.b16 %v3121
        %v3237 = vunpack.c.l.b16 %v3124
        %v3238 = vunpack.c.l.b16 %v3128
        %v3239 = vunpack.c.l.b16 %v3131
        %v3240 = vunpack.c.l.b16 %v3135
        %v3241 = vunpack.c.l.b16 %v3138
        %v3242 = vunpack.c.l.b16 %v3142
        %v3243 = vunpack.c.l.b16 %v3145
        %v3244 = vunpack.c.l.b16 %v3149
        %v3245 = vunpack.c.l.b16 %v3152
        %v3246 = vunpack.c.l.b16 %v3156
        %v3247 = vunpack.c.l.b16 %v3159
        %v3248 = vunpack.c.l.b16 %v3163
        %v3249 = vunpack.c.l.b16 %v3166
        %v3250 = vunpack.c.l.b16 %v3170
        %v3251 = vunpack.c.l.b16 %v3173
        %v3252 = vunpack.c.l.b16 %v3177
        %v3253 = vunpack.c.l.b16 %v3180
        %v3254 = vunpack.c.l.b16 %v3184
        %v3255 = vunpack.c.l.b16 %v3187
        %v3256 = vunpack.c.l.b16 %v3191
        %v3257 = vunpack.c.l.b16 %v3194
        %v3258 = vunpack.c.l.b16 %v3198
        %v3259 = vunpack.c.l.b16 %v3201
        %v3260 = vunpack.c.l.b16 %v3205
        %v3261 = vunpack.c.l.b16 %v3208
        %v3262 = vunpack.c.l.b16 %v3212
        %v3263 = vunpack.c.l.b16 %v3215
        %v3264 = vpack.c.b16 %v3233, %v3232
        %v3265 = vpack.c.b16 %v3235, %v3234
        %v3266 = vpack.c.b16 %v3237, %v3236
        %v3267 = vpack.c.b16 %v3239, %v3238
        %v3268 = vpack.c.b16 %v3241, %v3240
        %v3269 = vpack.c.b16 %v3243, %v3242
        %v3270 = vpack.c.b16 %v3245, %v3244
        %v3271 = vpack.c.b16 %v3247, %v3246
        %v3272 = vpack.c.b16 %v3249, %v3248
        %v3273 = vpack.c.b16 %v3251, %v3250
        %v3274 = vpack.c.b16 %v3253, %v3252
        %v3275 = vpack.c.b16 %v3255, %v3254
        %v3276 = vpack.c.b16 %v3257, %v3256
        %v3277 = vpack.c.b16 %v3259, %v3258
        %v3278 = vpack.c.b16 %v3261, %v3260
        %v3279 = vpack.c.b16 %v3263, %v3262
        %v3312 = vunpack.c.l.b16 %v3216
        %v3313 = vunpack.c.l.b16 %v3217
        %v3314 = vunpack.c.l.b16 %v3218
        %v3315 = vunpack.c.l.b16 %v3219
        %v3316 = vunpack.c.l.b16 %v3220
        %v3317 = vunpack.c.l.b16 %v3221
        %v3318 = vunpack.c.l.b16 %v3222
        %v3319 = vunpack.c.l.b16 %v3223
        %v3320 = vunpack.c.l.b16 %v3224
        %v3321 = vunpack.c.l.b16 %v3225
        %v3322 = vunpack.c.l.b16 %v3226
        %v3323 = vunpack.c.l.b16 %v3227
        %v3324 = vunpack.c.l.b16 %v3228
        %v3325 = vunpack.c.l.b16 %v3229
        %v3326 = vunpack.c.l.b16 %v3230
        %v3327 = vunpack.c.l.b16 %v3231
        %v3328 = vpack.c.b16 %v3313, %v3312
        %v3329 = vpack.c.b16 %v3315, %v3314
        %v3330 = vpack.c.b16 %v3317, %v3316
        %v3331 = vpack.c.b16 %v3319, %v3318
        %v3332 = vpack.c.b16 %v3321, %v3320
        %v3333 = vpack.c.b16 %v3323, %v3322
        %v3334 = vpack.c.b16 %v3325, %v3324
        %v3335 = vpack.c.b16 %v3327, %v3326
        %3344 = vmatprep.subr.bf16.mxu0 0
        %3345 = vmatpush1.bf16.msra.mxu0 %v3335
        %3346 = vmatprep.subr.bf16.mxu0 0
        %3347 = vmatpush1.bf16.msra.mxu0 %v3334
        %3348 = vmatprep.subr.bf16.mxu0 0
        %3349 = vmatpush1.bf16.msra.mxu0 %v3333
        %3350 = vmatprep.subr.bf16.mxu0 0
        %3351 = vmatpush1.bf16.msra.mxu0 %v3332
        %3352 = vmatprep.subr.bf16.mxu0 0
        %3353 = vmatpush1.bf16.msra.mxu0 %v3331
        %3354 = vmatprep.subr.bf16.mxu0 0
        %3355 = vmatpush1.bf16.msra.mxu0 %v3330
        %3356 = vmatprep.subr.bf16.mxu0 0
        %3357 = vmatpush1.bf16.msra.mxu0 %v3329
        %3358 = vmatprep.subr.bf16.mxu0 0
        %3359 = vmatpush1.bf16.msra.mxu0 %v3328
        %3360 = vmatprep.subr.bf16.mxu0 0
        %3361 = vmatpush2.bf16.msra.mxu0 0
        %3362 = vmatprep.subr.bf16.mxu0 0
        %3363 = vmatpush2.bf16.msra.mxu0 0
        %3364 = vmatprep.subr.bf16.mxu0 0
        %3365 = vmatpush2.bf16.msra.mxu0 0
        %3366 = vmatprep.subr.bf16.mxu0 0
        %3367 = vmatpush2.bf16.msra.mxu0 0
        %3368 = vmatprep.subr.bf16.mxu0 0
        %3369 = vmatpush2.bf16.msra.mxu0 0
        %3370 = vmatprep.subr.bf16.mxu0 0
        %3371 = vmatpush2.bf16.msra.mxu0 0
        %3372 = vmatprep.subr.bf16.mxu0 0
        %3373 = vmatpush2.bf16.msra.mxu0 0
        %3374 = vmatprep.subr.bf16.mxu0 0
        %3375 = vmatpush2.bf16.msra.mxu0 0
        %3376 = vmatprep.mubr.bf16.mxu0 0
        %3377 = vmatmul.mubr.bf16.gmra.mxu0 %v3264
        %v3378 = vpop.f32.mrf.mxu0
        %v3379 = vadd.f32 0.0, %v3378
        %v3380 = vpop.f32.mrf.mxu0
        %v3381 = vpop.f32.mrf.mxu0
        %v3382 = vadd.f32 0.0, %v3381
        %v3383 = vpop.f32.mrf.mxu0
        %3384 = vmatprep.mubr.bf16.mxu0 0
        %3385 = vmatmul.mubr.bf16.gmra.mxu0 %v3265
        %v3386 = vpop.f32.mrf.mxu0
        %v3387 = vadd.f32 0.0, %v3386
        %v3388 = vpop.f32.mrf.mxu0
        %v3389 = vpop.f32.mrf.mxu0
        %v3390 = vadd.f32 0.0, %v3389
        %v3391 = vpop.f32.mrf.mxu0
        %3392 = vmatprep.mubr.bf16.mxu0 0
        %3393 = vmatmul.mubr.bf16.gmra.mxu0 %v3266
        %v3394 = vpop.f32.mrf.mxu0
        %v3395 = vadd.f32 0.0, %v3394
        %v3396 = vpop.f32.mrf.mxu0
        %v3397 = vpop.f32.mrf.mxu0
        %v3398 = vadd.f32 0.0, %v3397
        %v3399 = vpop.f32.mrf.mxu0
        %3400 = vmatprep.mubr.bf16.mxu0 0
        %3401 = vmatmul.mubr.bf16.gmra.mxu0 %v3267
        %v3402 = vpop.f32.mrf.mxu0
        %v3403 = vadd.f32 0.0, %v3402
        %v3404 = vpop.f32.mrf.mxu0
        %v3405 = vpop.f32.mrf.mxu0
        %v3406 = vadd.f32 0.0, %v3405
        %v3407 = vpop.f32.mrf.mxu0
        %3408 = vmatprep.mubr.bf16.mxu0 0
        %3409 = vmatmul.mubr.bf16.gmra.mxu0 %v3268
        %v3410 = vpop.f32.mrf.mxu0
        %v3411 = vadd.f32 0.0, %v3410
        %v3412 = vpop.f32.mrf.mxu0
        %v3413 = vpop.f32.mrf.mxu0
        %v3414 = vadd.f32 0.0, %v3413
        %v3415 = vpop.f32.mrf.mxu0
        %3416 = vmatprep.mubr.bf16.mxu0 0
        %3417 = vmatmul.mubr.bf16.gmra.mxu0 %v3269
        %v3418 = vpop.f32.mrf.mxu0
        %v3419 = vadd.f32 0.0, %v3418
        %v3420 = vpop.f32.mrf.mxu0
        %v3421 = vpop.f32.mrf.mxu0
        %v3422 = vadd.f32 0.0, %v3421
        %v3423 = vpop.f32.mrf.mxu0
        %3424 = vmatprep.mubr.bf16.mxu0 0
        %3425 = vmatmul.mubr.bf16.gmra.mxu0 %v3270
        %v3426 = vpop.f32.mrf.mxu0
        %v3427 = vadd.f32 0.0, %v3426
        %v3428 = vpop.f32.mrf.mxu0
        %v3429 = vpop.f32.mrf.mxu0
        %v3430 = vadd.f32 0.0, %v3429
        %v3431 = vpop.f32.mrf.mxu0
        %3432 = vmatprep.mubr.bf16.mxu0 0
        %3433 = vmatmul.mubr.bf16.gmra.mxu0 %v3271
        %v3434 = vpop.f32.mrf.mxu0
        %v3435 = vadd.f32 0.0, %v3434
        %v3436 = vpop.f32.mrf.mxu0
        %v3437 = vpop.f32.mrf.mxu0
        %v3438 = vadd.f32 0.0, %v3437
        %v3439 = vpop.f32.mrf.mxu0
        %3440 = vmatprep.mubr.bf16.mxu0 0
        %3441 = vmatmul.mubr.bf16.gmra.mxu0 %v3272
        %v3442 = vpop.f32.mrf.mxu0
        %v3443 = vadd.f32 0.0, %v3442
        %v3444 = vpop.f32.mrf.mxu0
        %v3445 = vpop.f32.mrf.mxu0
        %v3446 = vadd.f32 0.0, %v3445
        %v3447 = vpop.f32.mrf.mxu0
        %3448 = vmatprep.mubr.bf16.mxu0 0
        %3449 = vmatmul.mubr.bf16.gmra.mxu0 %v3273
        %v3450 = vpop.f32.mrf.mxu0
        %v3451 = vadd.f32 0.0, %v3450
        %v3452 = vpop.f32.mrf.mxu0
        %v3453 = vpop.f32.mrf.mxu0
        %v3454 = vadd.f32 0.0, %v3453
        %v3455 = vpop.f32.mrf.mxu0
        %3456 = vmatprep.mubr.bf16.mxu0 0
        %3457 = vmatmul.mubr.bf16.gmra.mxu0 %v3274
        %v3458 = vpop.f32.mrf.mxu0
        %v3459 = vadd.f32 0.0, %v3458
        %v3460 = vpop.f32.mrf.mxu0
        %v3461 = vpop.f32.mrf.mxu0
        %v3462 = vadd.f32 0.0, %v3461
        %v3463 = vpop.f32.mrf.mxu0
        %3464 = vmatprep.mubr.bf16.mxu0 0
        %3465 = vmatmul.mubr.bf16.gmra.mxu0 %v3275
        %v3466 = vpop.f32.mrf.mxu0
        %v3467 = vadd.f32 0.0, %v3466
        %v3468 = vpop.f32.mrf.mxu0
        %v3469 = vpop.f32.mrf.mxu0
        %v3470 = vadd.f32 0.0, %v3469
        %v3471 = vpop.f32.mrf.mxu0
        %3472 = vmatprep.mubr.bf16.mxu0 0
        %3473 = vmatmul.mubr.bf16.gmra.mxu0 %v3276
        %v3474 = vpop.f32.mrf.mxu0
        %v3475 = vadd.f32 0.0, %v3474
        %v3476 = vpop.f32.mrf.mxu0
        %v3477 = vpop.f32.mrf.mxu0
        %v3478 = vadd.f32 0.0, %v3477
        %v3479 = vpop.f32.mrf.mxu0
        %3480 = vmatprep.mubr.bf16.mxu0 0
        %3481 = vmatmul.mubr.bf16.gmra.mxu0 %v3277
        %v3482 = vpop.f32.mrf.mxu0
        %v3483 = vadd.f32 0.0, %v3482
        %v3484 = vpop.f32.mrf.mxu0
        %v3485 = vpop.f32.mrf.mxu0
        %v3486 = vadd.f32 0.0, %v3485
        %v3487 = vpop.f32.mrf.mxu0
        %3488 = vmatprep.mubr.bf16.mxu0 0
        %3489 = vmatmul.mubr.bf16.gmra.mxu0 %v3278
        %v3490 = vpop.f32.mrf.mxu0
        %v3491 = vadd.f32 0.0, %v3490
        %v3492 = vpop.f32.mrf.mxu0
        %v3493 = vpop.f32.mrf.mxu0
        %v3494 = vadd.f32 0.0, %v3493
        %v3495 = vpop.f32.mrf.mxu0
        %3496 = vmatprep.mubr.bf16.mxu0 0
        %3497 = vmatmul.mubr.bf16.gmra.mxu0 %v3279
        %v3498 = vpop.f32.mrf.mxu0
        %v3499 = vadd.f32 0.0, %v3498
        %v3500 = vpop.f32.mrf.mxu0
        %v3501 = vpop.f32.mrf.mxu0
        %v3502 = vadd.f32 0.0, %v3501
        %v3503 = vpop.f32.mrf.mxu0
        %3504 = vdwg.mxu0
        %v3505 = vadd.f32 %v3008, %v3379
        %v3506 = vadd.f32 %v3009, %v3382
        %v3507 = vadd.f32 %v3010, %v3387
        %v3508 = vadd.f32 %v3011, %v3390
        %v3509 = vadd.f32 %v3012, %v3395
        %v3510 = vadd.f32 %v3013, %v3398
        %v3511 = vadd.f32 %v3014, %v3403
        %v3512 = vadd.f32 %v3015, %v3406
        %v3513 = vadd.f32 %v3016, %v3411
        %v3514 = vadd.f32 %v3017, %v3414
        %v3515 = vadd.f32 %v3018, %v3419
        %v3516 = vadd.f32 %v3019, %v3422
        %v3517 = vadd.f32 %v3020, %v3427
        %v3518 = vadd.f32 %v3021, %v3430
        %v3519 = vadd.f32 %v3022, %v3435
        %v3520 = vadd.f32 %v3023, %v3438
        %v3521 = vadd.f32 %v3024, %v3443
        %v3522 = vadd.f32 %v3025, %v3446
        %v3523 = vadd.f32 %v3026, %v3451
        %v3524 = vadd.f32 %v3027, %v3454
        %v3525 = vadd.f32 %v3028, %v3459
        %v3526 = vadd.f32 %v3029, %v3462
        %v3527 = vadd.f32 %v3030, %v3467
        %v3528 = vadd.f32 %v3031, %v3470
        %v3529 = vadd.f32 %v3032, %v3475
        %v3530 = vadd.f32 %v3033, %v3478
        %v3531 = vadd.f32 %v3034, %v3483
        %v3532 = vadd.f32 %v3035, %v3486
        %v3533 = vadd.f32 %v3036, %v3491
        %v3534 = vadd.f32 %v3037, %v3494
        %v3535 = vadd.f32 %v3038, %v3499
        %v3536 = vadd.f32 %v3039, %v3502
        %s3537 = sadd.s32 %s365, 2
        %s3538 = smul.u32 %s3537, 3
        %s3539 = smul.addr %s3538, 4
        %s3540 = scalar_lea.vmem [#allocation2], %s3539
        %v3541 = vld [vmem:[%s3540] sm:$0xf]
        %v3542 = vld [vmem:[%s3540 + $0x4] sm:$0xf]
        %v3543 = vld [vmem:[%s3540 + $0xc] sm:$0xf]
        %v3544 = vld [vmem:[%s3540 + $0x10] sm:$0xf]
        %v3545 = vld [vmem:[%s3540 + $0x18] sm:$0xf]
        %v3546 = vld [vmem:[%s3540 + $0x1c] sm:$0xf]
        %v3547 = vld [vmem:[%s3540 + $0x24] sm:$0xf]
        %v3548 = vld [vmem:[%s3540 + $0x28] sm:$0xf]
        %v3549 = vld [vmem:[%s3540 + $0x30] sm:$0xf]
        %v3550 = vld [vmem:[%s3540 + $0x34] sm:$0xf]
        %v3551 = vld [vmem:[%s3540 + $0x3c] sm:$0xf]
        %v3552 = vld [vmem:[%s3540 + $0x40] sm:$0xf]
        %v3553 = vld [vmem:[%s3540 + $0x48] sm:$0xf]
        %v3554 = vld [vmem:[%s3540 + $0x4c] sm:$0xf]
        %v3555 = vld [vmem:[%s3540 + $0x54] sm:$0xf]
        %v3556 = vld [vmem:[%s3540 + $0x58] sm:$0xf]
        %v3557 = vld [vmem:[%s3540 + $0x60] sm:$0xf]
        %v3558 = vld [vmem:[%s3540 + $0x64] sm:$0xf]
        %v3559 = vld [vmem:[%s3540 + $0x6c] sm:$0xf]
        %v3560 = vld [vmem:[%s3540 + $0x70] sm:$0xf]
        %v3561 = vld [vmem:[%s3540 + $0x78] sm:$0xf]
        %v3562 = vld [vmem:[%s3540 + $0x7c] sm:$0xf]
        %v3563 = vld [vmem:[%s3540 + $0x84] sm:$0xf]
        %v3564 = vld [vmem:[%s3540 + $0x88] sm:$0xf]
        %v3565 = vld [vmem:[%s3540 + $0x90] sm:$0xf]
        %v3566 = vld [vmem:[%s3540 + $0x94] sm:$0xf]
        %v3567 = vld [vmem:[%s3540 + $0x9c] sm:$0xf]
        %v3568 = vld [vmem:[%s3540 + $0xa0] sm:$0xf]
        %v3569 = vld [vmem:[%s3540 + $0xa8] sm:$0xf]
        %v3570 = vld [vmem:[%s3540 + $0xac] sm:$0xf]
        %v3571 = vld [vmem:[%s3540 + $0xb4] sm:$0xf]
        %v3572 = vld [vmem:[%s3540 + $0xb8] sm:$0xf]
        %v3573 = vld [vmem:[#allocation4 + $0x180] sm:$0xf]
        %v3574 = vld [vmem:[#allocation4 + $0x184] sm:$0xf]
        %v3575 = vld [vmem:[#allocation4 + $0x188] sm:$0xf]
        %v3576 = vld [vmem:[#allocation4 + $0x18c] sm:$0xf]
        %v3577 = vld [vmem:[#allocation4 + $0x190] sm:$0xf]
        %v3578 = vld [vmem:[#allocation4 + $0x194] sm:$0xf]
        %v3579 = vld [vmem:[#allocation4 + $0x198] sm:$0xf]
        %v3580 = vld [vmem:[#allocation4 + $0x19c] sm:$0xf]
        %v3581 = vld [vmem:[#allocation4 + $0x1a0] sm:$0xf]
        %v3582 = vld [vmem:[#allocation4 + $0x1a4] sm:$0xf]
        %v3583 = vld [vmem:[#allocation4 + $0x1a8] sm:$0xf]
        %v3584 = vld [vmem:[#allocation4 + $0x1ac] sm:$0xf]
        %v3585 = vld [vmem:[#allocation4 + $0x1b0] sm:$0xf]
        %v3586 = vld [vmem:[#allocation4 + $0x1b4] sm:$0xf]
        %v3587 = vld [vmem:[#allocation4 + $0x1b8] sm:$0xf]
        %v3588 = vld [vmem:[#allocation4 + $0x1bc] sm:$0xf]
        %v3621 = vunpack.c.l.b16 %v3541
        %v3622 = vunpack.c.l.b16 %v3542
        %v3623 = vunpack.c.l.b16 %v3543
        %v3624 = vunpack.c.l.b16 %v3544
        %v3625 = vunpack.c.l.b16 %v3545
        %v3626 = vunpack.c.l.b16 %v3546
        %v3627 = vunpack.c.l.b16 %v3547
        %v3628 = vunpack.c.l.b16 %v3548
        %v3629 = vunpack.c.l.b16 %v3549
        %v3630 = vunpack.c.l.b16 %v3550
        %v3631 = vunpack.c.l.b16 %v3551
        %v3632 = vunpack.c.l.b16 %v3552
        %v3633 = vunpack.c.l.b16 %v3553
        %v3634 = vunpack.c.l.b16 %v3554
        %v3635 = vunpack.c.l.b16 %v3555
        %v3636 = vunpack.c.l.b16 %v3556
        %v3637 = vunpack.c.l.b16 %v3557
        %v3638 = vunpack.c.l.b16 %v3558
        %v3639 = vunpack.c.l.b16 %v3559
        %v3640 = vunpack.c.l.b16 %v3560
        %v3641 = vunpack.c.l.b16 %v3561
        %v3642 = vunpack.c.l.b16 %v3562
        %v3643 = vunpack.c.l.b16 %v3563
        %v3644 = vunpack.c.l.b16 %v3564
        %v3645 = vunpack.c.l.b16 %v3565
        %v3646 = vunpack.c.l.b16 %v3566
        %v3647 = vunpack.c.l.b16 %v3567
        %v3648 = vunpack.c.l.b16 %v3568
        %v3649 = vunpack.c.l.b16 %v3569
        %v3650 = vunpack.c.l.b16 %v3570
        %v3651 = vunpack.c.l.b16 %v3571
        %v3652 = vunpack.c.l.b16 %v3572
        %v3653 = vpack.c.b16 %v3622, %v3621
        %v3654 = vpack.c.b16 %v3624, %v3623
        %v3655 = vpack.c.b16 %v3626, %v3625
        %v3656 = vpack.c.b16 %v3628, %v3627
        %v3657 = vpack.c.b16 %v3630, %v3629
        %v3658 = vpack.c.b16 %v3632, %v3631
        %v3659 = vpack.c.b16 %v3634, %v3633
        %v3660 = vpack.c.b16 %v3636, %v3635
        %v3661 = vpack.c.b16 %v3638, %v3637
        %v3662 = vpack.c.b16 %v3640, %v3639
        %v3663 = vpack.c.b16 %v3642, %v3641
        %v3664 = vpack.c.b16 %v3644, %v3643
        %v3665 = vpack.c.b16 %v3646, %v3645
        %v3666 = vpack.c.b16 %v3648, %v3647
        %v3667 = vpack.c.b16 %v3650, %v3649
        %v3668 = vpack.c.b16 %v3652, %v3651
        %v3701 = vunpack.c.l.b16 %v3573
        %v3702 = vunpack.c.l.b16 %v3574
        %v3703 = vunpack.c.l.b16 %v3575
        %v3704 = vunpack.c.l.b16 %v3576
        %v3705 = vunpack.c.l.b16 %v3577
        %v3706 = vunpack.c.l.b16 %v3578
        %v3707 = vunpack.c.l.b16 %v3579
        %v3708 = vunpack.c.l.b16 %v3580
        %v3709 = vunpack.c.l.b16 %v3581
        %v3710 = vunpack.c.l.b16 %v3582
        %v3711 = vunpack.c.l.b16 %v3583
        %v3712 = vunpack.c.l.b16 %v3584
        %v3713 = vunpack.c.l.b16 %v3585
        %v3714 = vunpack.c.l.b16 %v3586
        %v3715 = vunpack.c.l.b16 %v3587
        %v3716 = vunpack.c.l.b16 %v3588
        %v3717 = vpack.c.b16 %v3702, %v3701
        %v3718 = vpack.c.b16 %v3704, %v3703
        %v3719 = vpack.c.b16 %v3706, %v3705
        %v3720 = vpack.c.b16 %v3708, %v3707
        %v3721 = vpack.c.b16 %v3710, %v3709
        %v3722 = vpack.c.b16 %v3712, %v3711
        %v3723 = vpack.c.b16 %v3714, %v3713
        %v3724 = vpack.c.b16 %v3716, %v3715
        %3733 = vmatprep.subr.bf16.mxu0 0
        %3734 = vmatpush1.bf16.msra.mxu0 %v3724
        %3735 = vmatprep.subr.bf16.mxu0 0
        %3736 = vmatpush1.bf16.msra.mxu0 %v3723
        %3737 = vmatprep.subr.bf16.mxu0 0
        %3738 = vmatpush1.bf16.msra.mxu0 %v3722
        %3739 = vmatprep.subr.bf16.mxu0 0
        %3740 = vmatpush1.bf16.msra.mxu0 %v3721
        %3741 = vmatprep.subr.bf16.mxu0 0
        %3742 = vmatpush1.bf16.msra.mxu0 %v3720
        %3743 = vmatprep.subr.bf16.mxu0 0
        %3744 = vmatpush1.bf16.msra.mxu0 %v3719
        %3745 = vmatprep.subr.bf16.mxu0 0
        %3746 = vmatpush1.bf16.msra.mxu0 %v3718
        %3747 = vmatprep.subr.bf16.mxu0 0
        %3748 = vmatpush1.bf16.msra.mxu0 %v3717
        %3749 = vmatprep.subr.bf16.mxu0 0
        %3750 = vmatpush2.bf16.msra.mxu0 0
        %3751 = vmatprep.subr.bf16.mxu0 0
        %3752 = vmatpush2.bf16.msra.mxu0 0
        %3753 = vmatprep.subr.bf16.mxu0 0
        %3754 = vmatpush2.bf16.msra.mxu0 0
        %3755 = vmatprep.subr.bf16.mxu0 0
        %3756 = vmatpush2.bf16.msra.mxu0 0
        %3757 = vmatprep.subr.bf16.mxu0 0
        %3758 = vmatpush2.bf16.msra.mxu0 0
        %3759 = vmatprep.subr.bf16.mxu0 0
        %3760 = vmatpush2.bf16.msra.mxu0 0
        %3761 = vmatprep.subr.bf16.mxu0 0
        %3762 = vmatpush2.bf16.msra.mxu0 0
        %3763 = vmatprep.subr.bf16.mxu0 0
        %3764 = vmatpush2.bf16.msra.mxu0 0
        %3765 = vmatprep.mubr.bf16.mxu0 0
        %3766 = vmatmul.mubr.bf16.gmra.mxu0 %v3653
        %v3767 = vpop.f32.mrf.mxu0
        %v3768 = vadd.f32 0.0, %v3767
        %v3769 = vpop.f32.mrf.mxu0
        %v3770 = vpop.f32.mrf.mxu0
        %v3771 = vadd.f32 0.0, %v3770
        %v3772 = vpop.f32.mrf.mxu0
        %3773 = vmatprep.mubr.bf16.mxu0 0
        %3774 = vmatmul.mubr.bf16.gmra.mxu0 %v3654
        %v3775 = vpop.f32.mrf.mxu0
        %v3776 = vadd.f32 0.0, %v3775
        %v3777 = vpop.f32.mrf.mxu0
        %v3778 = vpop.f32.mrf.mxu0
        %v3779 = vadd.f32 0.0, %v3778
        %v3780 = vpop.f32.mrf.mxu0
        %3781 = vmatprep.mubr.bf16.mxu0 0
        %3782 = vmatmul.mubr.bf16.gmra.mxu0 %v3655
        %v3783 = vpop.f32.mrf.mxu0
        %v3784 = vadd.f32 0.0, %v3783
        %v3785 = vpop.f32.mrf.mxu0
        %v3786 = vpop.f32.mrf.mxu0
        %v3787 = vadd.f32 0.0, %v3786
        %v3788 = vpop.f32.mrf.mxu0
        %3789 = vmatprep.mubr.bf16.mxu0 0
        %3790 = vmatmul.mubr.bf16.gmra.mxu0 %v3656
        %v3791 = vpop.f32.mrf.mxu0
        %v3792 = vadd.f32 0.0, %v3791
        %v3793 = vpop.f32.mrf.mxu0
        %v3794 = vpop.f32.mrf.mxu0
        %v3795 = vadd.f32 0.0, %v3794
        %v3796 = vpop.f32.mrf.mxu0
        %3797 = vmatprep.mubr.bf16.mxu0 0
        %3798 = vmatmul.mubr.bf16.gmra.mxu0 %v3657
        %v3799 = vpop.f32.mrf.mxu0
        %v3800 = vadd.f32 0.0, %v3799
        %v3801 = vpop.f32.mrf.mxu0
        %v3802 = vpop.f32.mrf.mxu0
        %v3803 = vadd.f32 0.0, %v3802
        %v3804 = vpop.f32.mrf.mxu0
        %3805 = vmatprep.mubr.bf16.mxu0 0
        %3806 = vmatmul.mubr.bf16.gmra.mxu0 %v3658
        %v3807 = vpop.f32.mrf.mxu0
        %v3808 = vadd.f32 0.0, %v3807
        %v3809 = vpop.f32.mrf.mxu0
        %v3810 = vpop.f32.mrf.mxu0
        %v3811 = vadd.f32 0.0, %v3810
        %v3812 = vpop.f32.mrf.mxu0
        %3813 = vmatprep.mubr.bf16.mxu0 0
        %3814 = vmatmul.mubr.bf16.gmra.mxu0 %v3659
        %v3815 = vpop.f32.mrf.mxu0
        %v3816 = vadd.f32 0.0, %v3815
        %v3817 = vpop.f32.mrf.mxu0
        %v3818 = vpop.f32.mrf.mxu0
        %v3819 = vadd.f32 0.0, %v3818
        %v3820 = vpop.f32.mrf.mxu0
        %3821 = vmatprep.mubr.bf16.mxu0 0
        %3822 = vmatmul.mubr.bf16.gmra.mxu0 %v3660
        %v3823 = vpop.f32.mrf.mxu0
        %v3824 = vadd.f32 0.0, %v3823
        %v3825 = vpop.f32.mrf.mxu0
        %v3826 = vpop.f32.mrf.mxu0
        %v3827 = vadd.f32 0.0, %v3826
        %v3828 = vpop.f32.mrf.mxu0
        %3829 = vmatprep.mubr.bf16.mxu0 0
        %3830 = vmatmul.mubr.bf16.gmra.mxu0 %v3661
        %v3831 = vpop.f32.mrf.mxu0
        %v3832 = vadd.f32 0.0, %v3831
        %v3833 = vpop.f32.mrf.mxu0
        %v3834 = vpop.f32.mrf.mxu0
        %v3835 = vadd.f32 0.0, %v3834
        %v3836 = vpop.f32.mrf.mxu0
        %3837 = vmatprep.mubr.bf16.mxu0 0
        %3838 = vmatmul.mubr.bf16.gmra.mxu0 %v3662
        %v3839 = vpop.f32.mrf.mxu0
        %v3840 = vadd.f32 0.0, %v3839
        %v3841 = vpop.f32.mrf.mxu0
        %v3842 = vpop.f32.mrf.mxu0
        %v3843 = vadd.f32 0.0, %v3842
        %v3844 = vpop.f32.mrf.mxu0
        %3845 = vmatprep.mubr.bf16.mxu0 0
        %3846 = vmatmul.mubr.bf16.gmra.mxu0 %v3663
        %v3847 = vpop.f32.mrf.mxu0
        %v3848 = vadd.f32 0.0, %v3847
        %v3849 = vpop.f32.mrf.mxu0
        %v3850 = vpop.f32.mrf.mxu0
        %v3851 = vadd.f32 0.0, %v3850
        %v3852 = vpop.f32.mrf.mxu0
        %3853 = vmatprep.mubr.bf16.mxu0 0
        %3854 = vmatmul.mubr.bf16.gmra.mxu0 %v3664
        %v3855 = vpop.f32.mrf.mxu0
        %v3856 = vadd.f32 0.0, %v3855
        %v3857 = vpop.f32.mrf.mxu0
        %v3858 = vpop.f32.mrf.mxu0
        %v3859 = vadd.f32 0.0, %v3858
        %v3860 = vpop.f32.mrf.mxu0
        %3861 = vmatprep.mubr.bf16.mxu0 0
        %3862 = vmatmul.mubr.bf16.gmra.mxu0 %v3665
        %v3863 = vpop.f32.mrf.mxu0
        %v3864 = vadd.f32 0.0, %v3863
        %v3865 = vpop.f32.mrf.mxu0
        %v3866 = vpop.f32.mrf.mxu0
        %v3867 = vadd.f32 0.0, %v3866
        %v3868 = vpop.f32.mrf.mxu0
        %3869 = vmatprep.mubr.bf16.mxu0 0
        %3870 = vmatmul.mubr.bf16.gmra.mxu0 %v3666
        %v3871 = vpop.f32.mrf.mxu0
        %v3872 = vadd.f32 0.0, %v3871
        %v3873 = vpop.f32.mrf.mxu0
        %v3874 = vpop.f32.mrf.mxu0
        %v3875 = vadd.f32 0.0, %v3874
        %v3876 = vpop.f32.mrf.mxu0
        %3877 = vmatprep.mubr.bf16.mxu0 0
        %3878 = vmatmul.mubr.bf16.gmra.mxu0 %v3667
        %v3879 = vpop.f32.mrf.mxu0
        %v3880 = vadd.f32 0.0, %v3879
        %v3881 = vpop.f32.mrf.mxu0
        %v3882 = vpop.f32.mrf.mxu0
        %v3883 = vadd.f32 0.0, %v3882
        %v3884 = vpop.f32.mrf.mxu0
        %3885 = vmatprep.mubr.bf16.mxu0 0
        %3886 = vmatmul.mubr.bf16.gmra.mxu0 %v3668
        %v3887 = vpop.f32.mrf.mxu0
        %v3888 = vadd.f32 0.0, %v3887
        %v3889 = vpop.f32.mrf.mxu0
        %v3890 = vpop.f32.mrf.mxu0
        %v3891 = vadd.f32 0.0, %v3890
        %v3892 = vpop.f32.mrf.mxu0
        %3893 = vdwg.mxu0
        %v3894 = vadd.f32 %v3505, %v3768
        %v3895 = vadd.f32 %v3506, %v3771
        %v3896 = vadd.f32 %v3507, %v3776
        %v3897 = vadd.f32 %v3508, %v3779
        %v3898 = vadd.f32 %v3509, %v3784
        %v3899 = vadd.f32 %v3510, %v3787
        %v3900 = vadd.f32 %v3511, %v3792
        %v3901 = vadd.f32 %v3512, %v3795
        %v3902 = vadd.f32 %v3513, %v3800
        %v3903 = vadd.f32 %v3514, %v3803
        %v3904 = vadd.f32 %v3515, %v3808
        %v3905 = vadd.f32 %v3516, %v3811
        %v3906 = vadd.f32 %v3517, %v3816
        %v3907 = vadd.f32 %v3518, %v3819
        %v3908 = vadd.f32 %v3519, %v3824
        %v3909 = vadd.f32 %v3520, %v3827
        %v3910 = vadd.f32 %v3521, %v3832
        %v3911 = vadd.f32 %v3522, %v3835
        %v3912 = vadd.f32 %v3523, %v3840
        %v3913 = vadd.f32 %v3524, %v3843
        %v3914 = vadd.f32 %v3525, %v3848
        %v3915 = vadd.f32 %v3526, %v3851
        %v3916 = vadd.f32 %v3527, %v3856
        %v3917 = vadd.f32 %v3528, %v3859
        %v3918 = vadd.f32 %v3529, %v3864
        %v3919 = vadd.f32 %v3530, %v3867
        %v3920 = vadd.f32 %v3531, %v3872
        %v3921 = vadd.f32 %v3532, %v3875
        %v3922 = vadd.f32 %v3533, %v3880
        %v3923 = vadd.f32 %v3534, %v3883
        %v3924 = vadd.f32 %v3535, %v3888
        %v3925 = vadd.f32 %v3536, %v3891
        %v3926 = vld [vmem:[%s3540] sm:$0xf]
        %v3927 = vld [vmem:[%s3540 + $0x4] sm:$0xf]
        %v3928 = vld [vmem:[%s3540 + $0x8] sm:$0x1]
        %v3929 = vld [vmem:[%s3540 + $0xc] sm:$0xf]
        %v3930 = vld [vmem:[%s3540 + $0x10] sm:$0xf]
        %v3931 = vld [vmem:[%s3540 + $0x14] sm:$0x1]
        %v3932 = vld [vmem:[%s3540 + $0x18] sm:$0xf]
        %v3933 = vld [vmem:[%s3540 + $0x1c] sm:$0xf]
        %v3934 = vld [vmem:[%s3540 + $0x20] sm:$0x1]
        %v3935 = vld [vmem:[%s3540 + $0x24] sm:$0xf]
        %v3936 = vld [vmem:[%s3540 + $0x28] sm:$0xf]
        %v3937 = vld [vmem:[%s3540 + $0x2c] sm:$0x1]
        %v3938 = vld [vmem:[%s3540 + $0x30] sm:$0xf]
        %v3939 = vld [vmem:[%s3540 + $0x34] sm:$0xf]
        %v3940 = vld [vmem:[%s3540 + $0x38] sm:$0x1]
        %v3941 = vld [vmem:[%s3540 + $0x3c] sm:$0xf]
        %v3942 = vld [vmem:[%s3540 + $0x40] sm:$0xf]
        %v3943 = vld [vmem:[%s3540 + $0x44] sm:$0x1]
        %v3944 = vld [vmem:[%s3540 + $0x48] sm:$0xf]
        %v3945 = vld [vmem:[%s3540 + $0x4c] sm:$0xf]
        %v3946 = vld [vmem:[%s3540 + $0x50] sm:$0x1]
        %v3947 = vld [vmem:[%s3540 + $0x54] sm:$0xf]
        %v3948 = vld [vmem:[%s3540 + $0x58] sm:$0xf]
        %v3949 = vld [vmem:[%s3540 + $0x5c] sm:$0x1]
        %v3950 = vld [vmem:[%s3540 + $0x60] sm:$0xf]
        %v3951 = vld [vmem:[%s3540 + $0x64] sm:$0xf]
        %v3952 = vld [vmem:[%s3540 + $0x68] sm:$0x1]
        %v3953 = vld [vmem:[%s3540 + $0x6c] sm:$0xf]
        %v3954 = vld [vmem:[%s3540 + $0x70] sm:$0xf]
        %v3955 = vld [vmem:[%s3540 + $0x74] sm:$0x1]
        %v3956 = vld [vmem:[%s3540 + $0x78] sm:$0xf]
        %v3957 = vld [vmem:[%s3540 + $0x7c] sm:$0xf]
        %v3958 = vld [vmem:[%s3540 + $0x80] sm:$0x1]
        %v3959 = vld [vmem:[%s3540 + $0x84] sm:$0xf]
        %v3960 = vld [vmem:[%s3540 + $0x88] sm:$0xf]
        %v3961 = vld [vmem:[%s3540 + $0x8c] sm:$0x1]
        %v3962 = vld [vmem:[%s3540 + $0x90] sm:$0xf]
        %v3963 = vld [vmem:[%s3540 + $0x94] sm:$0xf]
        %v3964 = vld [vmem:[%s3540 + $0x98] sm:$0x1]
        %v3965 = vld [vmem:[%s3540 + $0x9c] sm:$0xf]
        %v3966 = vld [vmem:[%s3540 + $0xa0] sm:$0xf]
        %v3967 = vld [vmem:[%s3540 + $0xa4] sm:$0x1]
        %v3968 = vld [vmem:[%s3540 + $0xa8] sm:$0xf]
        %v3969 = vld [vmem:[%s3540 + $0xac] sm:$0xf]
        %v3970 = vld [vmem:[%s3540 + $0xb0] sm:$0x1]
        %v3971 = vld [vmem:[%s3540 + $0xb4] sm:$0xf]
        %v3972 = vld [vmem:[%s3540 + $0xb8] sm:$0xf]
        %v3973 = vld [vmem:[%s3540 + $0xbc] sm:$0x1]
        %v3975 = vshrl.u32 %v3926, 16
        %v3977 = vrot.slane %v3975, 4
        %v3978 = vshll.u32 %v3926, 16
        %v3980 = vrot.slane %v3978, 5
        %v3981 = vor.u32 %v3977, %v3980
        %v3982 = vrot.slane %v3981, 4
        %v3984 = vshll.u32 %v3927, 16
        %v3986 = vrot.slane %v3984, 5
        %v3987 = vsel %vm435, %v3982, %v3986
        %v3988 = vshrl.u32 %v3927, 16
        %v3990 = vrot.slane %v3988, 4
        %v3991 = vor.u32 %v3990, %v3986
        %v3992 = vrot.slane %v3991, 4
        %v3994 = vshll.u32 %v3928, 16
        %v3996 = vrot.slane %v3994, 5
        %v3997 = vsel %vm435, %v3992, %v3996
        %v3999 = vshrl.u32 %v3929, 16
        %v4001 = vrot.slane %v3999, 4
        %v4002 = vshll.u32 %v3929, 16
        %v4004 = vrot.slane %v4002, 5
        %v4005 = vor.u32 %v4001, %v4004
        %v4006 = vrot.slane %v4005, 4
        %v4008 = vshll.u32 %v3930, 16
        %v4010 = vrot.slane %v4008, 5
        %v4011 = vsel %vm435, %v4006, %v4010
        %v4012 = vshrl.u32 %v3930, 16
        %v4014 = vrot.slane %v4012, 4
        %v4015 = vor.u32 %v4014, %v4010
        %v4016 = vrot.slane %v4015, 4
        %v4018 = vshll.u32 %v3931, 16
        %v4020 = vrot.slane %v4018, 5
        %v4021 = vsel %vm435, %v4016, %v4020
        %v4023 = vshrl.u32 %v3932, 16
        %v4025 = vrot.slane %v4023, 4
        %v4026 = vshll.u32 %v3932, 16
        %v4028 = vrot.slane %v4026, 5
        %v4029 = vor.u32 %v4025, %v4028
        %v4030 = vrot.slane %v4029, 4
        %v4032 = vshll.u32 %v3933, 16
        %v4034 = vrot.slane %v4032, 5
        %v4035 = vsel %vm435, %v4030, %v4034
        %v4036 = vshrl.u32 %v3933, 16
        %v4038 = vrot.slane %v4036, 4
        %v4039 = vor.u32 %v4038, %v4034
        %v4040 = vrot.slane %v4039, 4
        %v4042 = vshll.u32 %v3934, 16
        %v4044 = vrot.slane %v4042, 5
        %v4045 = vsel %vm435, %v4040, %v4044
        %v4047 = vshrl.u32 %v3935, 16
        %v4049 = vrot.slane %v4047, 4
        %v4050 = vshll.u32 %v3935, 16
        %v4052 = vrot.slane %v4050, 5
        %v4053 = vor.u32 %v4049, %v4052
        %v4054 = vrot.slane %v4053, 4
        %v4056 = vshll.u32 %v3936, 16
        %v4058 = vrot.slane %v4056, 5
        %v4059 = vsel %vm435, %v4054, %v4058
        %v4060 = vshrl.u32 %v3936, 16
        %v4062 = vrot.slane %v4060, 4
        %v4063 = vor.u32 %v4062, %v4058
        %v4064 = vrot.slane %v4063, 4
        %v4066 = vshll.u32 %v3937, 16
        %v4068 = vrot.slane %v4066, 5
        %v4069 = vsel %vm435, %v4064, %v4068
        %v4071 = vshrl.u32 %v3938, 16
        %v4073 = vrot.slane %v4071, 4
        %v4074 = vshll.u32 %v3938, 16
        %v4076 = vrot.slane %v4074, 5
        %v4077 = vor.u32 %v4073, %v4076
        %v4078 = vrot.slane %v4077, 4
        %v4080 = vshll.u32 %v3939, 16
        %v4082 = vrot.slane %v4080, 5
        %v4083 = vsel %vm435, %v4078, %v4082
        %v4084 = vshrl.u32 %v3939, 16
        %v4086 = vrot.slane %v4084, 4
        %v4087 = vor.u32 %v4086, %v4082
        %v4088 = vrot.slane %v4087, 4
        %v4090 = vshll.u32 %v3940, 16
        %v4092 = vrot.slane %v4090, 5
        %v4093 = vsel %vm435, %v4088, %v4092
        %v4095 = vshrl.u32 %v3941, 16
        %v4097 = vrot.slane %v4095, 4
        %v4098 = vshll.u32 %v3941, 16
        %v4100 = vrot.slane %v4098, 5
        %v4101 = vor.u32 %v4097, %v4100
        %v4102 = vrot.slane %v4101, 4
        %v4104 = vshll.u32 %v3942, 16
        %v4106 = vrot.slane %v4104, 5
        %v4107 = vsel %vm435, %v4102, %v4106
        %v4108 = vshrl.u32 %v3942, 16
        %v4110 = vrot.slane %v4108, 4
        %v4111 = vor.u32 %v4110, %v4106
        %v4112 = vrot.slane %v4111, 4
        %v4114 = vshll.u32 %v3943, 16
        %v4116 = vrot.slane %v4114, 5
        %v4117 = vsel %vm435, %v4112, %v4116
        %v4119 = vshrl.u32 %v3944, 16
        %v4121 = vrot.slane %v4119, 4
        %v4122 = vshll.u32 %v3944, 16
        %v4124 = vrot.slane %v4122, 5
        %v4125 = vor.u32 %v4121, %v4124
        %v4126 = vrot.slane %v4125, 4
        %v4128 = vshll.u32 %v3945, 16
        %v4130 = vrot.slane %v4128, 5
        %v4131 = vsel %vm435, %v4126, %v4130
        %v4132 = vshrl.u32 %v3945, 16
        %v4134 = vrot.slane %v4132, 4
        %v4135 = vor.u32 %v4134, %v4130
        %v4136 = vrot.slane %v4135, 4
        %v4138 = vshll.u32 %v3946, 16
        %v4140 = vrot.slane %v4138, 5
        %v4141 = vsel %vm435, %v4136, %v4140
        %v4143 = vshrl.u32 %v3947, 16
        %v4145 = vrot.slane %v4143, 4
        %v4146 = vshll.u32 %v3947, 16
        %v4148 = vrot.slane %v4146, 5
        %v4149 = vor.u32 %v4145, %v4148
        %v4150 = vrot.slane %v4149, 4
        %v4152 = vshll.u32 %v3948, 16
        %v4154 = vrot.slane %v4152, 5
        %v4155 = vsel %vm435, %v4150, %v4154
        %v4156 = vshrl.u32 %v3948, 16
        %v4158 = vrot.slane %v4156, 4
        %v4159 = vor.u32 %v4158, %v4154
        %v4160 = vrot.slane %v4159, 4
        %v4162 = vshll.u32 %v3949, 16
        %v4164 = vrot.slane %v4162, 5
        %v4165 = vsel %vm435, %v4160, %v4164
        %v4167 = vshrl.u32 %v3950, 16
        %v4169 = vrot.slane %v4167, 4
        %v4170 = vshll.u32 %v3950, 16
        %v4172 = vrot.slane %v4170, 5
        %v4173 = vor.u32 %v4169, %v4172
        %v4174 = vrot.slane %v4173, 4
        %v4176 = vshll.u32 %v3951, 16
        %v4178 = vrot.slane %v4176, 5
        %v4179 = vsel %vm435, %v4174, %v4178
        %v4180 = vshrl.u32 %v3951, 16
        %v4182 = vrot.slane %v4180, 4
        %v4183 = vor.u32 %v4182, %v4178
        %v4184 = vrot.slane %v4183, 4
        %v4186 = vshll.u32 %v3952, 16
        %v4188 = vrot.slane %v4186, 5
        %v4189 = vsel %vm435, %v4184, %v4188
        %v4191 = vshrl.u32 %v3953, 16
        %v4193 = vrot.slane %v4191, 4
        %v4194 = vshll.u32 %v3953, 16
        %v4196 = vrot.slane %v4194, 5
        %v4197 = vor.u32 %v4193, %v4196
        %v4198 = vrot.slane %v4197, 4
        %v4200 = vshll.u32 %v3954, 16
        %v4202 = vrot.slane %v4200, 5
        %v4203 = vsel %vm435, %v4198, %v4202
        %v4204 = vshrl.u32 %v3954, 16
        %v4206 = vrot.slane %v4204, 4
        %v4207 = vor.u32 %v4206, %v4202
        %v4208 = vrot.slane %v4207, 4
        %v4210 = vshll.u32 %v3955, 16
        %v4212 = vrot.slane %v4210, 5
        %v4213 = vsel %vm435, %v4208, %v4212
        %v4215 = vshrl.u32 %v3956, 16
        %v4217 = vrot.slane %v4215, 4
        %v4218 = vshll.u32 %v3956, 16
        %v4220 = vrot.slane %v4218, 5
        %v4221 = vor.u32 %v4217, %v4220
        %v4222 = vrot.slane %v4221, 4
        %v4224 = vshll.u32 %v3957, 16
        %v4226 = vrot.slane %v4224, 5
        %v4227 = vsel %vm435, %v4222, %v4226
        %v4228 = vshrl.u32 %v3957, 16
        %v4230 = vrot.slane %v4228, 4
        %v4231 = vor.u32 %v4230, %v4226
        %v4232 = vrot.slane %v4231, 4
        %v4234 = vshll.u32 %v3958, 16
        %v4236 = vrot.slane %v4234, 5
        %v4237 = vsel %vm435, %v4232, %v4236
        %v4239 = vshrl.u32 %v3959, 16
        %v4241 = vrot.slane %v4239, 4
        %v4242 = vshll.u32 %v3959, 16
        %v4244 = vrot.slane %v4242, 5
        %v4245 = vor.u32 %v4241, %v4244
        %v4246 = vrot.slane %v4245, 4
        %v4248 = vshll.u32 %v3960, 16
        %v4250 = vrot.slane %v4248, 5
        %v4251 = vsel %vm435, %v4246, %v4250
        %v4252 = vshrl.u32 %v3960, 16
        %v4254 = vrot.slane %v4252, 4
        %v4255 = vor.u32 %v4254, %v4250
        %v4256 = vrot.slane %v4255, 4
        %v4258 = vshll.u32 %v3961, 16
        %v4260 = vrot.slane %v4258, 5
        %v4261 = vsel %vm435, %v4256, %v4260
        %v4263 = vshrl.u32 %v3962, 16
        %v4265 = vrot.slane %v4263, 4
        %v4266 = vshll.u32 %v3962, 16
        %v4268 = vrot.slane %v4266, 5
        %v4269 = vor.u32 %v4265, %v4268
        %v4270 = vrot.slane %v4269, 4
        %v4272 = vshll.u32 %v3963, 16
        %v4274 = vrot.slane %v4272, 5
        %v4275 = vsel %vm435, %v4270, %v4274
        %v4276 = vshrl.u32 %v3963, 16
        %v4278 = vrot.slane %v4276, 4
        %v4279 = vor.u32 %v4278, %v4274
        %v4280 = vrot.slane %v4279, 4
        %v4282 = vshll.u32 %v3964, 16
        %v4284 = vrot.slane %v4282, 5
        %v4285 = vsel %vm435, %v4280, %v4284
        %v4287 = vshrl.u32 %v3965, 16
        %v4289 = vrot.slane %v4287, 4
        %v4290 = vshll.u32 %v3965, 16
        %v4292 = vrot.slane %v4290, 5
        %v4293 = vor.u32 %v4289, %v4292
        %v4294 = vrot.slane %v4293, 4
        %v4296 = vshll.u32 %v3966, 16
        %v4298 = vrot.slane %v4296, 5
        %v4299 = vsel %vm435, %v4294, %v4298
        %v4300 = vshrl.u32 %v3966, 16
        %v4302 = vrot.slane %v4300, 4
        %v4303 = vor.u32 %v4302, %v4298
        %v4304 = vrot.slane %v4303, 4
        %v4306 = vshll.u32 %v3967, 16
        %v4308 = vrot.slane %v4306, 5
        %v4309 = vsel %vm435, %v4304, %v4308
        %v4311 = vshrl.u32 %v3968, 16
        %v4313 = vrot.slane %v4311, 4
        %v4314 = vshll.u32 %v3968, 16
        %v4316 = vrot.slane %v4314, 5
        %v4317 = vor.u32 %v4313, %v4316
        %v4318 = vrot.slane %v4317, 4
        %v4320 = vshll.u32 %v3969, 16
        %v4322 = vrot.slane %v4320, 5
        %v4323 = vsel %vm435, %v4318, %v4322
        %v4324 = vshrl.u32 %v3969, 16
        %v4326 = vrot.slane %v4324, 4
        %v4327 = vor.u32 %v4326, %v4322
        %v4328 = vrot.slane %v4327, 4
        %v4330 = vshll.u32 %v3970, 16
        %v4332 = vrot.slane %v4330, 5
        %v4333 = vsel %vm435, %v4328, %v4332
        %v4335 = vshrl.u32 %v3971, 16
        %v4337 = vrot.slane %v4335, 4
        %v4338 = vshll.u32 %v3971, 16
        %v4340 = vrot.slane %v4338, 5
        %v4341 = vor.u32 %v4337, %v4340
        %v4342 = vrot.slane %v4341, 4
        %v4344 = vshll.u32 %v3972, 16
        %v4346 = vrot.slane %v4344, 5
        %v4347 = vsel %vm435, %v4342, %v4346
        %v4348 = vshrl.u32 %v3972, 16
        %v4350 = vrot.slane %v4348, 4
        %v4351 = vor.u32 %v4350, %v4346
        %v4352 = vrot.slane %v4351, 4
        %v4354 = vshll.u32 %v3973, 16
        %v4356 = vrot.slane %v4354, 5
        %v4357 = vsel %vm435, %v4352, %v4356
        %v4358 = vld [vmem:[#allocation4 + $0x1c0] sm:$0xf]
        %v4359 = vld [vmem:[#allocation4 + $0x1c4] sm:$0xf]
        %v4360 = vld [vmem:[#allocation4 + $0x1c8] sm:$0xf]
        %v4361 = vld [vmem:[#allocation4 + $0x1cc] sm:$0xf]
        %v4362 = vld [vmem:[#allocation4 + $0x1d0] sm:$0xf]
        %v4363 = vld [vmem:[#allocation4 + $0x1d4] sm:$0xf]
        %v4364 = vld [vmem:[#allocation4 + $0x1d8] sm:$0xf]
        %v4365 = vld [vmem:[#allocation4 + $0x1dc] sm:$0xf]
        %v4366 = vld [vmem:[#allocation4 + $0x1e0] sm:$0xf]
        %v4367 = vld [vmem:[#allocation4 + $0x1e4] sm:$0xf]
        %v4368 = vld [vmem:[#allocation4 + $0x1e8] sm:$0xf]
        %v4369 = vld [vmem:[#allocation4 + $0x1ec] sm:$0xf]
        %v4370 = vld [vmem:[#allocation4 + $0x1f0] sm:$0xf]
        %v4371 = vld [vmem:[#allocation4 + $0x1f4] sm:$0xf]
        %v4372 = vld [vmem:[#allocation4 + $0x1f8] sm:$0xf]
        %v4373 = vld [vmem:[#allocation4 + $0x1fc] sm:$0xf]
        %v4374 = vunpack.c.l.b16 %v3987
        %v4375 = vunpack.c.l.b16 %v3997
        %v4376 = vunpack.c.l.b16 %v4011
        %v4377 = vunpack.c.l.b16 %v4021
        %v4378 = vunpack.c.l.b16 %v4035
        %v4379 = vunpack.c.l.b16 %v4045
        %v4380 = vunpack.c.l.b16 %v4059
        %v4381 = vunpack.c.l.b16 %v4069
        %v4382 = vunpack.c.l.b16 %v4083
        %v4383 = vunpack.c.l.b16 %v4093
        %v4384 = vunpack.c.l.b16 %v4107
        %v4385 = vunpack.c.l.b16 %v4117
        %v4386 = vunpack.c.l.b16 %v4131
        %v4387 = vunpack.c.l.b16 %v4141
        %v4388 = vunpack.c.l.b16 %v4155
        %v4389 = vunpack.c.l.b16 %v4165
        %v4390 = vunpack.c.l.b16 %v4179
        %v4391 = vunpack.c.l.b16 %v4189
        %v4392 = vunpack.c.l.b16 %v4203
        %v4393 = vunpack.c.l.b16 %v4213
        %v4394 = vunpack.c.l.b16 %v4227
        %v4395 = vunpack.c.l.b16 %v4237
        %v4396 = vunpack.c.l.b16 %v4251
        %v4397 = vunpack.c.l.b16 %v4261
        %v4398 = vunpack.c.l.b16 %v4275
        %v4399 = vunpack.c.l.b16 %v4285
        %v4400 = vunpack.c.l.b16 %v4299
        %v4401 = vunpack.c.l.b16 %v4309
        %v4402 = vunpack.c.l.b16 %v4323
        %v4403 = vunpack.c.l.b16 %v4333
        %v4404 = vunpack.c.l.b16 %v4347
        %v4405 = vunpack.c.l.b16 %v4357
        %v4406 = vpack.c.b16 %v4375, %v4374
        %v4407 = vpack.c.b16 %v4377, %v4376
        %v4408 = vpack.c.b16 %v4379, %v4378
        %v4409 = vpack.c.b16 %v4381, %v4380
        %v4410 = vpack.c.b16 %v4383, %v4382
        %v4411 = vpack.c.b16 %v4385, %v4384
        %v4412 = vpack.c.b16 %v4387, %v4386
        %v4413 = vpack.c.b16 %v4389, %v4388
        %v4414 = vpack.c.b16 %v4391, %v4390
        %v4415 = vpack.c.b16 %v4393, %v4392
        %v4416 = vpack.c.b16 %v4395, %v4394
        %v4417 = vpack.c.b16 %v4397, %v4396
        %v4418 = vpack.c.b16 %v4399, %v4398
        %v4419 = vpack.c.b16 %v4401, %v4400
        %v4420 = vpack.c.b16 %v4403, %v4402
        %v4421 = vpack.c.b16 %v4405, %v4404
        %v4454 = vunpack.c.l.b16 %v4358
        %v4455 = vunpack.c.l.b16 %v4359
        %v4456 = vunpack.c.l.b16 %v4360
        %v4457 = vunpack.c.l.b16 %v4361
        %v4458 = vunpack.c.l.b16 %v4362
        %v4459 = vunpack.c.l.b16 %v4363
        %v4460 = vunpack.c.l.b16 %v4364
        %v4461 = vunpack.c.l.b16 %v4365
        %v4462 = vunpack.c.l.b16 %v4366
        %v4463 = vunpack.c.l.b16 %v4367
        %v4464 = vunpack.c.l.b16 %v4368
        %v4465 = vunpack.c.l.b16 %v4369
        %v4466 = vunpack.c.l.b16 %v4370
        %v4467 = vunpack.c.l.b16 %v4371
        %v4468 = vunpack.c.l.b16 %v4372
        %v4469 = vunpack.c.l.b16 %v4373
        %v4470 = vpack.c.b16 %v4455, %v4454
        %v4471 = vpack.c.b16 %v4457, %v4456
        %v4472 = vpack.c.b16 %v4459, %v4458
        %v4473 = vpack.c.b16 %v4461, %v4460
        %v4474 = vpack.c.b16 %v4463, %v4462
        %v4475 = vpack.c.b16 %v4465, %v4464
        %v4476 = vpack.c.b16 %v4467, %v4466
        %v4477 = vpack.c.b16 %v4469, %v4468
        %4486 = vmatprep.subr.bf16.mxu0 0
        %4487 = vmatpush1.bf16.msra.mxu0 %v4477
        %4488 = vmatprep.subr.bf16.mxu0 0
        %4489 = vmatpush1.bf16.msra.mxu0 %v4476
        %4490 = vmatprep.subr.bf16.mxu0 0
        %4491 = vmatpush1.bf16.msra.mxu0 %v4475
        %4492 = vmatprep.subr.bf16.mxu0 0
        %4493 = vmatpush1.bf16.msra.mxu0 %v4474
        %4494 = vmatprep.subr.bf16.mxu0 0
        %4495 = vmatpush1.bf16.msra.mxu0 %v4473
        %4496 = vmatprep.subr.bf16.mxu0 0
        %4497 = vmatpush1.bf16.msra.mxu0 %v4472
        %4498 = vmatprep.subr.bf16.mxu0 0
        %4499 = vmatpush1.bf16.msra.mxu0 %v4471
        %4500 = vmatprep.subr.bf16.mxu0 0
        %4501 = vmatpush1.bf16.msra.mxu0 %v4470
        %4502 = vmatprep.subr.bf16.mxu0 0
        %4503 = vmatpush2.bf16.msra.mxu0 0
        %4504 = vmatprep.subr.bf16.mxu0 0
        %4505 = vmatpush2.bf16.msra.mxu0 0
        %4506 = vmatprep.subr.bf16.mxu0 0
        %4507 = vmatpush2.bf16.msra.mxu0 0
        %4508 = vmatprep.subr.bf16.mxu0 0
        %4509 = vmatpush2.bf16.msra.mxu0 0
        %4510 = vmatprep.subr.bf16.mxu0 0
        %4511 = vmatpush2.bf16.msra.mxu0 0
        %4512 = vmatprep.subr.bf16.mxu0 0
        %4513 = vmatpush2.bf16.msra.mxu0 0
        %4514 = vmatprep.subr.bf16.mxu0 0
        %4515 = vmatpush2.bf16.msra.mxu0 0
        %4516 = vmatprep.subr.bf16.mxu0 0
        %4517 = vmatpush2.bf16.msra.mxu0 0
        %4518 = vmatprep.mubr.bf16.mxu0 0
        %4519 = vmatmul.mubr.bf16.gmra.mxu0 %v4406
        %v4520 = vpop.f32.mrf.mxu0
        %v4521 = vadd.f32 0.0, %v4520
        %v4522 = vpop.f32.mrf.mxu0
        %v4523 = vpop.f32.mrf.mxu0
        %v4524 = vadd.f32 0.0, %v4523
        %v4525 = vpop.f32.mrf.mxu0
        %4526 = vmatprep.mubr.bf16.mxu0 0
        %4527 = vmatmul.mubr.bf16.gmra.mxu0 %v4407
        %v4528 = vpop.f32.mrf.mxu0
        %v4529 = vadd.f32 0.0, %v4528
        %v4530 = vpop.f32.mrf.mxu0
        %v4531 = vpop.f32.mrf.mxu0
        %v4532 = vadd.f32 0.0, %v4531
        %v4533 = vpop.f32.mrf.mxu0
        %4534 = vmatprep.mubr.bf16.mxu0 0
        %4535 = vmatmul.mubr.bf16.gmra.mxu0 %v4408
        %v4536 = vpop.f32.mrf.mxu0
        %v4537 = vadd.f32 0.0, %v4536
        %v4538 = vpop.f32.mrf.mxu0
        %v4539 = vpop.f32.mrf.mxu0
        %v4540 = vadd.f32 0.0, %v4539
        %v4541 = vpop.f32.mrf.mxu0
        %4542 = vmatprep.mubr.bf16.mxu0 0
        %4543 = vmatmul.mubr.bf16.gmra.mxu0 %v4409
        %v4544 = vpop.f32.mrf.mxu0
        %v4545 = vadd.f32 0.0, %v4544
        %v4546 = vpop.f32.mrf.mxu0
        %v4547 = vpop.f32.mrf.mxu0
        %v4548 = vadd.f32 0.0, %v4547
        %v4549 = vpop.f32.mrf.mxu0
        %4550 = vmatprep.mubr.bf16.mxu0 0
        %4551 = vmatmul.mubr.bf16.gmra.mxu0 %v4410
        %v4552 = vpop.f32.mrf.mxu0
        %v4553 = vadd.f32 0.0, %v4552
        %v4554 = vpop.f32.mrf.mxu0
        %v4555 = vpop.f32.mrf.mxu0
        %v4556 = vadd.f32 0.0, %v4555
        %v4557 = vpop.f32.mrf.mxu0
        %4558 = vmatprep.mubr.bf16.mxu0 0
        %4559 = vmatmul.mubr.bf16.gmra.mxu0 %v4411
        %v4560 = vpop.f32.mrf.mxu0
        %v4561 = vadd.f32 0.0, %v4560
        %v4562 = vpop.f32.mrf.mxu0
        %v4563 = vpop.f32.mrf.mxu0
        %v4564 = vadd.f32 0.0, %v4563
        %v4565 = vpop.f32.mrf.mxu0
        %4566 = vmatprep.mubr.bf16.mxu0 0
        %4567 = vmatmul.mubr.bf16.gmra.mxu0 %v4412
        %v4568 = vpop.f32.mrf.mxu0
        %v4569 = vadd.f32 0.0, %v4568
        %v4570 = vpop.f32.mrf.mxu0
        %v4571 = vpop.f32.mrf.mxu0
        %v4572 = vadd.f32 0.0, %v4571
        %v4573 = vpop.f32.mrf.mxu0
        %4574 = vmatprep.mubr.bf16.mxu0 0
        %4575 = vmatmul.mubr.bf16.gmra.mxu0 %v4413
        %v4576 = vpop.f32.mrf.mxu0
        %v4577 = vadd.f32 0.0, %v4576
        %v4578 = vpop.f32.mrf.mxu0
        %v4579 = vpop.f32.mrf.mxu0
        %v4580 = vadd.f32 0.0, %v4579
        %v4581 = vpop.f32.mrf.mxu0
        %4582 = vmatprep.mubr.bf16.mxu0 0
        %4583 = vmatmul.mubr.bf16.gmra.mxu0 %v4414
        %v4584 = vpop.f32.mrf.mxu0
        %v4585 = vadd.f32 0.0, %v4584
        %v4586 = vpop.f32.mrf.mxu0
        %v4587 = vpop.f32.mrf.mxu0
        %v4588 = vadd.f32 0.0, %v4587
        %v4589 = vpop.f32.mrf.mxu0
        %4590 = vmatprep.mubr.bf16.mxu0 0
        %4591 = vmatmul.mubr.bf16.gmra.mxu0 %v4415
        %v4592 = vpop.f32.mrf.mxu0
        %v4593 = vadd.f32 0.0, %v4592
        %v4594 = vpop.f32.mrf.mxu0
        %v4595 = vpop.f32.mrf.mxu0
        %v4596 = vadd.f32 0.0, %v4595
        %v4597 = vpop.f32.mrf.mxu0
        %4598 = vmatprep.mubr.bf16.mxu0 0
        %4599 = vmatmul.mubr.bf16.gmra.mxu0 %v4416
        %v4600 = vpop.f32.mrf.mxu0
        %v4601 = vadd.f32 0.0, %v4600
        %v4602 = vpop.f32.mrf.mxu0
        %v4603 = vpop.f32.mrf.mxu0
        %v4604 = vadd.f32 0.0, %v4603
        %v4605 = vpop.f32.mrf.mxu0
        %4606 = vmatprep.mubr.bf16.mxu0 0
        %4607 = vmatmul.mubr.bf16.gmra.mxu0 %v4417
        %v4608 = vpop.f32.mrf.mxu0
        %v4609 = vadd.f32 0.0, %v4608
        %v4610 = vpop.f32.mrf.mxu0
        %v4611 = vpop.f32.mrf.mxu0
        %v4612 = vadd.f32 0.0, %v4611
        %v4613 = vpop.f32.mrf.mxu0
        %4614 = vmatprep.mubr.bf16.mxu0 0
        %4615 = vmatmul.mubr.bf16.gmra.mxu0 %v4418
        %v4616 = vpop.f32.mrf.mxu0
        %v4617 = vadd.f32 0.0, %v4616
        %v4618 = vpop.f32.mrf.mxu0
        %v4619 = vpop.f32.mrf.mxu0
        %v4620 = vadd.f32 0.0, %v4619
        %v4621 = vpop.f32.mrf.mxu0
        %4622 = vmatprep.mubr.bf16.mxu0 0
        %4623 = vmatmul.mubr.bf16.gmra.mxu0 %v4419
        %v4624 = vpop.f32.mrf.mxu0
        %v4625 = vadd.f32 0.0, %v4624
        %v4626 = vpop.f32.mrf.mxu0
        %v4627 = vpop.f32.mrf.mxu0
        %v4628 = vadd.f32 0.0, %v4627
        %v4629 = vpop.f32.mrf.mxu0
        %4630 = vmatprep.mubr.bf16.mxu0 0
        %4631 = vmatmul.mubr.bf16.gmra.mxu0 %v4420
        %v4632 = vpop.f32.mrf.mxu0
        %v4633 = vadd.f32 0.0, %v4632
        %v4634 = vpop.f32.mrf.mxu0
        %v4635 = vpop.f32.mrf.mxu0
        %v4636 = vadd.f32 0.0, %v4635
        %v4637 = vpop.f32.mrf.mxu0
        %4638 = vmatprep.mubr.bf16.mxu0 0
        %4639 = vmatmul.mubr.bf16.gmra.mxu0 %v4421
        %v4640 = vpop.f32.mrf.mxu0
        %v4641 = vadd.f32 0.0, %v4640
        %v4642 = vpop.f32.mrf.mxu0
        %v4643 = vpop.f32.mrf.mxu0
        %v4644 = vadd.f32 0.0, %v4643
        %v4645 = vpop.f32.mrf.mxu0
        %4646 = vdwg.mxu0
        %v4647 = vadd.f32 %v3894, %v4521
        %v4648 = vadd.f32 %v3895, %v4524
        %v4649 = vadd.f32 %v3896, %v4529
        %v4650 = vadd.f32 %v3897, %v4532
        %v4651 = vadd.f32 %v3898, %v4537
        %v4652 = vadd.f32 %v3899, %v4540
        %v4653 = vadd.f32 %v3900, %v4545
        %v4654 = vadd.f32 %v3901, %v4548
        %v4655 = vadd.f32 %v3902, %v4553
        %v4656 = vadd.f32 %v3903, %v4556
        %v4657 = vadd.f32 %v3904, %v4561
        %v4658 = vadd.f32 %v3905, %v4564
        %v4659 = vadd.f32 %v3906, %v4569
        %v4660 = vadd.f32 %v3907, %v4572
        %v4661 = vadd.f32 %v3908, %v4577
        %v4662 = vadd.f32 %v3909, %v4580
        %v4663 = vadd.f32 %v3910, %v4585
        %v4664 = vadd.f32 %v3911, %v4588
        %v4665 = vadd.f32 %v3912, %v4593
        %v4666 = vadd.f32 %v3913, %v4596
        %v4667 = vadd.f32 %v3914, %v4601
        %v4668 = vadd.f32 %v3915, %v4604
        %v4669 = vadd.f32 %v3916, %v4609
        %v4670 = vadd.f32 %v3917, %v4612
        %v4671 = vadd.f32 %v3918, %v4617
        %v4672 = vadd.f32 %v3919, %v4620
        %v4673 = vadd.f32 %v3920, %v4625
        %v4674 = vadd.f32 %v3921, %v4628
        %v4675 = vadd.f32 %v3922, %v4633
        %v4676 = vadd.f32 %v3923, %v4636
        %v4677 = vadd.f32 %v3924, %v4641
        %v4678 = vadd.f32 %v3925, %v4644
        %v4679 = vld [vmem:[%s3540] sm:$0xe]
        %v4680 = vld [vmem:[%s3540 + $0xc] sm:$0xe]
        %v4681 = vld [vmem:[%s3540 + $0x18] sm:$0xe]
        %v4682 = vld [vmem:[%s3540 + $0x24] sm:$0xe]
        %v4683 = vld [vmem:[%s3540 + $0x30] sm:$0xe]
        %v4684 = vld [vmem:[%s3540 + $0x3c] sm:$0xe]
        %v4685 = vld [vmem:[%s3540 + $0x48] sm:$0xe]
        %v4686 = vld [vmem:[%s3540 + $0x54] sm:$0xe]
        %v4687 = vld [vmem:[%s3540 + $0x60] sm:$0xe]
        %v4688 = vld [vmem:[%s3540 + $0x6c] sm:$0xe]
        %v4689 = vld [vmem:[%s3540 + $0x78] sm:$0xe]
        %v4690 = vld [vmem:[%s3540 + $0x84] sm:$0xe]
        %v4691 = vld [vmem:[%s3540 + $0x90] sm:$0xe]
        %v4692 = vld [vmem:[%s3540 + $0x9c] sm:$0xe]
        %v4693 = vld [vmem:[%s3540 + $0xa8] sm:$0xe]
        %v4694 = vld [vmem:[%s3540 + $0xb4] sm:$0xe]
        %v4743 = vrot.slane %v4679, 5
        %v4744 = vrot.slane %v4743, 4
        %v4745 = vrot.slane %v3927, 5
        %v4746 = vsel %vm1464, %v4744, %v4745
        %v4747 = vrot.slane %v4745, 4
        %v4748 = vrot.slane %v3928, 5
        %v4749 = vsel %vm1464, %v4747, %v4748
        %v4750 = vrot.slane %v4680, 5
        %v4751 = vrot.slane %v4750, 4
        %v4752 = vrot.slane %v3930, 5
        %v4753 = vsel %vm1464, %v4751, %v4752
        %v4754 = vrot.slane %v4752, 4
        %v4755 = vrot.slane %v3931, 5
        %v4756 = vsel %vm1464, %v4754, %v4755
        %v4757 = vrot.slane %v4681, 5
        %v4758 = vrot.slane %v4757, 4
        %v4759 = vrot.slane %v3933, 5
        %v4760 = vsel %vm1464, %v4758, %v4759
        %v4761 = vrot.slane %v4759, 4
        %v4762 = vrot.slane %v3934, 5
        %v4763 = vsel %vm1464, %v4761, %v4762
        %v4764 = vrot.slane %v4682, 5
        %v4765 = vrot.slane %v4764, 4
        %v4766 = vrot.slane %v3936, 5
        %v4767 = vsel %vm1464, %v4765, %v4766
        %v4768 = vrot.slane %v4766, 4
        %v4769 = vrot.slane %v3937, 5
        %v4770 = vsel %vm1464, %v4768, %v4769
        %v4771 = vrot.slane %v4683, 5
        %v4772 = vrot.slane %v4771, 4
        %v4773 = vrot.slane %v3939, 5
        %v4774 = vsel %vm1464, %v4772, %v4773
        %v4775 = vrot.slane %v4773, 4
        %v4776 = vrot.slane %v3940, 5
        %v4777 = vsel %vm1464, %v4775, %v4776
        %v4778 = vrot.slane %v4684, 5
        %v4779 = vrot.slane %v4778, 4
        %v4780 = vrot.slane %v3942, 5
        %v4781 = vsel %vm1464, %v4779, %v4780
        %v4782 = vrot.slane %v4780, 4
        %v4783 = vrot.slane %v3943, 5
        %v4784 = vsel %vm1464, %v4782, %v4783
        %v4785 = vrot.slane %v4685, 5
        %v4786 = vrot.slane %v4785, 4
        %v4787 = vrot.slane %v3945, 5
        %v4788 = vsel %vm1464, %v4786, %v4787
        %v4789 = vrot.slane %v4787, 4
        %v4790 = vrot.slane %v3946, 5
        %v4791 = vsel %vm1464, %v4789, %v4790
        %v4792 = vrot.slane %v4686, 5
        %v4793 = vrot.slane %v4792, 4
        %v4794 = vrot.slane %v3948, 5
        %v4795 = vsel %vm1464, %v4793, %v4794
        %v4796 = vrot.slane %v4794, 4
        %v4797 = vrot.slane %v3949, 5
        %v4798 = vsel %vm1464, %v4796, %v4797
        %v4799 = vrot.slane %v4687, 5
        %v4800 = vrot.slane %v4799, 4
        %v4801 = vrot.slane %v3951, 5
        %v4802 = vsel %vm1464, %v4800, %v4801
        %v4803 = vrot.slane %v4801, 4
        %v4804 = vrot.slane %v3952, 5
        %v4805 = vsel %vm1464, %v4803, %v4804
        %v4806 = vrot.slane %v4688, 5
        %v4807 = vrot.slane %v4806, 4
        %v4808 = vrot.slane %v3954, 5
        %v4809 = vsel %vm1464, %v4807, %v4808
        %v4810 = vrot.slane %v4808, 4
        %v4811 = vrot.slane %v3955, 5
        %v4812 = vsel %vm1464, %v4810, %v4811
        %v4813 = vrot.slane %v4689, 5
        %v4814 = vrot.slane %v4813, 4
        %v4815 = vrot.slane %v3957, 5
        %v4816 = vsel %vm1464, %v4814, %v4815
        %v4817 = vrot.slane %v4815, 4
        %v4818 = vrot.slane %v3958, 5
        %v4819 = vsel %vm1464, %v4817, %v4818
        %v4820 = vrot.slane %v4690, 5
        %v4821 = vrot.slane %v4820, 4
        %v4822 = vrot.slane %v3960, 5
        %v4823 = vsel %vm1464, %v4821, %v4822
        %v4824 = vrot.slane %v4822, 4
        %v4825 = vrot.slane %v3961, 5
        %v4826 = vsel %vm1464, %v4824, %v4825
        %v4827 = vrot.slane %v4691, 5
        %v4828 = vrot.slane %v4827, 4
        %v4829 = vrot.slane %v3963, 5
        %v4830 = vsel %vm1464, %v4828, %v4829
        %v4831 = vrot.slane %v4829, 4
        %v4832 = vrot.slane %v3964, 5
        %v4833 = vsel %vm1464, %v4831, %v4832
        %v4834 = vrot.slane %v4692, 5
        %v4835 = vrot.slane %v4834, 4
        %v4836 = vrot.slane %v3966, 5
        %v4837 = vsel %vm1464, %v4835, %v4836
        %v4838 = vrot.slane %v4836, 4
        %v4839 = vrot.slane %v3967, 5
        %v4840 = vsel %vm1464, %v4838, %v4839
        %v4841 = vrot.slane %v4693, 5
        %v4842 = vrot.slane %v4841, 4
        %v4843 = vrot.slane %v3969, 5
        %v4844 = vsel %vm1464, %v4842, %v4843
        %v4845 = vrot.slane %v4843, 4
        %v4846 = vrot.slane %v3970, 5
        %v4847 = vsel %vm1464, %v4845, %v4846
        %v4848 = vrot.slane %v4694, 5
        %v4849 = vrot.slane %v4848, 4
        %v4850 = vrot.slane %v3972, 5
        %v4851 = vsel %vm1464, %v4849, %v4850
        %v4852 = vrot.slane %v4850, 4
        %v4853 = vrot.slane %v3973, 5
        %v4854 = vsel %vm1464, %v4852, %v4853
        %v4855 = vld [vmem:[#allocation4 + $0x200] sm:$0xf]
        %v4856 = vld [vmem:[#allocation4 + $0x204] sm:$0xf]
        %v4857 = vld [vmem:[#allocation4 + $0x208] sm:$0xf]
        %v4858 = vld [vmem:[#allocation4 + $0x20c] sm:$0xf]
        %v4859 = vld [vmem:[#allocation4 + $0x210] sm:$0xf]
        %v4860 = vld [vmem:[#allocation4 + $0x214] sm:$0xf]
        %v4861 = vld [vmem:[#allocation4 + $0x218] sm:$0xf]
        %v4862 = vld [vmem:[#allocation4 + $0x21c] sm:$0xf]
        %v4863 = vld [vmem:[#allocation4 + $0x220] sm:$0xf]
        %v4864 = vld [vmem:[#allocation4 + $0x224] sm:$0xf]
        %v4865 = vld [vmem:[#allocation4 + $0x228] sm:$0xf]
        %v4866 = vld [vmem:[#allocation4 + $0x22c] sm:$0xf]
        %v4867 = vld [vmem:[#allocation4 + $0x230] sm:$0xf]
        %v4868 = vld [vmem:[#allocation4 + $0x234] sm:$0xf]
        %v4869 = vld [vmem:[#allocation4 + $0x238] sm:$0xf]
        %v4870 = vld [vmem:[#allocation4 + $0x23c] sm:$0xf]
        %v4871 = vunpack.c.l.b16 %v4746
        %v4872 = vunpack.c.l.b16 %v4749
        %v4873 = vunpack.c.l.b16 %v4753
        %v4874 = vunpack.c.l.b16 %v4756
        %v4875 = vunpack.c.l.b16 %v4760
        %v4876 = vunpack.c.l.b16 %v4763
        %v4877 = vunpack.c.l.b16 %v4767
        %v4878 = vunpack.c.l.b16 %v4770
        %v4879 = vunpack.c.l.b16 %v4774
        %v4880 = vunpack.c.l.b16 %v4777
        %v4881 = vunpack.c.l.b16 %v4781
        %v4882 = vunpack.c.l.b16 %v4784
        %v4883 = vunpack.c.l.b16 %v4788
        %v4884 = vunpack.c.l.b16 %v4791
        %v4885 = vunpack.c.l.b16 %v4795
        %v4886 = vunpack.c.l.b16 %v4798
        %v4887 = vunpack.c.l.b16 %v4802
        %v4888 = vunpack.c.l.b16 %v4805
        %v4889 = vunpack.c.l.b16 %v4809
        %v4890 = vunpack.c.l.b16 %v4812
        %v4891 = vunpack.c.l.b16 %v4816
        %v4892 = vunpack.c.l.b16 %v4819
        %v4893 = vunpack.c.l.b16 %v4823
        %v4894 = vunpack.c.l.b16 %v4826
        %v4895 = vunpack.c.l.b16 %v4830
        %v4896 = vunpack.c.l.b16 %v4833
        %v4897 = vunpack.c.l.b16 %v4837
        %v4898 = vunpack.c.l.b16 %v4840
        %v4899 = vunpack.c.l.b16 %v4844
        %v4900 = vunpack.c.l.b16 %v4847
        %v4901 = vunpack.c.l.b16 %v4851
        %v4902 = vunpack.c.l.b16 %v4854
        %v4903 = vpack.c.b16 %v4872, %v4871
        %v4904 = vpack.c.b16 %v4874, %v4873
        %v4905 = vpack.c.b16 %v4876, %v4875
        %v4906 = vpack.c.b16 %v4878, %v4877
        %v4907 = vpack.c.b16 %v4880, %v4879
        %v4908 = vpack.c.b16 %v4882, %v4881
        %v4909 = vpack.c.b16 %v4884, %v4883
        %v4910 = vpack.c.b16 %v4886, %v4885
        %v4911 = vpack.c.b16 %v4888, %v4887
        %v4912 = vpack.c.b16 %v4890, %v4889
        %v4913 = vpack.c.b16 %v4892, %v4891
        %v4914 = vpack.c.b16 %v4894, %v4893
        %v4915 = vpack.c.b16 %v4896, %v4895
        %v4916 = vpack.c.b16 %v4898, %v4897
        %v4917 = vpack.c.b16 %v4900, %v4899
        %v4918 = vpack.c.b16 %v4902, %v4901
        %v4951 = vunpack.c.l.b16 %v4855
        %v4952 = vunpack.c.l.b16 %v4856
        %v4953 = vunpack.c.l.b16 %v4857
        %v4954 = vunpack.c.l.b16 %v4858
        %v4955 = vunpack.c.l.b16 %v4859
        %v4956 = vunpack.c.l.b16 %v4860
        %v4957 = vunpack.c.l.b16 %v4861
        %v4958 = vunpack.c.l.b16 %v4862
        %v4959 = vunpack.c.l.b16 %v4863
        %v4960 = vunpack.c.l.b16 %v4864
        %v4961 = vunpack.c.l.b16 %v4865
        %v4962 = vunpack.c.l.b16 %v4866
        %v4963 = vunpack.c.l.b16 %v4867
        %v4964 = vunpack.c.l.b16 %v4868
        %v4965 = vunpack.c.l.b16 %v4869
        %v4966 = vunpack.c.l.b16 %v4870
        %v4967 = vpack.c.b16 %v4952, %v4951
        %v4968 = vpack.c.b16 %v4954, %v4953
        %v4969 = vpack.c.b16 %v4956, %v4955
        %v4970 = vpack.c.b16 %v4958, %v4957
        %v4971 = vpack.c.b16 %v4960, %v4959
        %v4972 = vpack.c.b16 %v4962, %v4961
        %v4973 = vpack.c.b16 %v4964, %v4963
        %v4974 = vpack.c.b16 %v4966, %v4965
        %4983 = vmatprep.subr.bf16.mxu0 0
        %4984 = vmatpush1.bf16.msra.mxu0 %v4974
        %4985 = vmatprep.subr.bf16.mxu0 0
        %4986 = vmatpush1.bf16.msra.mxu0 %v4973
        %4987 = vmatprep.subr.bf16.mxu0 0
        %4988 = vmatpush1.bf16.msra.mxu0 %v4972
        %4989 = vmatprep.subr.bf16.mxu0 0
        %4990 = vmatpush1.bf16.msra.mxu0 %v4971
        %4991 = vmatprep.subr.bf16.mxu0 0
        %4992 = vmatpush1.bf16.msra.mxu0 %v4970
        %4993 = vmatprep.subr.bf16.mxu0 0
        %4994 = vmatpush1.bf16.msra.mxu0 %v4969
        %4995 = vmatprep.subr.bf16.mxu0 0
        %4996 = vmatpush1.bf16.msra.mxu0 %v4968
        %4997 = vmatprep.subr.bf16.mxu0 0
        %4998 = vmatpush1.bf16.msra.mxu0 %v4967
        %4999 = vmatprep.subr.bf16.mxu0 0
        %5000 = vmatpush2.bf16.msra.mxu0 0
        %5001 = vmatprep.subr.bf16.mxu0 0
        %5002 = vmatpush2.bf16.msra.mxu0 0
        %5003 = vmatprep.subr.bf16.mxu0 0
        %5004 = vmatpush2.bf16.msra.mxu0 0
        %5005 = vmatprep.subr.bf16.mxu0 0
        %5006 = vmatpush2.bf16.msra.mxu0 0
        %5007 = vmatprep.subr.bf16.mxu0 0
        %5008 = vmatpush2.bf16.msra.mxu0 0
        %5009 = vmatprep.subr.bf16.mxu0 0
        %5010 = vmatpush2.bf16.msra.mxu0 0
        %5011 = vmatprep.subr.bf16.mxu0 0
        %5012 = vmatpush2.bf16.msra.mxu0 0
        %5013 = vmatprep.subr.bf16.mxu0 0
        %5014 = vmatpush2.bf16.msra.mxu0 0
        %5015 = vmatprep.mubr.bf16.mxu0 0
        %5016 = vmatmul.mubr.bf16.gmra.mxu0 %v4903
        %v5017 = vpop.f32.mrf.mxu0
        %v5018 = vadd.f32 0.0, %v5017
        %v5019 = vpop.f32.mrf.mxu0
        %v5020 = vpop.f32.mrf.mxu0
        %v5021 = vadd.f32 0.0, %v5020
        %v5022 = vpop.f32.mrf.mxu0
        %5023 = vmatprep.mubr.bf16.mxu0 0
        %5024 = vmatmul.mubr.bf16.gmra.mxu0 %v4904
        %v5025 = vpop.f32.mrf.mxu0
        %v5026 = vadd.f32 0.0, %v5025
        %v5027 = vpop.f32.mrf.mxu0
        %v5028 = vpop.f32.mrf.mxu0
        %v5029 = vadd.f32 0.0, %v5028
        %v5030 = vpop.f32.mrf.mxu0
        %5031 = vmatprep.mubr.bf16.mxu0 0
        %5032 = vmatmul.mubr.bf16.gmra.mxu0 %v4905
        %v5033 = vpop.f32.mrf.mxu0
        %v5034 = vadd.f32 0.0, %v5033
        %v5035 = vpop.f32.mrf.mxu0
        %v5036 = vpop.f32.mrf.mxu0
        %v5037 = vadd.f32 0.0, %v5036
        %v5038 = vpop.f32.mrf.mxu0
        %5039 = vmatprep.mubr.bf16.mxu0 0
        %5040 = vmatmul.mubr.bf16.gmra.mxu0 %v4906
        %v5041 = vpop.f32.mrf.mxu0
        %v5042 = vadd.f32 0.0, %v5041
        %v5043 = vpop.f32.mrf.mxu0
        %v5044 = vpop.f32.mrf.mxu0
        %v5045 = vadd.f32 0.0, %v5044
        %v5046 = vpop.f32.mrf.mxu0
        %5047 = vmatprep.mubr.bf16.mxu0 0
        %5048 = vmatmul.mubr.bf16.gmra.mxu0 %v4907
        %v5049 = vpop.f32.mrf.mxu0
        %v5050 = vadd.f32 0.0, %v5049
        %v5051 = vpop.f32.mrf.mxu0
        %v5052 = vpop.f32.mrf.mxu0
        %v5053 = vadd.f32 0.0, %v5052
        %v5054 = vpop.f32.mrf.mxu0
        %5055 = vmatprep.mubr.bf16.mxu0 0
        %5056 = vmatmul.mubr.bf16.gmra.mxu0 %v4908
        %v5057 = vpop.f32.mrf.mxu0
        %v5058 = vadd.f32 0.0, %v5057
        %v5059 = vpop.f32.mrf.mxu0
        %v5060 = vpop.f32.mrf.mxu0
        %v5061 = vadd.f32 0.0, %v5060
        %v5062 = vpop.f32.mrf.mxu0
        %5063 = vmatprep.mubr.bf16.mxu0 0
        %5064 = vmatmul.mubr.bf16.gmra.mxu0 %v4909
        %v5065 = vpop.f32.mrf.mxu0
        %v5066 = vadd.f32 0.0, %v5065
        %v5067 = vpop.f32.mrf.mxu0
        %v5068 = vpop.f32.mrf.mxu0
        %v5069 = vadd.f32 0.0, %v5068
        %v5070 = vpop.f32.mrf.mxu0
        %5071 = vmatprep.mubr.bf16.mxu0 0
        %5072 = vmatmul.mubr.bf16.gmra.mxu0 %v4910
        %v5073 = vpop.f32.mrf.mxu0
        %v5074 = vadd.f32 0.0, %v5073
        %v5075 = vpop.f32.mrf.mxu0
        %v5076 = vpop.f32.mrf.mxu0
        %v5077 = vadd.f32 0.0, %v5076
        %v5078 = vpop.f32.mrf.mxu0
        %5079 = vmatprep.mubr.bf16.mxu0 0
        %5080 = vmatmul.mubr.bf16.gmra.mxu0 %v4911
        %v5081 = vpop.f32.mrf.mxu0
        %v5082 = vadd.f32 0.0, %v5081
        %v5083 = vpop.f32.mrf.mxu0
        %v5084 = vpop.f32.mrf.mxu0
        %v5085 = vadd.f32 0.0, %v5084
        %v5086 = vpop.f32.mrf.mxu0
        %5087 = vmatprep.mubr.bf16.mxu0 0
        %5088 = vmatmul.mubr.bf16.gmra.mxu0 %v4912
        %v5089 = vpop.f32.mrf.mxu0
        %v5090 = vadd.f32 0.0, %v5089
        %v5091 = vpop.f32.mrf.mxu0
        %v5092 = vpop.f32.mrf.mxu0
        %v5093 = vadd.f32 0.0, %v5092
        %v5094 = vpop.f32.mrf.mxu0
        %5095 = vmatprep.mubr.bf16.mxu0 0
        %5096 = vmatmul.mubr.bf16.gmra.mxu0 %v4913
        %v5097 = vpop.f32.mrf.mxu0
        %v5098 = vadd.f32 0.0, %v5097
        %v5099 = vpop.f32.mrf.mxu0
        %v5100 = vpop.f32.mrf.mxu0
        %v5101 = vadd.f32 0.0, %v5100
        %v5102 = vpop.f32.mrf.mxu0
        %5103 = vmatprep.mubr.bf16.mxu0 0
        %5104 = vmatmul.mubr.bf16.gmra.mxu0 %v4914
        %v5105 = vpop.f32.mrf.mxu0
        %v5106 = vadd.f32 0.0, %v5105
        %v5107 = vpop.f32.mrf.mxu0
        %v5108 = vpop.f32.mrf.mxu0
        %v5109 = vadd.f32 0.0, %v5108
        %v5110 = vpop.f32.mrf.mxu0
        %5111 = vmatprep.mubr.bf16.mxu0 0
        %5112 = vmatmul.mubr.bf16.gmra.mxu0 %v4915
        %v5113 = vpop.f32.mrf.mxu0
        %v5114 = vadd.f32 0.0, %v5113
        %v5115 = vpop.f32.mrf.mxu0
        %v5116 = vpop.f32.mrf.mxu0
        %v5117 = vadd.f32 0.0, %v5116
        %v5118 = vpop.f32.mrf.mxu0
        %5119 = vmatprep.mubr.bf16.mxu0 0
        %5120 = vmatmul.mubr.bf16.gmra.mxu0 %v4916
        %v5121 = vpop.f32.mrf.mxu0
        %v5122 = vadd.f32 0.0, %v5121
        %v5123 = vpop.f32.mrf.mxu0
        %v5124 = vpop.f32.mrf.mxu0
        %v5125 = vadd.f32 0.0, %v5124
        %v5126 = vpop.f32.mrf.mxu0
        %5127 = vmatprep.mubr.bf16.mxu0 0
        %5128 = vmatmul.mubr.bf16.gmra.mxu0 %v4917
        %v5129 = vpop.f32.mrf.mxu0
        %v5130 = vadd.f32 0.0, %v5129
        %v5131 = vpop.f32.mrf.mxu0
        %v5132 = vpop.f32.mrf.mxu0
        %v5133 = vadd.f32 0.0, %v5132
        %v5134 = vpop.f32.mrf.mxu0
        %5135 = vmatprep.mubr.bf16.mxu0 0
        %5136 = vmatmul.mubr.bf16.gmra.mxu0 %v4918
        %v5137 = vpop.f32.mrf.mxu0
        %v5138 = vadd.f32 0.0, %v5137
        %v5139 = vpop.f32.mrf.mxu0
        %v5140 = vpop.f32.mrf.mxu0
        %v5141 = vadd.f32 0.0, %v5140
        %v5142 = vpop.f32.mrf.mxu0
        %5143 = vdwg.mxu0
        %v5144 = vadd.f32 %v4647, %v5018
        %v5145 = vadd.f32 %v4648, %v5021
        %v5146 = vadd.f32 %v4649, %v5026
        %v5147 = vadd.f32 %v4650, %v5029
        %v5148 = vadd.f32 %v4651, %v5034
        %v5149 = vadd.f32 %v4652, %v5037
        %v5150 = vadd.f32 %v4653, %v5042
        %v5151 = vadd.f32 %v4654, %v5045
        %v5152 = vadd.f32 %v4655, %v5050
        %v5153 = vadd.f32 %v4656, %v5053
        %v5154 = vadd.f32 %v4657, %v5058
        %v5155 = vadd.f32 %v4658, %v5061
        %v5156 = vadd.f32 %v4659, %v5066
        %v5157 = vadd.f32 %v4660, %v5069
        %v5158 = vadd.f32 %v4661, %v5074
        %v5159 = vadd.f32 %v4662, %v5077
        %v5160 = vadd.f32 %v4663, %v5082
        %v5161 = vadd.f32 %v4664, %v5085
        %v5162 = vadd.f32 %v4665, %v5090
        %v5163 = vadd.f32 %v4666, %v5093
        %v5164 = vadd.f32 %v4667, %v5098
        %v5165 = vadd.f32 %v4668, %v5101
        %v5166 = vadd.f32 %v4669, %v5106
        %v5167 = vadd.f32 %v4670, %v5109
        %v5168 = vadd.f32 %v4671, %v5114
        %v5169 = vadd.f32 %v4672, %v5117
        %v5170 = vadd.f32 %v4673, %v5122
        %v5171 = vadd.f32 %v4674, %v5125
        %v5172 = vadd.f32 %v4675, %v5130
        %v5173 = vadd.f32 %v4676, %v5133
        %v5174 = vadd.f32 %v4677, %v5138
        %v5175 = vadd.f32 %v4678, %v5141
        %v5176 = vld [vmem:[%s2] sm:$0x1]
        %v5178 = vlaneseq
        %v5179 = vshrl.u32 %v5178, 7
        %v5180 = vsub.s32 0, %v5179
        %v5181 = vrot.slane %v5176, %v5180
        %v5183 = vadd.f32 %v5144, %v5181
        %v5184 = vadd.f32 %v5145, %v5181
        %v5185 = vadd.f32 %v5146, %v5181
        %v5186 = vadd.f32 %v5147, %v5181
        %v5187 = vadd.f32 %v5148, %v5181
        %v5188 = vadd.f32 %v5149, %v5181
        %v5189 = vadd.f32 %v5150, %v5181
        %v5190 = vadd.f32 %v5151, %v5181
        %v5191 = vadd.f32 %v5152, %v5181
        %v5192 = vadd.f32 %v5153, %v5181
        %v5193 = vadd.f32 %v5154, %v5181
        %v5194 = vadd.f32 %v5155, %v5181
        %v5195 = vadd.f32 %v5156, %v5181
        %v5196 = vadd.f32 %v5157, %v5181
        %v5197 = vadd.f32 %v5158, %v5181
        %v5198 = vadd.f32 %v5159, %v5181
        %v5199 = vadd.f32 %v5160, %v5181
        %v5200 = vadd.f32 %v5161, %v5181
        %v5201 = vadd.f32 %v5162, %v5181
        %v5202 = vadd.f32 %v5163, %v5181
        %v5203 = vadd.f32 %v5164, %v5181
        %v5204 = vadd.f32 %v5165, %v5181
        %v5205 = vadd.f32 %v5166, %v5181
        %v5206 = vadd.f32 %v5167, %v5181
        %v5207 = vadd.f32 %v5168, %v5181
        %v5208 = vadd.f32 %v5169, %v5181
        %v5209 = vadd.f32 %v5170, %v5181
        %v5210 = vadd.f32 %v5171, %v5181
        %v5211 = vadd.f32 %v5172, %v5181
        %v5212 = vadd.f32 %v5173, %v5181
        %v5213 = vadd.f32 %v5174, %v5181
        %v5214 = vadd.f32 %v5175, %v5181
        %v5215 = vmax.f32 %v5183, 0.0
        %v5216 = vmax.f32 %v5184, 0.0
        %v5217 = vmax.f32 %v5185, 0.0
        %v5218 = vmax.f32 %v5186, 0.0
        %v5219 = vmax.f32 %v5187, 0.0
        %v5220 = vmax.f32 %v5188, 0.0
        %v5221 = vmax.f32 %v5189, 0.0
        %v5222 = vmax.f32 %v5190, 0.0
        %v5223 = vmax.f32 %v5191, 0.0
        %v5224 = vmax.f32 %v5192, 0.0
        %v5225 = vmax.f32 %v5193, 0.0
        %v5226 = vmax.f32 %v5194, 0.0
        %v5227 = vmax.f32 %v5195, 0.0
        %v5228 = vmax.f32 %v5196, 0.0
        %v5229 = vmax.f32 %v5197, 0.0
        %v5230 = vmax.f32 %v5198, 0.0
        %v5231 = vmax.f32 %v5199, 0.0
        %v5232 = vmax.f32 %v5200, 0.0
        %v5233 = vmax.f32 %v5201, 0.0
        %v5234 = vmax.f32 %v5202, 0.0
        %v5235 = vmax.f32 %v5203, 0.0
        %v5236 = vmax.f32 %v5204, 0.0
        %v5237 = vmax.f32 %v5205, 0.0
        %v5238 = vmax.f32 %v5206, 0.0
        %v5239 = vmax.f32 %v5207, 0.0
        %v5240 = vmax.f32 %v5208, 0.0
        %v5241 = vmax.f32 %v5209, 0.0
        %v5242 = vmax.f32 %v5210, 0.0
        %v5243 = vmax.f32 %v5211, 0.0
        %v5244 = vmax.f32 %v5212, 0.0
        %v5245 = vmax.f32 %v5213, 0.0
        %v5246 = vmax.f32 %v5214, 0.0
        %v5247 = vld [vmem:[%s337] sm:$0xf]
        %v5248 = vld [vmem:[%s337 + $0x4] sm:$0xf]
        %v5249 = vld [vmem:[%s337 + $0x8] sm:$0xf]
        %v5250 = vld [vmem:[%s337 + $0xc] sm:$0xf]
        %v5251 = vld [vmem:[%s337 + $0x10] sm:$0xf]
        %v5252 = vld [vmem:[%s337 + $0x14] sm:$0xf]
        %v5253 = vld [vmem:[%s337 + $0x18] sm:$0xf]
        %v5254 = vld [vmem:[%s337 + $0x1c] sm:$0xf]
        %v5255 = vld [vmem:[%s337 + $0x20] sm:$0xf]
        %v5256 = vld [vmem:[%s337 + $0x24] sm:$0xf]
        %v5257 = vld [vmem:[%s337 + $0x28] sm:$0xf]
        %v5258 = vld [vmem:[%s337 + $0x2c] sm:$0xf]
        %v5259 = vld [vmem:[%s337 + $0x30] sm:$0xf]
        %v5260 = vld [vmem:[%s337 + $0x34] sm:$0xf]
        %v5261 = vld [vmem:[%s337 + $0x38] sm:$0xf]
        %v5262 = vld [vmem:[%s337 + $0x3c] sm:$0xf]
        %v5263 = vld [vmem:[%s337 + $0x40] sm:$0xf]
        %v5264 = vld [vmem:[%s337 + $0x44] sm:$0xf]
        %v5265 = vld [vmem:[%s337 + $0x48] sm:$0xf]
        %v5266 = vld [vmem:[%s337 + $0x4c] sm:$0xf]
        %v5267 = vld [vmem:[%s337 + $0x50] sm:$0xf]
        %v5268 = vld [vmem:[%s337 + $0x54] sm:$0xf]
        %v5269 = vld [vmem:[%s337 + $0x58] sm:$0xf]
        %v5270 = vld [vmem:[%s337 + $0x5c] sm:$0xf]
        %v5271 = vld [vmem:[%s337 + $0x60] sm:$0xf]
        %v5272 = vld [vmem:[%s337 + $0x64] sm:$0xf]
        %v5273 = vld [vmem:[%s337 + $0x68] sm:$0xf]
        %v5274 = vld [vmem:[%s337 + $0x6c] sm:$0xf]
        %v5275 = vld [vmem:[%s337 + $0x70] sm:$0xf]
        %v5276 = vld [vmem:[%s337 + $0x74] sm:$0xf]
        %v5277 = vld [vmem:[%s337 + $0x78] sm:$0xf]
        %v5278 = vld [vmem:[%s337 + $0x7c] sm:$0xf]
        %v5279 = vld [vmem:[%s6] sm:$0xf]
        %v5312 = vunpack.c.l.b16 %v5247
        %v5313 = vunpack.c.l.b16 %v5248
        %v5314 = vunpack.c.l.b16 %v5249
        %v5315 = vunpack.c.l.b16 %v5250
        %v5316 = vunpack.c.l.b16 %v5251
        %v5317 = vunpack.c.l.b16 %v5252
        %v5318 = vunpack.c.l.b16 %v5253
        %v5319 = vunpack.c.l.b16 %v5254
        %v5320 = vunpack.c.l.b16 %v5255
        %v5321 = vunpack.c.l.b16 %v5256
        %v5322 = vunpack.c.l.b16 %v5257
        %v5323 = vunpack.c.l.b16 %v5258
        %v5324 = vunpack.c.l.b16 %v5259
        %v5325 = vunpack.c.l.b16 %v5260
        %v5326 = vunpack.c.l.b16 %v5261
        %v5327 = vunpack.c.l.b16 %v5262
        %v5328 = vunpack.c.l.b16 %v5263
        %v5329 = vunpack.c.l.b16 %v5264
        %v5330 = vunpack.c.l.b16 %v5265
        %v5331 = vunpack.c.l.b16 %v5266
        %v5332 = vunpack.c.l.b16 %v5267
        %v5333 = vunpack.c.l.b16 %v5268
        %v5334 = vunpack.c.l.b16 %v5269
        %v5335 = vunpack.c.l.b16 %v5270
        %v5336 = vunpack.c.l.b16 %v5271
        %v5337 = vunpack.c.l.b16 %v5272
        %v5338 = vunpack.c.l.b16 %v5273
        %v5339 = vunpack.c.l.b16 %v5274
        %v5340 = vunpack.c.l.b16 %v5275
        %v5341 = vunpack.c.l.b16 %v5276
        %v5342 = vunpack.c.l.b16 %v5277
        %v5343 = vunpack.c.l.b16 %v5278
        %v5344 = vpack.c.b16 %v5313, %v5312
        %v5345 = vpack.c.b16 %v5315, %v5314
        %v5346 = vpack.c.b16 %v5317, %v5316
        %v5347 = vpack.c.b16 %v5319, %v5318
        %v5348 = vpack.c.b16 %v5321, %v5320
        %v5349 = vpack.c.b16 %v5323, %v5322
        %v5350 = vpack.c.b16 %v5325, %v5324
        %v5351 = vpack.c.b16 %v5327, %v5326
        %v5352 = vpack.c.b16 %v5329, %v5328
        %v5353 = vpack.c.b16 %v5331, %v5330
        %v5354 = vpack.c.b16 %v5333, %v5332
        %v5355 = vpack.c.b16 %v5335, %v5334
        %v5356 = vpack.c.b16 %v5337, %v5336
        %v5357 = vpack.c.b16 %v5339, %v5338
        %v5358 = vpack.c.b16 %v5341, %v5340
        %v5359 = vpack.c.b16 %v5343, %v5342
        %vm5360 = vcmask 64512
        %v5362 = vsel %vm5360, %v5344, 0
        %v5365 = vsel %vm5360, %v5345, 0
        %v5368 = vsel %vm5360, %v5346, 0
        %v5371 = vsel %vm5360, %v5347, 0
        %v5374 = vsel %vm5360, %v5348, 0
        %v5377 = vsel %vm5360, %v5349, 0
        %v5380 = vsel %vm5360, %v5350, 0
        %v5383 = vsel %vm5360, %v5351, 0
        %v5386 = vsel %vm5360, %v5352, 0
        %v5389 = vsel %vm5360, %v5353, 0
        %v5392 = vsel %vm5360, %v5354, 0
        %v5395 = vsel %vm5360, %v5355, 0
        %v5398 = vsel %vm5360, %v5356, 0
        %v5401 = vsel %vm5360, %v5357, 0
        %v5404 = vsel %vm5360, %v5358, 0
        %v5407 = vsel %vm5360, %v5359, 0
        %vm5409 = vcmask 1043456
        %v5411 = vsel %vm5409, %v5279, 0
        %5413 = vmatprep.subr.bf16.mxu0 0
        %5414 = vmatpush1.bf16.msra.mxu0 0
        %5415 = vmatprep.subr.bf16.mxu0 0
        %5416 = vmatpush1.bf16.msra.mxu0 0
        %5417 = vmatprep.subr.bf16.mxu0 0
        %5418 = vmatpush1.bf16.msra.mxu0 0
        %5419 = vmatprep.subr.bf16.mxu0 0
        %5420 = vmatpush1.bf16.msra.mxu0 0
        %5421 = vmatprep.subr.bf16.mxu0 0
        %5422 = vmatpush1.bf16.msra.mxu0 0
        %5423 = vmatprep.subr.bf16.mxu0 0
        %5424 = vmatpush1.bf16.msra.mxu0 0
        %5425 = vmatprep.subr.bf16.mxu0 0
        %5426 = vmatpush1.bf16.msra.mxu0 0
        %5427 = vmatprep.subr.bf16.mxu0 0
        %5428 = vmatpush1.bf16.msra.mxu0 %v5411
        %5429 = vmatprep.subr.bf16.mxu0 0
        %5430 = vmatpush2.bf16.msra.mxu0 0
        %5431 = vmatprep.subr.bf16.mxu0 0
        %5432 = vmatpush2.bf16.msra.mxu0 0
        %5433 = vmatprep.subr.bf16.mxu0 0
        %5434 = vmatpush2.bf16.msra.mxu0 0
        %5435 = vmatprep.subr.bf16.mxu0 0
        %5436 = vmatpush2.bf16.msra.mxu0 0
        %5437 = vmatprep.subr.bf16.mxu0 0
        %5438 = vmatpush2.bf16.msra.mxu0 0
        %5439 = vmatprep.subr.bf16.mxu0 0
        %5440 = vmatpush2.bf16.msra.mxu0 0
        %5441 = vmatprep.subr.bf16.mxu0 0
        %5442 = vmatpush2.bf16.msra.mxu0 0
        %5443 = vmatprep.subr.bf16.mxu0 0
        %5444 = vmatpush2.bf16.msra.mxu0 0
        %5445 = vmatprep.mubr.bf16.mxu0 0
        %5446 = vmatmul.mubr.bf16.gmra.mxu0 %v5362
        %v5447 = vpop.f32.mrf.mxu0
        %v5448 = vadd.f32 0.0, %v5447
        %v5449 = vpop.f32.mrf.mxu0
        %v5450 = vpop.f32.mrf.mxu0
        %v5451 = vadd.f32 0.0, %v5450
        %v5452 = vpop.f32.mrf.mxu0
        %5453 = vmatprep.mubr.bf16.mxu0 0
        %5454 = vmatmul.mubr.bf16.gmra.mxu0 %v5365
        %v5455 = vpop.f32.mrf.mxu0
        %v5456 = vadd.f32 0.0, %v5455
        %v5457 = vpop.f32.mrf.mxu0
        %v5458 = vpop.f32.mrf.mxu0
        %v5459 = vadd.f32 0.0, %v5458
        %v5460 = vpop.f32.mrf.mxu0
        %5461 = vmatprep.mubr.bf16.mxu0 0
        %5462 = vmatmul.mubr.bf16.gmra.mxu0 %v5368
        %v5463 = vpop.f32.mrf.mxu0
        %v5464 = vadd.f32 0.0, %v5463
        %v5465 = vpop.f32.mrf.mxu0
        %v5466 = vpop.f32.mrf.mxu0
        %v5467 = vadd.f32 0.0, %v5466
        %v5468 = vpop.f32.mrf.mxu0
        %5469 = vmatprep.mubr.bf16.mxu0 0
        %5470 = vmatmul.mubr.bf16.gmra.mxu0 %v5371
        %v5471 = vpop.f32.mrf.mxu0
        %v5472 = vadd.f32 0.0, %v5471
        %v5473 = vpop.f32.mrf.mxu0
        %v5474 = vpop.f32.mrf.mxu0
        %v5475 = vadd.f32 0.0, %v5474
        %v5476 = vpop.f32.mrf.mxu0
        %5477 = vmatprep.mubr.bf16.mxu0 0
        %5478 = vmatmul.mubr.bf16.gmra.mxu0 %v5374
        %v5479 = vpop.f32.mrf.mxu0
        %v5480 = vadd.f32 0.0, %v5479
        %v5481 = vpop.f32.mrf.mxu0
        %v5482 = vpop.f32.mrf.mxu0
        %v5483 = vadd.f32 0.0, %v5482
        %v5484 = vpop.f32.mrf.mxu0
        %5485 = vmatprep.mubr.bf16.mxu0 0
        %5486 = vmatmul.mubr.bf16.gmra.mxu0 %v5377
        %v5487 = vpop.f32.mrf.mxu0
        %v5488 = vadd.f32 0.0, %v5487
        %v5489 = vpop.f32.mrf.mxu0
        %v5490 = vpop.f32.mrf.mxu0
        %v5491 = vadd.f32 0.0, %v5490
        %v5492 = vpop.f32.mrf.mxu0
        %5493 = vmatprep.mubr.bf16.mxu0 0
        %5494 = vmatmul.mubr.bf16.gmra.mxu0 %v5380
        %v5495 = vpop.f32.mrf.mxu0
        %v5496 = vadd.f32 0.0, %v5495
        %v5497 = vpop.f32.mrf.mxu0
        %v5498 = vpop.f32.mrf.mxu0
        %v5499 = vadd.f32 0.0, %v5498
        %v5500 = vpop.f32.mrf.mxu0
        %5501 = vmatprep.mubr.bf16.mxu0 0
        %5502 = vmatmul.mubr.bf16.gmra.mxu0 %v5383
        %v5503 = vpop.f32.mrf.mxu0
        %v5504 = vadd.f32 0.0, %v5503
        %v5505 = vpop.f32.mrf.mxu0
        %v5506 = vpop.f32.mrf.mxu0
        %v5507 = vadd.f32 0.0, %v5506
        %v5508 = vpop.f32.mrf.mxu0
        %5509 = vmatprep.mubr.bf16.mxu0 0
        %5510 = vmatmul.mubr.bf16.gmra.mxu0 %v5386
        %v5511 = vpop.f32.mrf.mxu0
        %v5512 = vadd.f32 0.0, %v5511
        %v5513 = vpop.f32.mrf.mxu0
        %v5514 = vpop.f32.mrf.mxu0
        %v5515 = vadd.f32 0.0, %v5514
        %v5516 = vpop.f32.mrf.mxu0
        %5517 = vmatprep.mubr.bf16.mxu0 0
        %5518 = vmatmul.mubr.bf16.gmra.mxu0 %v5389
        %v5519 = vpop.f32.mrf.mxu0
        %v5520 = vadd.f32 0.0, %v5519
        %v5521 = vpop.f32.mrf.mxu0
        %v5522 = vpop.f32.mrf.mxu0
        %v5523 = vadd.f32 0.0, %v5522
        %v5524 = vpop.f32.mrf.mxu0
        %5525 = vmatprep.mubr.bf16.mxu0 0
        %5526 = vmatmul.mubr.bf16.gmra.mxu0 %v5392
        %v5527 = vpop.f32.mrf.mxu0
        %v5528 = vadd.f32 0.0, %v5527
        %v5529 = vpop.f32.mrf.mxu0
        %v5530 = vpop.f32.mrf.mxu0
        %v5531 = vadd.f32 0.0, %v5530
        %v5532 = vpop.f32.mrf.mxu0
        %5533 = vmatprep.mubr.bf16.mxu0 0
        %5534 = vmatmul.mubr.bf16.gmra.mxu0 %v5395
        %v5535 = vpop.f32.mrf.mxu0
        %v5536 = vadd.f32 0.0, %v5535
        %v5537 = vpop.f32.mrf.mxu0
        %v5538 = vpop.f32.mrf.mxu0
        %v5539 = vadd.f32 0.0, %v5538
        %v5540 = vpop.f32.mrf.mxu0
        %5541 = vmatprep.mubr.bf16.mxu0 0
        %5542 = vmatmul.mubr.bf16.gmra.mxu0 %v5398
        %v5543 = vpop.f32.mrf.mxu0
        %v5544 = vadd.f32 0.0, %v5543
        %v5545 = vpop.f32.mrf.mxu0
        %v5546 = vpop.f32.mrf.mxu0
        %v5547 = vadd.f32 0.0, %v5546
        %v5548 = vpop.f32.mrf.mxu0
        %5549 = vmatprep.mubr.bf16.mxu0 0
        %5550 = vmatmul.mubr.bf16.gmra.mxu0 %v5401
        %v5551 = vpop.f32.mrf.mxu0
        %v5552 = vadd.f32 0.0, %v5551
        %v5553 = vpop.f32.mrf.mxu0
        %v5554 = vpop.f32.mrf.mxu0
        %v5555 = vadd.f32 0.0, %v5554
        %v5556 = vpop.f32.mrf.mxu0
        %5557 = vmatprep.mubr.bf16.mxu0 0
        %5558 = vmatmul.mubr.bf16.gmra.mxu0 %v5404
        %v5559 = vpop.f32.mrf.mxu0
        %v5560 = vadd.f32 0.0, %v5559
        %v5561 = vpop.f32.mrf.mxu0
        %v5562 = vpop.f32.mrf.mxu0
        %v5563 = vadd.f32 0.0, %v5562
        %v5564 = vpop.f32.mrf.mxu0
        %5565 = vmatprep.mubr.bf16.mxu0 0
        %5566 = vmatmul.mubr.bf16.gmra.mxu0 %v5407
        %v5567 = vpop.f32.mrf.mxu0
        %v5568 = vadd.f32 0.0, %v5567
        %v5569 = vpop.f32.mrf.mxu0
        %v5570 = vpop.f32.mrf.mxu0
        %v5571 = vadd.f32 0.0, %v5570
        %v5572 = vpop.f32.mrf.mxu0
        %5573 = vdwg.mxu0
        %v5574 = vadd.f32 %v5215, %v5448
        %v5575 = vadd.f32 %v5216, %v5451
        %v5576 = vadd.f32 %v5217, %v5456
        %v5577 = vadd.f32 %v5218, %v5459
        %v5578 = vadd.f32 %v5219, %v5464
        %v5579 = vadd.f32 %v5220, %v5467
        %v5580 = vadd.f32 %v5221, %v5472
        %v5581 = vadd.f32 %v5222, %v5475
        %v5582 = vadd.f32 %v5223, %v5480
        %v5583 = vadd.f32 %v5224, %v5483
        %v5584 = vadd.f32 %v5225, %v5488
        %v5585 = vadd.f32 %v5226, %v5491
        %v5586 = vadd.f32 %v5227, %v5496
        %v5587 = vadd.f32 %v5228, %v5499
        %v5588 = vadd.f32 %v5229, %v5504
        %v5589 = vadd.f32 %v5230, %v5507
        %v5590 = vadd.f32 %v5231, %v5512
        %v5591 = vadd.f32 %v5232, %v5515
        %v5592 = vadd.f32 %v5233, %v5520
        %v5593 = vadd.f32 %v5234, %v5523
        %v5594 = vadd.f32 %v5235, %v5528
        %v5595 = vadd.f32 %v5236, %v5531
        %v5596 = vadd.f32 %v5237, %v5536
        %v5597 = vadd.f32 %v5238, %v5539
        %v5598 = vadd.f32 %v5239, %v5544
        %v5599 = vadd.f32 %v5240, %v5547
        %v5600 = vadd.f32 %v5241, %v5552
        %v5601 = vadd.f32 %v5242, %v5555
        %v5602 = vadd.f32 %v5243, %v5560
        %v5603 = vadd.f32 %v5244, %v5563
        %v5604 = vadd.f32 %v5245, %v5568
        %v5605 = vadd.f32 %v5246, %v5571
        %v5606 = vpack.c.bf16 %v5575, %v5574
        %v5607 = vpack.c.bf16 %v5577, %v5576
        %v5608 = vpack.c.bf16 %v5579, %v5578
        %v5609 = vpack.c.bf16 %v5581, %v5580
        %v5610 = vpack.c.bf16 %v5583, %v5582
        %v5611 = vpack.c.bf16 %v5585, %v5584
        %v5612 = vpack.c.bf16 %v5587, %v5586
        %v5613 = vpack.c.bf16 %v5589, %v5588
        %v5614 = vpack.c.bf16 %v5591, %v5590
        %v5615 = vpack.c.bf16 %v5593, %v5592
        %v5616 = vpack.c.bf16 %v5595, %v5594
        %v5617 = vpack.c.bf16 %v5597, %v5596
        %v5618 = vpack.c.bf16 %v5599, %v5598
        %v5619 = vpack.c.bf16 %v5601, %v5600
        %v5620 = vpack.c.bf16 %v5603, %v5602
        %v5621 = vpack.c.bf16 %v5605, %v5604
        %v5638 = vunpack.c.l.b16 %v5606
        %v5639 = vunpack.c.h.b16 %v5606
        %v5640 = vunpack.c.l.b16 %v5607
        %v5641 = vunpack.c.h.b16 %v5607
        %v5642 = vunpack.c.l.b16 %v5608
        %v5643 = vunpack.c.h.b16 %v5608
        %v5644 = vunpack.c.l.b16 %v5609
        %v5645 = vunpack.c.h.b16 %v5609
        %v5646 = vunpack.c.l.b16 %v5610
        %v5647 = vunpack.c.h.b16 %v5610
        %v5648 = vunpack.c.l.b16 %v5611
        %v5649 = vunpack.c.h.b16 %v5611
        %v5650 = vunpack.c.l.b16 %v5612
        %v5651 = vunpack.c.h.b16 %v5612
        %v5652 = vunpack.c.l.b16 %v5613
        %v5653 = vunpack.c.h.b16 %v5613
        %v5654 = vunpack.c.l.b16 %v5614
        %v5655 = vunpack.c.h.b16 %v5614
        %v5656 = vunpack.c.l.b16 %v5615
        %v5657 = vunpack.c.h.b16 %v5615
        %v5658 = vunpack.c.l.b16 %v5616
        %v5659 = vunpack.c.h.b16 %v5616
        %v5660 = vunpack.c.l.b16 %v5617
        %v5661 = vunpack.c.h.b16 %v5617
        %v5662 = vunpack.c.l.b16 %v5618
        %v5663 = vunpack.c.h.b16 %v5618
        %v5664 = vunpack.c.l.b16 %v5619
        %v5665 = vunpack.c.h.b16 %v5619
        %v5666 = vunpack.c.l.b16 %v5620
        %v5667 = vunpack.c.h.b16 %v5620
        %v5668 = vunpack.c.l.b16 %v5621
        %v5669 = vunpack.c.h.b16 %v5621
        %v5670 = vpack.c.b16 %v5638, %v5638
        %v5671 = vpack.c.b16 %v5639, %v5639
        %v5672 = vpack.c.b16 %v5640, %v5640
        %v5673 = vpack.c.b16 %v5641, %v5641
        %v5674 = vpack.c.b16 %v5642, %v5642
        %v5675 = vpack.c.b16 %v5643, %v5643
        %v5676 = vpack.c.b16 %v5644, %v5644
        %v5677 = vpack.c.b16 %v5645, %v5645
        %v5678 = vpack.c.b16 %v5646, %v5646
        %v5679 = vpack.c.b16 %v5647, %v5647
        %v5680 = vpack.c.b16 %v5648, %v5648
        %v5681 = vpack.c.b16 %v5649, %v5649
        %v5682 = vpack.c.b16 %v5650, %v5650
        %v5683 = vpack.c.b16 %v5651, %v5651
        %v5684 = vpack.c.b16 %v5652, %v5652
        %v5685 = vpack.c.b16 %v5653, %v5653
        %v5686 = vpack.c.b16 %v5654, %v5654
        %v5687 = vpack.c.b16 %v5655, %v5655
        %v5688 = vpack.c.b16 %v5656, %v5656
        %v5689 = vpack.c.b16 %v5657, %v5657
        %v5690 = vpack.c.b16 %v5658, %v5658
        %v5691 = vpack.c.b16 %v5659, %v5659
        %v5692 = vpack.c.b16 %v5660, %v5660
        %v5693 = vpack.c.b16 %v5661, %v5661
        %v5694 = vpack.c.b16 %v5662, %v5662
        %v5695 = vpack.c.b16 %v5663, %v5663
        %v5696 = vpack.c.b16 %v5664, %v5664
        %v5697 = vpack.c.b16 %v5665, %v5665
        %v5698 = vpack.c.b16 %v5666, %v5666
        %v5699 = vpack.c.b16 %v5667, %v5667
        %v5700 = vpack.c.b16 %v5668, %v5668
        %v5701 = vpack.c.b16 %v5669, %v5669
        %5734 = vst [vmem:[%s320] sm:$0xf] %v5670
        %5735 = vst [vmem:[%s320 + $0x4] sm:$0xf] %v5671
        %5736 = vst [vmem:[%s320 + $0x8] sm:$0xf] %v5672
        %5737 = vst [vmem:[%s320 + $0xc] sm:$0xf] %v5673
        %5738 = vst [vmem:[%s320 + $0x10] sm:$0xf] %v5674
        %5739 = vst [vmem:[%s320 + $0x14] sm:$0xf] %v5675
        %5740 = vst [vmem:[%s320 + $0x18] sm:$0xf] %v5676
        %5741 = vst [vmem:[%s320 + $0x1c] sm:$0xf] %v5677
        %5742 = vst [vmem:[%s320 + $0x20] sm:$0xf] %v5678
        %5743 = vst [vmem:[%s320 + $0x24] sm:$0xf] %v5679
        %5744 = vst [vmem:[%s320 + $0x28] sm:$0xf] %v5680
        %5745 = vst [vmem:[%s320 + $0x2c] sm:$0xf] %v5681
        %5746 = vst [vmem:[%s320 + $0x30] sm:$0xf] %v5682
        %5747 = vst [vmem:[%s320 + $0x34] sm:$0xf] %v5683
        %5748 = vst [vmem:[%s320 + $0x38] sm:$0xf] %v5684
        %5749 = vst [vmem:[%s320 + $0x3c] sm:$0xf] %v5685
        %5750 = vst [vmem:[%s320 + $0x40] sm:$0xf] %v5686
        %5751 = vst [vmem:[%s320 + $0x44] sm:$0xf] %v5687
        %5752 = vst [vmem:[%s320 + $0x48] sm:$0xf] %v5688
        %5753 = vst [vmem:[%s320 + $0x4c] sm:$0xf] %v5689
        %5754 = vst [vmem:[%s320 + $0x50] sm:$0xf] %v5690
        %5755 = vst [vmem:[%s320 + $0x54] sm:$0xf] %v5691
        %5756 = vst [vmem:[%s320 + $0x58] sm:$0xf] %v5692
        %5757 = vst [vmem:[%s320 + $0x5c] sm:$0xf] %v5693
        %5758 = vst [vmem:[%s320 + $0x60] sm:$0xf] %v5694
        %5759 = vst [vmem:[%s320 + $0x64] sm:$0xf] %v5695
        %5760 = vst [vmem:[%s320 + $0x68] sm:$0xf] %v5696
        %5761 = vst [vmem:[%s320 + $0x6c] sm:$0xf] %v5697
        %5762 = vst [vmem:[%s320 + $0x70] sm:$0xf] %v5698
        %5763 = vst [vmem:[%s320 + $0x74] sm:$0xf] %v5699
        %5764 = vst [vmem:[%s320 + $0x78] sm:$0xf] %v5700
        %5765 = vst [vmem:[%s320 + $0x7c] sm:$0xf] %v5701
        %v5766 = vld [vmem:[%s3] sm:$0xf]
        %v5767 = vld [vmem:[%s3 + $0x4] sm:$0xf]
        %v5768 = vld [vmem:[%s3 + $0x8] sm:$0xf]
        %v5769 = vld [vmem:[%s3 + $0xc] sm:$0xf]
        %v5770 = vld [vmem:[%s3 + $0x10] sm:$0xf]
        %v5771 = vld [vmem:[%s3 + $0x14] sm:$0xf]
        %v5772 = vld [vmem:[%s3 + $0x18] sm:$0xf]
        %v5773 = vld [vmem:[%s3 + $0x1c] sm:$0xf]
        %v5774 = vld [vmem:[%s3 + $0x20] sm:$0xf]
        %v5775 = vld [vmem:[%s3 + $0x24] sm:$0xf]
        %v5776 = vld [vmem:[%s3 + $0x28] sm:$0xf]
        %v5777 = vld [vmem:[%s3 + $0x2c] sm:$0xf]
        %v5778 = vld [vmem:[%s3 + $0x30] sm:$0xf]
        %v5779 = vld [vmem:[%s3 + $0x34] sm:$0xf]
        %v5780 = vld [vmem:[%s3 + $0x38] sm:$0xf]
        %v5781 = vld [vmem:[%s3 + $0x3c] sm:$0xf]
        %v5782 = vld [vmem:[%s4] sm:$0x1]
        %v5784 = vlaneseq
        %v5785 = vshrl.u32 %v5784, 7
        %v5786 = vsub.s32 0, %v5785
        %v5787 = vrot.slane %v5782, %v5786
        %v5805 = vunpack.c.l.b16 %v5766
        %v5806 = vunpack.c.l.b16 %v5767
        %v5807 = vunpack.c.l.b16 %v5768
        %v5808 = vunpack.c.l.b16 %v5769
        %v5809 = vunpack.c.l.b16 %v5770
        %v5810 = vunpack.c.l.b16 %v5771
        %v5811 = vunpack.c.l.b16 %v5772
        %v5812 = vunpack.c.l.b16 %v5773
        %v5813 = vunpack.c.l.b16 %v5774
        %v5814 = vunpack.c.l.b16 %v5775
        %v5815 = vunpack.c.l.b16 %v5776
        %v5816 = vunpack.c.l.b16 %v5777
        %v5817 = vunpack.c.l.b16 %v5778
        %v5818 = vunpack.c.l.b16 %v5779
        %v5819 = vunpack.c.l.b16 %v5780
        %v5820 = vunpack.c.l.b16 %v5781
        %v5821 = vpack.c.b16 %v5806, %v5805
        %v5822 = vpack.c.b16 %v5808, %v5807
        %v5823 = vpack.c.b16 %v5810, %v5809
        %v5824 = vpack.c.b16 %v5812, %v5811
        %v5825 = vpack.c.b16 %v5814, %v5813
        %v5826 = vpack.c.b16 %v5816, %v5815
        %v5827 = vpack.c.b16 %v5818, %v5817
        %v5828 = vpack.c.b16 %v5820, %v5819
        %5837 = vmatprep.subr.bf16.mxu0 0
        %5838 = vmatpush1.bf16.msra.mxu0 %v5828
        %5839 = vmatprep.subr.bf16.mxu0 0
        %5840 = vmatpush1.bf16.msra.mxu0 %v5827
        %5841 = vmatprep.subr.bf16.mxu0 0
        %5842 = vmatpush1.bf16.msra.mxu0 %v5826
        %5843 = vmatprep.subr.bf16.mxu0 0
        %5844 = vmatpush1.bf16.msra.mxu0 %v5825
        %5845 = vmatprep.subr.bf16.mxu0 0
        %5846 = vmatpush1.bf16.msra.mxu0 %v5824
        %5847 = vmatprep.subr.bf16.mxu0 0
        %5848 = vmatpush1.bf16.msra.mxu0 %v5823
        %5849 = vmatprep.subr.bf16.mxu0 0
        %5850 = vmatpush1.bf16.msra.mxu0 %v5822
        %5851 = vmatprep.subr.bf16.mxu0 0
        %5852 = vmatpush1.bf16.msra.mxu0 %v5821
        %5853 = vmatprep.subr.bf16.mxu0 0
        %5854 = vmatpush2.bf16.msra.mxu0 0
        %5855 = vmatprep.subr.bf16.mxu0 0
        %5856 = vmatpush2.bf16.msra.mxu0 0
        %5857 = vmatprep.subr.bf16.mxu0 0
        %5858 = vmatpush2.bf16.msra.mxu0 0
        %5859 = vmatprep.subr.bf16.mxu0 0
        %5860 = vmatpush2.bf16.msra.mxu0 0
        %5861 = vmatprep.subr.bf16.mxu0 0
        %5862 = vmatpush2.bf16.msra.mxu0 0
        %5863 = vmatprep.subr.bf16.mxu0 0
        %5864 = vmatpush2.bf16.msra.mxu0 0
        %5865 = vmatprep.subr.bf16.mxu0 0
        %5866 = vmatpush2.bf16.msra.mxu0 0
        %5867 = vmatprep.subr.bf16.mxu0 0
        %5868 = vmatpush2.bf16.msra.mxu0 0
        %5869 = vmatprep.mubr.bf16.mxu0 0
        %5870 = vmatmul.mubr.bf16.gmra.mxu0 %v2767
        %v5871 = vpop.f32.mrf.mxu0
        %v5872 = vadd.f32 %v5787, %v5871
        %v5873 = vpop.f32.mrf.mxu0
        %v5874 = vpop.f32.mrf.mxu0
        %v5875 = vadd.f32 %v5787, %v5874
        %v5876 = vpop.f32.mrf.mxu0
        %5877 = vmatprep.mubr.bf16.mxu0 0
        %5878 = vmatmul.mubr.bf16.gmra.mxu0 %v2768
        %v5879 = vpop.f32.mrf.mxu0
        %v5880 = vadd.f32 %v5787, %v5879
        %v5881 = vpop.f32.mrf.mxu0
        %v5882 = vpop.f32.mrf.mxu0
        %v5883 = vadd.f32 %v5787, %v5882
        %v5884 = vpop.f32.mrf.mxu0
        %5885 = vmatprep.mubr.bf16.mxu0 0
        %5886 = vmatmul.mubr.bf16.gmra.mxu0 %v2769
        %v5887 = vpop.f32.mrf.mxu0
        %v5888 = vadd.f32 %v5787, %v5887
        %v5889 = vpop.f32.mrf.mxu0
        %v5890 = vpop.f32.mrf.mxu0
        %v5891 = vadd.f32 %v5787, %v5890
        %v5892 = vpop.f32.mrf.mxu0
        %5893 = vmatprep.mubr.bf16.mxu0 0
        %5894 = vmatmul.mubr.bf16.gmra.mxu0 %v2770
        %v5895 = vpop.f32.mrf.mxu0
        %v5896 = vadd.f32 %v5787, %v5895
        %v5897 = vpop.f32.mrf.mxu0
        %v5898 = vpop.f32.mrf.mxu0
        %v5899 = vadd.f32 %v5787, %v5898
        %v5900 = vpop.f32.mrf.mxu0
        %5901 = vmatprep.mubr.bf16.mxu0 0
        %5902 = vmatmul.mubr.bf16.gmra.mxu0 %v2771
        %v5903 = vpop.f32.mrf.mxu0
        %v5904 = vadd.f32 %v5787, %v5903
        %v5905 = vpop.f32.mrf.mxu0
        %v5906 = vpop.f32.mrf.mxu0
        %v5907 = vadd.f32 %v5787, %v5906
        %v5908 = vpop.f32.mrf.mxu0
        %5909 = vmatprep.mubr.bf16.mxu0 0
        %5910 = vmatmul.mubr.bf16.gmra.mxu0 %v2772
        %v5911 = vpop.f32.mrf.mxu0
        %v5912 = vadd.f32 %v5787, %v5911
        %v5913 = vpop.f32.mrf.mxu0
        %v5914 = vpop.f32.mrf.mxu0
        %v5915 = vadd.f32 %v5787, %v5914
        %v5916 = vpop.f32.mrf.mxu0
        %5917 = vmatprep.mubr.bf16.mxu0 0
        %5918 = vmatmul.mubr.bf16.gmra.mxu0 %v2773
        %v5919 = vpop.f32.mrf.mxu0
        %v5920 = vadd.f32 %v5787, %v5919
        %v5921 = vpop.f32.mrf.mxu0
        %v5922 = vpop.f32.mrf.mxu0
        %v5923 = vadd.f32 %v5787, %v5922
        %v5924 = vpop.f32.mrf.mxu0
        %5925 = vmatprep.mubr.bf16.mxu0 0
        %5926 = vmatmul.mubr.bf16.gmra.mxu0 %v2774
        %v5927 = vpop.f32.mrf.mxu0
        %v5928 = vadd.f32 %v5787, %v5927
        %v5929 = vpop.f32.mrf.mxu0
        %v5930 = vpop.f32.mrf.mxu0
        %v5931 = vadd.f32 %v5787, %v5930
        %v5932 = vpop.f32.mrf.mxu0
        %5933 = vmatprep.mubr.bf16.mxu0 0
        %5934 = vmatmul.mubr.bf16.gmra.mxu0 %v2775
        %v5935 = vpop.f32.mrf.mxu0
        %v5936 = vadd.f32 %v5787, %v5935
        %v5937 = vpop.f32.mrf.mxu0
        %v5938 = vpop.f32.mrf.mxu0
        %v5939 = vadd.f32 %v5787, %v5938
        %v5940 = vpop.f32.mrf.mxu0
        %5941 = vmatprep.mubr.bf16.mxu0 0
        %5942 = vmatmul.mubr.bf16.gmra.mxu0 %v2776
        %v5943 = vpop.f32.mrf.mxu0
        %v5944 = vadd.f32 %v5787, %v5943
        %v5945 = vpop.f32.mrf.mxu0
        %v5946 = vpop.f32.mrf.mxu0
        %v5947 = vadd.f32 %v5787, %v5946
        %v5948 = vpop.f32.mrf.mxu0
        %5949 = vmatprep.mubr.bf16.mxu0 0
        %5950 = vmatmul.mubr.bf16.gmra.mxu0 %v2777
        %v5951 = vpop.f32.mrf.mxu0
        %v5952 = vadd.f32 %v5787, %v5951
        %v5953 = vpop.f32.mrf.mxu0
        %v5954 = vpop.f32.mrf.mxu0
        %v5955 = vadd.f32 %v5787, %v5954
        %v5956 = vpop.f32.mrf.mxu0
        %5957 = vmatprep.mubr.bf16.mxu0 0
        %5958 = vmatmul.mubr.bf16.gmra.mxu0 %v2778
        %v5959 = vpop.f32.mrf.mxu0
        %v5960 = vadd.f32 %v5787, %v5959
        %v5961 = vpop.f32.mrf.mxu0
        %v5962 = vpop.f32.mrf.mxu0
        %v5963 = vadd.f32 %v5787, %v5962
        %v5964 = vpop.f32.mrf.mxu0
        %5965 = vmatprep.mubr.bf16.mxu0 0
        %5966 = vmatmul.mubr.bf16.gmra.mxu0 %v2779
        %v5967 = vpop.f32.mrf.mxu0
        %v5968 = vadd.f32 %v5787, %v5967
        %v5969 = vpop.f32.mrf.mxu0
        %v5970 = vpop.f32.mrf.mxu0
        %v5971 = vadd.f32 %v5787, %v5970
        %v5972 = vpop.f32.mrf.mxu0
        %5973 = vmatprep.mubr.bf16.mxu0 0
        %5974 = vmatmul.mubr.bf16.gmra.mxu0 %v2780
        %v5975 = vpop.f32.mrf.mxu0
        %v5976 = vadd.f32 %v5787, %v5975
        %v5977 = vpop.f32.mrf.mxu0
        %v5978 = vpop.f32.mrf.mxu0
        %v5979 = vadd.f32 %v5787, %v5978
        %v5980 = vpop.f32.mrf.mxu0
        %5981 = vmatprep.mubr.bf16.mxu0 0
        %5982 = vmatmul.mubr.bf16.gmra.mxu0 %v2781
        %v5983 = vpop.f32.mrf.mxu0
        %v5984 = vadd.f32 %v5787, %v5983
        %v5985 = vpop.f32.mrf.mxu0
        %v5986 = vpop.f32.mrf.mxu0
        %v5987 = vadd.f32 %v5787, %v5986
        %v5988 = vpop.f32.mrf.mxu0
        %5989 = vmatprep.mubr.bf16.mxu0 0
        %5990 = vmatmul.mubr.bf16.gmra.mxu0 %v2782
        %v5991 = vpop.f32.mrf.mxu0
        %v5992 = vadd.f32 %v5787, %v5991
        %v5993 = vpop.f32.mrf.mxu0
        %v5994 = vpop.f32.mrf.mxu0
        %v5995 = vadd.f32 %v5787, %v5994
        %v5996 = vpop.f32.mrf.mxu0
        %5997 = vdwg.mxu0
        %v5998 = vpack.c.bf16 %v5875, %v5872
        %v5999 = vpack.c.bf16 %v5883, %v5880
        %v6000 = vpack.c.bf16 %v5891, %v5888
        %v6001 = vpack.c.bf16 %v5899, %v5896
        %v6002 = vpack.c.bf16 %v5907, %v5904
        %v6003 = vpack.c.bf16 %v5915, %v5912
        %v6004 = vpack.c.bf16 %v5923, %v5920
        %v6005 = vpack.c.bf16 %v5931, %v5928
        %v6006 = vpack.c.bf16 %v5939, %v5936
        %v6007 = vpack.c.bf16 %v5947, %v5944
        %v6008 = vpack.c.bf16 %v5955, %v5952
        %v6009 = vpack.c.bf16 %v5963, %v5960
        %v6010 = vpack.c.bf16 %v5971, %v5968
        %v6011 = vpack.c.bf16 %v5979, %v5976
        %v6012 = vpack.c.bf16 %v5987, %v5984
        %v6013 = vpack.c.bf16 %v5995, %v5992
        %v6030 = vunpack.c.l.b16 %v5998
        %v6031 = vunpack.c.h.b16 %v5998
        %v6032 = vunpack.c.l.b16 %v5999
        %v6033 = vunpack.c.h.b16 %v5999
        %v6034 = vunpack.c.l.b16 %v6000
        %v6035 = vunpack.c.h.b16 %v6000
        %v6036 = vunpack.c.l.b16 %v6001
        %v6037 = vunpack.c.h.b16 %v6001
        %v6038 = vunpack.c.l.b16 %v6002
        %v6039 = vunpack.c.h.b16 %v6002
        %v6040 = vunpack.c.l.b16 %v6003
        %v6041 = vunpack.c.h.b16 %v6003
        %v6042 = vunpack.c.l.b16 %v6004
        %v6043 = vunpack.c.h.b16 %v6004
        %v6044 = vunpack.c.l.b16 %v6005
        %v6045 = vunpack.c.h.b16 %v6005
        %v6046 = vunpack.c.l.b16 %v6006
        %v6047 = vunpack.c.h.b16 %v6006
        %v6048 = vunpack.c.l.b16 %v6007
        %v6049 = vunpack.c.h.b16 %v6007
        %v6050 = vunpack.c.l.b16 %v6008
        %v6051 = vunpack.c.h.b16 %v6008
        %v6052 = vunpack.c.l.b16 %v6009
        %v6053 = vunpack.c.h.b16 %v6009
        %v6054 = vunpack.c.l.b16 %v6010
        %v6055 = vunpack.c.h.b16 %v6010
        %v6056 = vunpack.c.l.b16 %v6011
        %v6057 = vunpack.c.h.b16 %v6011
        %v6058 = vunpack.c.l.b16 %v6012
        %v6059 = vunpack.c.h.b16 %v6012
        %v6060 = vunpack.c.l.b16 %v6013
        %v6061 = vunpack.c.h.b16 %v6013
        %v6062 = vpack.c.b16 %v6030, %v6030
        %v6063 = vpack.c.b16 %v6031, %v6031
        %v6064 = vpack.c.b16 %v6032, %v6032
        %v6065 = vpack.c.b16 %v6033, %v6033
        %v6066 = vpack.c.b16 %v6034, %v6034
        %v6067 = vpack.c.b16 %v6035, %v6035
        %v6068 = vpack.c.b16 %v6036, %v6036
        %v6069 = vpack.c.b16 %v6037, %v6037
        %v6070 = vpack.c.b16 %v6038, %v6038
        %v6071 = vpack.c.b16 %v6039, %v6039
        %v6072 = vpack.c.b16 %v6040, %v6040
        %v6073 = vpack.c.b16 %v6041, %v6041
        %v6074 = vpack.c.b16 %v6042, %v6042
        %v6075 = vpack.c.b16 %v6043, %v6043
        %v6076 = vpack.c.b16 %v6044, %v6044
        %v6077 = vpack.c.b16 %v6045, %v6045
        %v6078 = vpack.c.b16 %v6046, %v6046
        %v6079 = vpack.c.b16 %v6047, %v6047
        %v6080 = vpack.c.b16 %v6048, %v6048
        %v6081 = vpack.c.b16 %v6049, %v6049
        %v6082 = vpack.c.b16 %v6050, %v6050
        %v6083 = vpack.c.b16 %v6051, %v6051
        %v6084 = vpack.c.b16 %v6052, %v6052
        %v6085 = vpack.c.b16 %v6053, %v6053
        %v6086 = vpack.c.b16 %v6054, %v6054
        %v6087 = vpack.c.b16 %v6055, %v6055
        %v6088 = vpack.c.b16 %v6056, %v6056
        %v6089 = vpack.c.b16 %v6057, %v6057
        %v6090 = vpack.c.b16 %v6058, %v6058
        %v6091 = vpack.c.b16 %v6059, %v6059
        %v6092 = vpack.c.b16 %v6060, %v6060
        %v6093 = vpack.c.b16 %v6061, %v6061
        %6126 = vst [vmem:[%s327] sm:$0xf] %v6062
        %6127 = vst [vmem:[%s327 + $0x4] sm:$0xf] %v6063
        %6128 = vst [vmem:[%s327 + $0x8] sm:$0xf] %v6064
        %6129 = vst [vmem:[%s327 + $0xc] sm:$0xf] %v6065
        %6130 = vst [vmem:[%s327 + $0x10] sm:$0xf] %v6066
        %6131 = vst [vmem:[%s327 + $0x14] sm:$0xf] %v6067
        %6132 = vst [vmem:[%s327 + $0x18] sm:$0xf] %v6068
        %6133 = vst [vmem:[%s327 + $0x1c] sm:$0xf] %v6069
        %6134 = vst [vmem:[%s327 + $0x20] sm:$0xf] %v6070
        %6135 = vst [vmem:[%s327 + $0x24] sm:$0xf] %v6071
        %6136 = vst [vmem:[%s327 + $0x28] sm:$0xf] %v6072
        %6137 = vst [vmem:[%s327 + $0x2c] sm:$0xf] %v6073
        %6138 = vst [vmem:[%s327 + $0x30] sm:$0xf] %v6074
        %6139 = vst [vmem:[%s327 + $0x34] sm:$0xf] %v6075
        %6140 = vst [vmem:[%s327 + $0x38] sm:$0xf] %v6076
        %6141 = vst [vmem:[%s327 + $0x3c] sm:$0xf] %v6077
        %6142 = vst [vmem:[%s327 + $0x40] sm:$0xf] %v6078
        %6143 = vst [vmem:[%s327 + $0x44] sm:$0xf] %v6079
        %6144 = vst [vmem:[%s327 + $0x48] sm:$0xf] %v6080
        %6145 = vst [vmem:[%s327 + $0x4c] sm:$0xf] %v6081
        %6146 = vst [vmem:[%s327 + $0x50] sm:$0xf] %v6082
        %6147 = vst [vmem:[%s327 + $0x54] sm:$0xf] %v6083
        %6148 = vst [vmem:[%s327 + $0x58] sm:$0xf] %v6084
        %6149 = vst [vmem:[%s327 + $0x5c] sm:$0xf] %v6085
        %6150 = vst [vmem:[%s327 + $0x60] sm:$0xf] %v6086
        %6151 = vst [vmem:[%s327 + $0x64] sm:$0xf] %v6087
        %6152 = vst [vmem:[%s327 + $0x68] sm:$0xf] %v6088
        %6153 = vst [vmem:[%s327 + $0x6c] sm:$0xf] %v6089
        %6154 = vst [vmem:[%s327 + $0x70] sm:$0xf] %v6090
        %6155 = vst [vmem:[%s327 + $0x74] sm:$0xf] %v6091
        %6156 = vst [vmem:[%s327 + $0x78] sm:$0xf] %v6092
        %6157 = vst [vmem:[%s327 + $0x7c] sm:$0xf] %v6093
        %s6158 = sand.u32 %s182, 1
        %s6159 = scalar_lea.sflag [#allocation6], %s6158
        %s6160 = sand.u32 %s182, 1
        %s6161 = smul.addr %s6160, 128
        %s6162 = scalar_lea.vmem [#allocation7], %s6161
        %s6163 = sand.u32 %s210, 1
        %s6164 = scalar_lea.sflag [#allocation9], %s6163
        %s6165 = sand.u32 %s210, 1
        %s6166 = smul.addr %s6165, 128
        %s6167 = scalar_lea.vmem [#allocation8], %s6166
        // Predicated region
        $region57: #{tpu_custom_call.1} parent=43 // pred_check
          %p6168 = pneg %p192
        $region58: #{tpu_custom_call.1} parent=43 // pred_check_branch
          %6170 = sbr.rel (%p6168) target = $region60
        $region59: #{tpu_custom_call.1} parent=43 // pred_region
          %s6171 = smul.u32 16, %s32
          %s6173 = ssub.s32 2048, 2048
          %6174 = vsyncadd %s6159, %s6173
          %s6175 = smul.addr %s6171, 2
          %s6176 = smul.addr %s31, 32
          %s6177 = sadd.s32 %s6175, %s6176
          %s6178 = smul.addr %s6177, 64
          %s6179 = scalar_lea.hbm %s7, %s6178
          %s6180 = sshll.u32 %s6162, 4
          %s6181 = int_to_ptr.vmem [resolvable:$true] %s6180
          %6186 = dma.vmem_to_hbm [thread:$0]  %s6181, 2048, %s6179, %s6159, 64, 64, 4
        $region60: #{tpu_custom_call.1} parent=43 // pred_fallthru
          _
        // Predicated region
        $region61: #{tpu_custom_call.1} parent=43 // pred_check
          %p6187 = pneg %p220
        $region62: #{tpu_custom_call.1} parent=43 // pred_check_branch
          %6189 = sbr.rel (%p6187) target = $region64
        $region63: #{tpu_custom_call.1} parent=43 // pred_region
          %s6190 = smul.u32 16, %s32
          %s6192 = ssub.s32 2048, 2048
          %6193 = vsyncadd %s6164, %s6192
          %s6194 = smul.addr %s6190, 2
          %s6195 = smul.addr %s31, 32
          %s6196 = sadd.s32 %s6194, %s6195
          %s6197 = smul.addr %s6196, 64
          %s6198 = scalar_lea.hbm %s8, %s6197
          %s6199 = sshll.u32 %s6167, 4
          %s6200 = int_to_ptr.vmem [resolvable:$true] %s6199
          %6205 = dma.vmem_to_hbm [thread:$0]  %s6200, 2048, %s6198, %s6164, 64, 64, 4
        $region64: #{tpu_custom_call.1} parent=43 // pred_fallthru
          _
      $region44: #{tpu_custom_call.1} parent=5 // pred_fallthru
        _
      %p6206 = scmp.le.s32.totalorder 2, %s22
      // Predicated region
      $region65: #{tpu_custom_call.1} parent=5 // pred_check
        %p6207 = pneg %p6206
      $region66: #{tpu_custom_call.1} parent=5 // pred_check_branch
        %6209 = sbr.rel (%p6207) target = $region68
      $region67: #{tpu_custom_call.1} parent=5 // pred_region
        %s6210 = ssub.s32 %s22, 2
        // Predicated region
        $region69: #{tpu_custom_call.1} parent=67 // pred_check
          %p6211 = pneg %p198
        $region70: #{tpu_custom_call.1} parent=67 // pred_check_branch
          %6213 = sbr.rel (%p6211) target = $region72
        $region71: #{tpu_custom_call.1} parent=67 // pred_region
          %s6214 = sand.u32 %s183, 1
          %s6215 = scalar_lea.sflag [#allocation6], %s6214
          %s6216 = sand.u32 %s183, 1
          %s6217 = smul.addr %s6216, 128
          %s6218 = scalar_lea.vmem [#allocation7], %s6217
          %6219 = dma.done %s6215, 2048
        $region72: #{tpu_custom_call.1} parent=67 // pred_fallthru
          _
        // Predicated region
        $region73: #{tpu_custom_call.1} parent=67 // pred_check
          %p6220 = pneg %p226
        $region74: #{tpu_custom_call.1} parent=67 // pred_check_branch
          %6222 = sbr.rel (%p6220) target = $region76
        $region75: #{tpu_custom_call.1} parent=67 // pred_region
          %s6223 = sand.u32 %s211, 1
          %s6224 = scalar_lea.sflag [#allocation9], %s6223
          %s6225 = sand.u32 %s211, 1
          %s6226 = smul.addr %s6225, 128
          %s6227 = scalar_lea.vmem [#allocation8], %s6226
          %6228 = dma.done %s6224, 2048
        $region76: #{tpu_custom_call.1} parent=67 // pred_fallthru
          _
      $region68: #{tpu_custom_call.1} parent=5 // pred_fallthru
        _
    $region6: #{tpu_custom_call.1} parent=1 // loop_footer
      %s26 = sadd.s32 1, %s22
    $region7: #{tpu_custom_call.1} parent=1 // loop_footer_branch
      %21 = sbr.rel target = $region3
    $region8: #{tpu_custom_call.1} parent=1 // loop_exit
      _
    %6229 = vsyncpa [#allocation5], 1
    %s6230 = scalar_lea.sflag [#allocation5], 1
    %6231 = vsyncpa %s6230, 1
    %6232 = vsyncpa [#allocation6], 1
    %s6233 = scalar_lea.sflag [#allocation6], 1
    %6234 = vsyncpa %s6233, 1
    %6235 = vsyncpa [#allocation9], 1
    %s6236 = scalar_lea.sflag [#allocation9], 1
    %6237 = vsyncpa %s6236, 1
  %6238 = vsyncmov [#allocation3]
  %s6239 = vpop.sfrf %6238
  %p6240 = scmp.eq.s32.totalorder %s6239, 0
  %p6241 = pneg %p6240
  %6243 = shalt.err (%p6241)

</llo_original>
